<compile_context>
chip_gen: v7x
topology: tpu7x:2x2x1
jax: 0.10.0
libtpu: 0.0.40
codegen_flags: <defaults>
</compile_context>

<pallas_src>
import functools

import jax
import jax.numpy as jnp
from jax import lax
from jax.experimental import pallas as pl
from jax.experimental.pallas import tpu as pltpu

# ----------------------- small, self-consistent hyper-params -----------------
VOCAB = 65                          # len(sorted(set(text))) -- synthetic char vocab
D_MODEL = 32                        # 512 in the torch module; scaled down
N_LAYER = 2                         # 28 in the torch module; scaled down
EXPAND = 2
D_INNER = EXPAND * D_MODEL          # 64
HEADDIM = 16
NHEADS = D_INNER // HEADDIM         # 4
D_STATE = 16
NGROUPS = 1
D_CONV = 4
CONV_DIM = D_INNER + 2 * NGROUPS * D_STATE                 # 96
D_IN_PROJ = 2 * D_INNER + 2 * NGROUPS * D_STATE + NHEADS   # 164
EPS = 1e-5
ACT_DTYPE = jnp.bfloat16

# ---- padded, lane-dense layout --------------------------------------------
D_PAD = 128        # hidden / residual feature lanes (real: D_MODEL, pads are zero)
V_PAD = 128        # logits lanes (real: VOCAB)
CONV_PAD = 128     # conv channel lanes (real: CONV_DIM)
SLAB = 256         # fused in_proj output lanes, column layout:
XBC_OFF = 0        #   [0:96]    xBC (x | B | C)   -> conv input
Z_OFF = 128        #   [128:192] z gate
DT_OFF = 192       #   [192:196] dt_raw (per head); everything else zero-padded


# ----------------------------- per-layer fused kernel ------------------------
def _layer_kernel(h_ref, r_ref, lnw_ref, lnb_ref, win_ref, cw_ref, cb_ref,
                  hp_ref, nw_ref, wout_ref, rout_ref, mout_ref, y_sc,
                  *, seqlen):
    T = seqlen

    # ---- fused residual add + LayerNorm (masked to the real D_MODEL lanes) ----
    xf = h_ref[...].astype(jnp.float32) + r_ref[...].astype(jnp.float32)
    rout_ref[...] = xf.astype(rout_ref.dtype)                    # new residual
    col = lax.broadcasted_iota(jnp.int32, (T, D_PAD), 1)
    feat = col < D_MODEL
    mu = jnp.sum(xf, axis=1, keepdims=True) / D_MODEL            # pads are zero
    xc = xf - mu
    var = jnp.sum(jnp.where(feat, xc * xc, 0.0), axis=1, keepdims=True) / D_MODEL
    normed = (xc * lax.rsqrt(var + EPS) * lnw_ref[...].astype(jnp.float32)
              + lnb_ref[...].astype(jnp.float32))                # padded lanes -> 0

    # ---- in_proj: (T, 128) @ (128, 256), lane-dense output slab ----
    slab = jnp.dot(normed.astype(ACT_DTYPE), win_ref[...],
                   preferred_element_type=jnp.float32)           # (T, 256) f32

    # ---- causal depthwise conv1d + SiLU over the xBC lanes ----
    xbc = slab[:, XBC_OFF:XBC_OFF + CONV_PAD]                    # (T, 128)
    row_t = lax.broadcasted_iota(jnp.int32, (T, T), 0)
    col_t = lax.broadcasted_iota(jnp.int32, (T, T), 1)
    acc = jnp.zeros((T, CONV_PAD), jnp.float32) + cb_ref[...].astype(jnp.float32)
    for k in range(D_CONV):                                      # static K=4 taps
        s = D_CONV - 1 - k                                       # causal shift
        if s == 0:
            shifted = xbc
        else:
            shift_mat = (row_t - col_t == s).astype(jnp.float32)  # x[t-s], 0 if t<s
            shifted = jnp.dot(shift_mat, xbc, preferred_element_type=jnp.float32)
        acc = acc + shifted * cw_ref[k:k + 1, :].astype(jnp.float32)
    xconv = acc * jax.nn.sigmoid(acc)                            # SiLU
    xs = xconv[:, :D_INNER]                                      # (T, 64)
    Bm = xconv[:, D_INNER:D_INNER + D_STATE]                     # (T, 16)
    Cm = xconv[:, D_INNER + D_STATE:CONV_DIM]                    # (T, 16)

    # ---- dt discretization in-kernel (softplus / exp on the EUP) ----
    dt_raw = slab[:, DT_OFF:DT_OFF + NHEADS]                     # (T, H)
    x_dt = dt_raw + hp_ref[0:1, :]                               # + dt_bias
    dt = jnp.maximum(x_dt, 0.0) + jnp.log(1.0 + jnp.exp(-jnp.abs(x_dt)))  # softplus
    A = -jnp.exp(hp_ref[1:2, :])                                 # (1, H), A = -exp(A_log)
    a_all = dt * A                                               # (T, H) log-decay

    # ---- SSD, single-chunk matmul formulation ----
    # y_t = sum_{s<=t} exp(S_t - S_s) * (C_t . B_s) * dt_s * x_s  +  D * x_t
    ones_low = col_t <= row_t
    ones_low_f = ones_low.astype(jnp.float32)                    # [t,s] = s<=t
    ones_up_f = (row_t <= col_t).astype(jnp.float32)             # [s,t] = s<=t
    S_col_all = jnp.dot(ones_low_f, a_all,
                        preferred_element_type=jnp.float32)      # (T, H) cumsum
    S_row_all = lax.dot_general(a_all, ones_up_f, (((0,), (0,)), ((), ())),
                                preferred_element_type=jnp.float32)  # (H, T)
    G = lax.dot_general(Cm, Bm, (((1,), (1,)), ((), ())),
                        preferred_element_type=jnp.float32)      # (T, T), shared (ngroups=1)
    for h in range(NHEADS):                                      # static H=4
        diff = jnp.where(ones_low,
                         S_col_all[:, h:h + 1] - S_row_all[h:h + 1, :], -1e30)
        Mmat = jnp.exp(diff) * G                                 # (T, T) masked decay
        Xh = xs[:, h * HEADDIM:(h + 1) * HEADDIM]                # (T, P)
        Xdt = Xh * dt[:, h:h + 1]
        Yh = (jnp.dot(Mmat, Xdt, preferred_element_type=jnp.float32)
              + hp_ref[2:3, h:h + 1] * Xh)                       # + D_h * x
        y_sc[:, h * HEADDIM:(h + 1) * HEADDIM] = Yh              # direct store

    # ---- gated RMSNorm: rmsnorm(y * silu(z)) * w ----
    y = y_sc[...]
    z = slab[:, Z_OFF:Z_OFF + D_INNER]
    g = y * (z * jax.nn.sigmoid(z))
    ms = jnp.mean(g * g, axis=1, keepdims=True)
    gn = g * lax.rsqrt(ms + EPS) * nw_ref[...].astype(jnp.float32)

    # ---- out_proj: (T, 64) @ (64, 128) (real cols 0:32, pads stay zero) ----
    out = jnp.dot(gn.astype(ACT_DTYPE), wout_ref[...],
                  preferred_element_type=jnp.float32)
    mout_ref[...] = out.astype(mout_ref.dtype)


def mamba2_layer(hidden, residual, lp, T):
    M = hidden.shape[0]
    B = M // T
    return pl.pallas_call(
        functools.partial(_layer_kernel, seqlen=T),
        grid=(B,),
        in_specs=[
            pl.BlockSpec((T, D_PAD), lambda b: (b, 0)),            # hidden
            pl.BlockSpec((T, D_PAD), lambda b: (b, 0)),            # residual
            pl.BlockSpec((1, D_PAD), lambda b: (0, 0)),            # ln_w
            pl.BlockSpec((1, D_PAD), lambda b: (0, 0)),            # ln_b
            pl.BlockSpec((D_PAD, SLAB), lambda b: (0, 0)),         # in_proj (K,N)
            pl.BlockSpec((D_CONV, CONV_PAD), lambda b: (0, 0)),    # conv taps
            pl.BlockSpec((1, CONV_PAD), lambda b: (0, 0)),         # conv bias
            pl.BlockSpec((4, NHEADS), lambda b: (0, 0)),           # [dt_bias;A_log;D;0]
            pl.BlockSpec((1, D_INNER), lambda b: (0, 0)),          # gated-norm w
            pl.BlockSpec((D_INNER, D_PAD), lambda b: (0, 0)),      # out_proj (K,N)
        ],
        out_specs=[
            pl.BlockSpec((T, D_PAD), lambda b: (b, 0)),            # new residual
            pl.BlockSpec((T, D_PAD), lambda b: (b, 0)),            # mixer output
        ],
        out_shape=[
            jax.ShapeDtypeStruct((M, D_PAD), ACT_DTYPE),
            jax.ShapeDtypeStruct((M, D_PAD), ACT_DTYPE),
        ],
        scratch_shapes=[pltpu.VMEM((T, D_INNER), jnp.float32)],
        compiler_params=pltpu.CompilerParams(
            dimension_semantics=("parallel",)),
    )(hidden, residual, lp['ln_w'], lp['ln_b'], lp['in_proj_w'],
      lp['conv_w'], lp['conv_b'], lp['head_par'], lp['norm_w'], lp['out_proj_w'])


# ------------------- fused final norm + tied lm_head + CE --------------------
def _final_kernel(h_ref, r_ref, lnw_ref, lnb_ref, wlm_ref, tgt_ref,
                  logits_ref, loss_ref):
    xf = h_ref[...].astype(jnp.float32) + r_ref[...].astype(jnp.float32)
    Mrows = xf.shape[0]
    col = lax.broadcasted_iota(jnp.int32, (Mrows, D_PAD), 1)
    feat = col < D_MODEL
    mu = jnp.sum(xf, axis=1, keepdims=True) / D_MODEL
    xc = xf - mu
    var = jnp.sum(jnp.where(feat, xc * xc, 0.0), axis=1, keepdims=True) / D_MODEL
    normed = (xc * lax.rsqrt(var + EPS) * lnw_ref[...].astype(jnp.float32)
              + lnb_ref[...].astype(jnp.float32))
    logits = jnp.dot(normed.astype(ACT_DTYPE), wlm_ref[...],
                     preferred_element_type=jnp.float32)          # (M, 128)
    logits_ref[...] = logits.astype(logits_ref.dtype)

    # cross entropy: mask padded vocab lanes, target mask via iota == id
    vcol = lax.broadcasted_iota(jnp.int32, (Mrows, V_PAD), 1)
    lf = jnp.where(vcol < VOCAB, logits, -1e30)
    m = jnp.max(lf, axis=1, keepdims=True)
    lse = jnp.log(jnp.sum(jnp.exp(lf - m), axis=1, keepdims=True)) + m
    onehot = vcol == tgt_ref[...]
    tgt_logit = jnp.sum(jnp.where(onehot, logits, 0.0), axis=1, keepdims=True)
    per = lse - tgt_logit
    # NOTE: mean over the full (single) block; if this kernel is ever tiled over M
    # the reduction must become a global sum / count.
    loss_ref[...] = jnp.sum(per, axis=0, keepdims=True) / Mrows


def final_head(hidden, residual, params, targets_flat):
    M = hidden.shape[0]
    logits_pad, loss = pl.pallas_call(
        _final_kernel,
        out_shape=[jax.ShapeDtypeStruct((M, V_PAD), ACT_DTYPE),
                   jax.ShapeDtypeStruct((1, 1), jnp.float32)],
    )(hidden, residual, params['lnf_w'], params['lnf_b'],
      params['lm_head_w'], targets_flat.reshape(M, 1))
    return logits_pad, loss[0, 0]


# ------------------------------ model forward --------------------------------
def mpt_forward(params, idx, targets=None):
    Bb, T = idx.shape
    M = Bb * T
    # TODO(synk): embedding token gather kept in plain JAX (tiny vocab; no clean Pallas win).
    hidden = params['emb_pad'][idx].reshape(M, D_PAD)            # (M, 128) bf16, pads zero
    residual = jnp.zeros((M, D_PAD), ACT_DTYPE)
    for lp in params['layers']:
        residual, hidden = mamba2_layer(hidden, residual, lp, T)
    tgt = (targets.reshape(M) if targets is not None
           else jnp.zeros((M,), jnp.int32))
    logits_pad, loss = final_head(hidden, residual, params, tgt)
    logits = logits_pad.reshape(Bb, T, V_PAD)[..., :VOCAB]
    return logits, (loss if targets is not None else None)


# ------------------------------ parameter init --------------------------------
def init_params(key):
    keys = jax.random.split(key, 2 + N_LAYER)
    emb = jax.random.normal(keys[0], (VOCAB, D_MODEL), jnp.float32) * 0.02
    emb_pad = jnp.zeros((VOCAB, D_PAD), jnp.float32).at[:, :D_MODEL].set(emb)
    # tied lm_head: (K=D_PAD, N=V_PAD) pre-transposed + padded view of the embedding
    lm_w = jnp.zeros((D_PAD, V_PAD), jnp.float32).at[:D_MODEL, :VOCAB].set(emb.T)

    layers = []
    for l in range(N_LAYER):
        k = jax.random.split(keys[2 + l], 6)
        # in_proj (torch layout (N,K)) -> pre-transposed, column-permuted, padded (K,N)
        w_in = jax.random.normal(k[0], (D_IN_PROJ, D_MODEL), jnp.float32) * 0.02
        w_in_t = w_in.T                                           # (D_MODEL, 164) = [z|xBC|dt]
        win = jnp.zeros((D_PAD, SLAB), jnp.float32)
        win = win.at[:D_MODEL, XBC_OFF:XBC_OFF + CONV_DIM].set(
            w_in_t[:, D_INNER:D_INNER + CONV_DIM])
        win = win.at[:D_MODEL, Z_OFF:Z_OFF + D_INNER].set(w_in_t[:, :D_INNER])
        win = win.at[:D_MODEL, DT_OFF:DT_OFF + NHEADS].set(
            w_in_t[:, D_INNER + CONV_DIM:])

        conv_w = jax.random.normal(k[1], (D_CONV, CONV_DIM), jnp.float32) * 0.2
        conv_w_pad = jnp.zeros((D_CONV, CONV_PAD), jnp.float32).at[:, :CONV_DIM].set(conv_w)
        conv_b_pad = jnp.zeros((1, CONV_PAD), jnp.float32)

        dt = jnp.exp(jax.random.uniform(k[2], (NHEADS,), jnp.float32)
                     * (jnp.log(0.1) - jnp.log(0.001)) + jnp.log(0.001))
        dt = jnp.maximum(dt, 1e-4)
        dt_bias = dt + jnp.log(-jnp.expm1(-dt))                   # inverse softplus
        A_log = jnp.log(jax.random.uniform(k[3], (NHEADS,), jnp.float32,
                                           minval=1.0, maxval=16.0))
        Dparam = jnp.ones((NHEADS,), jnp.float32)
        head_par = jnp.stack([dt_bias, A_log, Dparam,
                              jnp.zeros((NHEADS,), jnp.float32)], axis=0)  # (4, H) f32

        w_out = (jax.random.normal(k[4], (D_MODEL, D_INNER), jnp.float32)
                 * (0.02 / float(jnp.sqrt(2.0 * N_LAYER))))        # torch layout (N,K)
        wout = jnp.zeros((D_INNER, D_PAD), jnp.float32).at[:, :D_MODEL].set(w_out.T)

        ln_w = jnp.zeros((1, D_PAD), jnp.float32).at[:, :D_MODEL].set(1.0)
        layers.append(dict(
            ln_w=ln_w.astype(ACT_DTYPE),
            ln_b=jnp.zeros((1, D_PAD), ACT_DTYPE),
            in_proj_w=win.astype(ACT_DTYPE),
            conv_w=conv_w_pad.astype(ACT_DTYPE),
            conv_b=conv_b_pad.astype(ACT_DTYPE),
            head_par=head_par,                                    # f32
            norm_w=jnp.ones((1, D_INNER), ACT_DTYPE),
            out_proj_w=wout.astype(ACT_DTYPE),
        ))

    lnf_w = jnp.zeros((1, D_PAD), jnp.float32).at[:, :D_MODEL].set(1.0)
    return dict(emb_pad=emb_pad.astype(ACT_DTYPE),
                lm_head_w=lm_w.astype(ACT_DTYPE),
                layers=layers,
                lnf_w=lnf_w.astype(ACT_DTYPE),
                lnf_b=jnp.zeros((1, D_PAD), ACT_DTYPE))


# ------------------------------------ main ------------------------------------
if __name__ == "__main__":
    key = jax.random.PRNGKey(0)
    pkey, ikey, tkey = jax.random.split(key, 3)
    params = init_params(pkey)

    B, T = 2, 8
    idx = jax.random.randint(ikey, (B, T), 0, VOCAB, dtype=jnp.int32)
    targets = jax.random.randint(tkey, (B, T), 0, VOCAB, dtype=jnp.int32)

    logits, loss = jax.jit(mpt_forward)(params, idx, targets)
    jax.block_until_ready((logits, loss))

    assert logits.shape == (B, T, VOCAB)
    assert logits.dtype == ACT_DTYPE
    assert loss.shape == () and jnp.isfinite(loss)
    print("KERNEL_OK")
</pallas_src>

<mosaic_0001>
module attributes {stable_mosaic.version = 11 : i64} {
  func.func @_layer_kernel(%arg0: i32, %arg1: memref<8x128xbf16, #tpu.memory_space<vmem>>, %arg2: memref<8x128xbf16, #tpu.memory_space<vmem>>, %arg3: memref<1x128xbf16, #tpu.memory_space<vmem>>, %arg4: memref<1x128xbf16, #tpu.memory_space<vmem>>, %arg5: memref<128x256xbf16, #tpu.memory_space<vmem>>, %arg6: memref<4x128xbf16, #tpu.memory_space<vmem>>, %arg7: memref<1x128xbf16, #tpu.memory_space<vmem>>, %arg8: memref<4x4xf32, #tpu.memory_space<vmem>>, %arg9: memref<1x64xbf16, #tpu.memory_space<vmem>>, %arg10: memref<64x128xbf16, #tpu.memory_space<vmem>>, %arg11: memref<8x128xbf16, #tpu.memory_space<vmem>>, %arg12: memref<8x128xbf16, #tpu.memory_space<vmem>>, %arg13: memref<8x64xf32, #tpu.memory_space<vmem>>) attributes {dimension_semantics = [#tpu.dimension_semantics<parallel>], iteration_bounds = array<i64: 2>, scalar_prefetch = 0 : i64, scratch_operands = 1 : i64, tpu.core_type = #tpu.core_type<tc>, window_params = [{transform_indices = @transform_0, window_bounds = array<i64: 8, 128>}, {transform_indices = @transform_1, window_bounds = array<i64: 8, 128>}, {pipeline_mode = #tpu.pipeline_mode<synchronous>, transform_indices = @transform_2, window_bounds = array<i64: 1, 128>}, {pipeline_mode = #tpu.pipeline_mode<synchronous>, transform_indices = @transform_3, window_bounds = array<i64: 1, 128>}, {pipeline_mode = #tpu.pipeline_mode<synchronous>, transform_indices = @transform_4, window_bounds = array<i64: 128, 256>}, {pipeline_mode = #tpu.pipeline_mode<synchronous>, transform_indices = @transform_5, window_bounds = array<i64: 4, 128>}, {pipeline_mode = #tpu.pipeline_mode<synchronous>, transform_indices = @transform_6, window_bounds = array<i64: 1, 128>}, {pipeline_mode = #tpu.pipeline_mode<synchronous>, transform_indices = @transform_7, window_bounds = array<i64: 4, 4>}, {pipeline_mode = #tpu.pipeline_mode<synchronous>, transform_indices = @transform_8, window_bounds = array<i64: 1, 64>}, {pipeline_mode = #tpu.pipeline_mode<synchronous>, transform_indices = @transform_9, window_bounds = array<i64: 64, 128>}, {transform_indices = @transform_10, window_bounds = array<i64: 8, 128>}, {transform_indices = @transform_11, window_bounds = array<i64: 8, 128>}]} {
    %c0 = arith.constant 0 : index
    %c0_0 = arith.constant 0 : index
    %0 = vector.load %arg1[%c0, %c0_0] : memref<8x128xbf16, #tpu.memory_space<vmem>>, vector<8x128xbf16>
    %1 = arith.extf %0 : vector<8x128xbf16> to vector<8x128xf32>
    %c0_1 = arith.constant 0 : index
    %c0_2 = arith.constant 0 : index
    %2 = vector.load %arg2[%c0_1, %c0_2] : memref<8x128xbf16, #tpu.memory_space<vmem>>, vector<8x128xbf16>
    %3 = arith.extf %2 : vector<8x128xbf16> to vector<8x128xf32>
    %4 = arith.addf %1, %3 : vector<8x128xf32>
    %5 = arith.truncf %4 : vector<8x128xf32> to vector<8x128xbf16>
    %c0_3 = arith.constant 0 : index
    %c0_4 = arith.constant 0 : index
    %6 = vector.load %arg11[%c0_3, %c0_4] : memref<8x128xbf16, #tpu.memory_space<vmem>>, vector<8x128xbf16>
    tpu.vector_store %arg11[%c0_3, %c0_4], %5 {strides = array<i32>} : memref<8x128xbf16, #tpu.memory_space<vmem>>, vector<8x128xbf16>,
    %7 = tpu.iota {dimensions = array<i32: 1>} : vector<8x128xi32>
    %c32_i32 = arith.constant 32 : i32
    %8 = vector.broadcast %c32_i32 : i32 to vector<8x128xi32>
    %9 = arith.cmpi slt, %7, %8 : vector<8x128xi32>
    %cst = arith.constant dense<0.000000e+00> : vector<8xf32>
    %10 = vector.multi_reduction <add>, %4, %cst [1] : vector<8x128xf32> to vector<8xf32>
    %11 = vector.shape_cast %10 : vector<8xf32> to vector<8x1xf32>
    %cst_5 = arith.constant 3.200000e+01 : f32
    %12 = vector.broadcast %cst_5 : f32 to vector<8x1xf32>
    %13 = arith.divf %11, %12 : vector<8x1xf32>
    %14 = vector.broadcast %13 : vector<8x1xf32> to vector<8x128xf32>
    %15 = arith.subf %4, %14 : vector<8x128xf32>
    %16 = arith.mulf %15, %15 : vector<8x128xf32>
    %cst_6 = arith.constant 0.000000e+00 : f32
    %17 = vector.broadcast %cst_6 : f32 to vector<8x128xf32>
    %18 = arith.select %9, %16, %17 : vector<8x128xi1>, vector<8x128xf32>
    %cst_7 = arith.constant dense<0.000000e+00> : vector<8xf32>
    %19 = vector.multi_reduction <add>, %18, %cst_7 [1] : vector<8x128xf32> to vector<8xf32>
    %20 = vector.shape_cast %19 : vector<8xf32> to vector<8x1xf32>
    %cst_8 = arith.constant 3.200000e+01 : f32
    %21 = vector.broadcast %cst_8 : f32 to vector<8x1xf32>
    %22 = arith.divf %20, %21 : vector<8x1xf32>
    %cst_9 = arith.constant 9.99999974E-6 : f32
    %23 = vector.broadcast %cst_9 : f32 to vector<8x1xf32>
    %24 = arith.addf %22, %23 : vector<8x1xf32>
    %25 = math.rsqrt %24 : vector<8x1xf32>
    %26 = vector.broadcast %25 : vector<8x1xf32> to vector<8x128xf32>
    %27 = arith.mulf %15, %26 : vector<8x128xf32>
    %c0_10 = arith.constant 0 : index
    %c0_11 = arith.constant 0 : index
    %28 = vector.load %arg3[%c0_10, %c0_11] : memref<1x128xbf16, #tpu.memory_space<vmem>>, vector<1x128xbf16>
    %29 = arith.extf %28 : vector<1x128xbf16> to vector<1x128xf32>
    %30 = vector.broadcast %29 : vector<1x128xf32> to vector<8x128xf32>
    %31 = arith.mulf %27, %30 : vector<8x128xf32>
    %c0_12 = arith.constant 0 : index
    %c0_13 = arith.constant 0 : index
    %32 = vector.load %arg4[%c0_12, %c0_13] : memref<1x128xbf16, #tpu.memory_space<vmem>>, vector<1x128xbf16>
    %33 = arith.extf %32 : vector<1x128xbf16> to vector<1x128xf32>
    %34 = vector.broadcast %33 : vector<1x128xf32> to vector<8x128xf32>
    %35 = arith.addf %31, %34 : vector<8x128xf32>
    %36 = arith.truncf %35 : vector<8x128xf32> to vector<8x128xbf16>
    %c0_14 = arith.constant 0 : index
    %c0_15 = arith.constant 0 : index
    %37 = vector.load %arg5[%c0_14, %c0_15] : memref<128x256xbf16, #tpu.memory_space<vmem>>, vector<128x256xbf16>
    %cst_16 = arith.constant dense<0.000000e+00> : vector<8x256xf32>
    %38 = tpu.matmul %36, %37, %cst_16 {dimension_numbers = #tpu.dot_dimension_numbers<[1], [0], [0], [1], [0, 0, 1, 1], [], []>} : vector<8x128xbf16>, vector<128x256xbf16>, vector<8x256xf32> -> vector<8x256xf32>
    %39 = vector.extract_strided_slice %38 {offsets = [0, 0], sizes = [8, 128], strides = [1, 1]} : vector<8x256xf32> to vector<8x128xf32>
    %40 = tpu.iota {dimensions = array<i32: 0>} : vector<8x8xi32>
    %41 = tpu.iota {dimensions = array<i32: 1>} : vector<8x8xi32>
    %cst_17 = arith.constant 0.000000e+00 : f32
    %42 = vector.broadcast %cst_17 : f32 to vector<8x128xf32>
    %c0_18 = arith.constant 0 : index
    %c0_19 = arith.constant 0 : index
    %43 = vector.load %arg7[%c0_18, %c0_19] : memref<1x128xbf16, #tpu.memory_space<vmem>>, vector<1x128xbf16>
    %44 = arith.extf %43 : vector<1x128xbf16> to vector<1x128xf32>
    %45 = vector.broadcast %44 : vector<1x128xf32> to vector<8x128xf32>
    %46 = arith.addf %42, %45 : vector<8x128xf32>
    %47 = arith.subi %40, %41 : vector<8x8xi32>
    %c3_i32 = arith.constant 3 : i32
    %48 = vector.broadcast %c3_i32 : i32 to vector<8x8xi32>
    %49 = arith.cmpi eq, %47, %48 : vector<8x8xi32>
    %50 = arith.extui %49 : vector<8x8xi1> to vector<8x8xi32>
    %51 = arith.sitofp %50 : vector<8x8xi32> to vector<8x8xf32>
    %cst_20 = arith.constant dense<0.000000e+00> : vector<8x128xf32>
    %52 = tpu.matmul %51, %39, %cst_20 {dimension_numbers = #tpu.dot_dimension_numbers<[1], [0], [0], [1], [0, 0, 1, 1], [], []>} : vector<8x8xf32>, vector<8x128xf32>, vector<8x128xf32> -> vector<8x128xf32>
    %c0_21 = arith.constant 0 : index
    %c0_22 = arith.constant 0 : index
    %53 = vector.load %arg6[%c0_21, %c0_22] : memref<4x128xbf16, #tpu.memory_space<vmem>>, vector<1x128xbf16>
    %54 = arith.extf %53 : vector<1x128xbf16> to vector<1x128xf32>
    %55 = vector.broadcast %54 : vector<1x128xf32> to vector<8x128xf32>
    %56 = arith.mulf %52, %55 : vector<8x128xf32>
    %57 = arith.addf %46, %56 : vector<8x128xf32>
    %58 = arith.subi %40, %41 : vector<8x8xi32>
    %c2_i32 = arith.constant 2 : i32
    %59 = vector.broadcast %c2_i32 : i32 to vector<8x8xi32>
    %60 = arith.cmpi eq, %58, %59 : vector<8x8xi32>
    %61 = arith.extui %60 : vector<8x8xi1> to vector<8x8xi32>
    %62 = arith.sitofp %61 : vector<8x8xi32> to vector<8x8xf32>
    %cst_23 = arith.constant dense<0.000000e+00> : vector<8x128xf32>
    %63 = tpu.matmul %62, %39, %cst_23 {dimension_numbers = #tpu.dot_dimension_numbers<[1], [0], [0], [1], [0, 0, 1, 1], [], []>} : vector<8x8xf32>, vector<8x128xf32>, vector<8x128xf32> -> vector<8x128xf32>
    %c1 = arith.constant 1 : index
    %c0_24 = arith.constant 0 : index
    %64 = vector.load %arg6[%c1, %c0_24] : memref<4x128xbf16, #tpu.memory_space<vmem>>, vector<1x128xbf16>
    %65 = arith.extf %64 : vector<1x128xbf16> to vector<1x128xf32>
    %66 = vector.broadcast %65 : vector<1x128xf32> to vector<8x128xf32>
    %67 = arith.mulf %63, %66 : vector<8x128xf32>
    %68 = arith.addf %57, %67 : vector<8x128xf32>
    %69 = arith.subi %40, %41 : vector<8x8xi32>
    %c1_i32 = arith.constant 1 : i32
    %70 = vector.broadcast %c1_i32 : i32 to vector<8x8xi32>
    %71 = arith.cmpi eq, %69, %70 : vector<8x8xi32>
    %72 = arith.extui %71 : vector<8x8xi1> to vector<8x8xi32>
    %73 = arith.sitofp %72 : vector<8x8xi32> to vector<8x8xf32>
    %cst_25 = arith.constant dense<0.000000e+00> : vector<8x128xf32>
    %74 = tpu.matmul %73, %39, %cst_25 {dimension_numbers = #tpu.dot_dimension_numbers<[1], [0], [0], [1], [0, 0, 1, 1], [], []>} : vector<8x8xf32>, vector<8x128xf32>, vector<8x128xf32> -> vector<8x128xf32>
    %c2 = arith.constant 2 : index
    %c0_26 = arith.constant 0 : index
    %75 = vector.load %arg6[%c2, %c0_26] : memref<4x128xbf16, #tpu.memory_space<vmem>>, vector<1x128xbf16>
    %76 = arith.extf %75 : vector<1x128xbf16> to vector<1x128xf32>
    %77 = vector.broadcast %76 : vector<1x128xf32> to vector<8x128xf32>
    %78 = arith.mulf %74, %77 : vector<8x128xf32>
    %79 = arith.addf %68, %78 : vector<8x128xf32>
    %c3 = arith.constant 3 : index
    %c0_27 = arith.constant 0 : index
    %80 = vector.load %arg6[%c3, %c0_27] : memref<4x128xbf16, #tpu.memory_space<vmem>>, vector<1x128xbf16>
    %81 = arith.extf %80 : vector<1x128xbf16> to vector<1x128xf32>
    %82 = vector.broadcast %81 : vector<1x128xf32> to vector<8x128xf32>
    %83 = arith.mulf %39, %82 : vector<8x128xf32>
    %84 = arith.addf %79, %83 : vector<8x128xf32>
    %85 = arith.negf %84 : vector<8x128xf32>
    %86 = math.exp %85 : vector<8x128xf32>
    %cst_28 = arith.constant 1.000000e+00 : f32
    %87 = vector.broadcast %cst_28 : f32 to vector<8x128xf32>
    %88 = arith.addf %87, %86 : vector<8x128xf32>
    %89 = arith.divf %87, %88 : vector<8x128xf32>
    %90 = arith.mulf %84, %89 : vector<8x128xf32>
    %91 = vector.extract_strided_slice %90 {offsets = [0, 0], sizes = [8, 64], strides = [1, 1]} : vector<8x128xf32> to vector<8x64xf32>
    %92 = vector.extract_strided_slice %90 {offsets = [0, 64], sizes = [8, 16], strides = [1, 1]} : vector<8x128xf32> to vector<8x16xf32>
    %93 = vector.extract_strided_slice %90 {offsets = [0, 80], sizes = [8, 16], strides = [1, 1]} : vector<8x128xf32> to vector<8x16xf32>
    %94 = vector.extract_strided_slice %38 {offsets = [0, 192], sizes = [8, 4], strides = [1, 1]} : vector<8x256xf32> to vector<8x4xf32>
    %c0_29 = arith.constant 0 : index
    %c0_30 = arith.constant 0 : index
    %95 = vector.load %arg8[%c0_29, %c0_30] : memref<4x4xf32, #tpu.memory_space<vmem>>, vector<1x4xf32>
    %96 = vector.broadcast %95 : vector<1x4xf32> to vector<8x4xf32>
    %97 = arith.addf %94, %96 : vector<8x4xf32>
    %cst_31 = arith.constant 0.000000e+00 : f32
    %98 = vector.broadcast %cst_31 : f32 to vector<8x4xf32>
    %99 = arith.maximumf %97, %98 : vector<8x4xf32>
    %100 = math.absf %97 : vector<8x4xf32>
    %cst_32 = arith.constant 0.000000e+00 : f32
    %101 = vector.broadcast %cst_32 : f32 to vector<8x4xf32>
    %102 = arith.subf %101, %100 : vector<8x4xf32>
    %103 = math.exp %102 : vector<8x4xf32>
    %cst_33 = arith.constant 1.000000e+00 : f32
    %104 = vector.broadcast %cst_33 : f32 to vector<8x4xf32>
    %105 = arith.addf %104, %103 : vector<8x4xf32>
    %106 = math.log %105 : vector<8x4xf32>
    %107 = arith.addf %99, %106 : vector<8x4xf32>
    %c1_34 = arith.constant 1 : index
    %c0_35 = arith.constant 0 : index
    %108 = vector.load %arg8[%c1_34, %c0_35] : memref<4x4xf32, #tpu.memory_space<vmem>>, vector<1x4xf32>
    %109 = math.exp %108 : vector<1x4xf32>
    %cst_36 = arith.constant 0.000000e+00 : f32
    %110 = vector.broadcast %cst_36 : f32 to vector<1x4xf32>
    %111 = arith.subf %110, %109 : vector<1x4xf32>
    %112 = vector.broadcast %111 : vector<1x4xf32> to vector<8x4xf32>
    %113 = arith.mulf %107, %112 : vector<8x4xf32>
    %114 = arith.cmpi sle, %41, %40 : vector<8x8xi32>
    %115 = arith.extui %114 : vector<8x8xi1> to vector<8x8xi32>
    %116 = arith.sitofp %115 : vector<8x8xi32> to vector<8x8xf32>
    %117 = arith.cmpi sle, %40, %41 : vector<8x8xi32>
    %118 = arith.extui %117 : vector<8x8xi1> to vector<8x8xi32>
    %119 = arith.sitofp %118 : vector<8x8xi32> to vector<8x8xf32>
    %cst_37 = arith.constant dense<0.000000e+00> : vector<8x4xf32>
    %120 = tpu.matmul %116, %113, %cst_37 {dimension_numbers = #tpu.dot_dimension_numbers<[1], [0], [0], [1], [0, 0, 1, 1], [], []>} : vector<8x8xf32>, vector<8x4xf32>, vector<8x4xf32> -> vector<8x4xf32>
    %cst_38 = arith.constant dense<0.000000e+00> : vector<4x8xf32>
    %121 = tpu.matmul %113, %119, %cst_38 {dimension_numbers = #tpu.dot_dimension_numbers<[0], [0], [1], [1], [0, 1, 1, 1], [], []>} : vector<8x4xf32>, vector<8x8xf32>, vector<4x8xf32> -> vector<4x8xf32>
    %cst_39 = arith.constant dense<0.000000e+00> : vector<8x8xf32>
    %122 = tpu.matmul %93, %92, %cst_39 {dimension_numbers = #tpu.dot_dimension_numbers<[1], [1], [0], [0], [0, 0, 1, 0], [], []>} : vector<8x16xf32>, vector<8x16xf32>, vector<8x8xf32> -> vector<8x8xf32>
    %123 = vector.extract_strided_slice %120 {offsets = [0, 0], sizes = [8, 1], strides = [1, 1]} : vector<8x4xf32> to vector<8x1xf32>
    %124 = vector.extract_strided_slice %121 {offsets = [0, 0], sizes = [1, 8], strides = [1, 1]} : vector<4x8xf32> to vector<1x8xf32>
    %125 = vector.broadcast %123 : vector<8x1xf32> to vector<8x8xf32>
    %126 = vector.broadcast %124 : vector<1x8xf32> to vector<8x8xf32>
    %127 = arith.subf %125, %126 : vector<8x8xf32>
    %cst_40 = arith.constant -1.000000e+30 : f32
    %128 = vector.broadcast %cst_40 : f32 to vector<8x8xf32>
    %129 = arith.select %114, %127, %128 : vector<8x8xi1>, vector<8x8xf32>
    %130 = math.exp %129 : vector<8x8xf32>
    %131 = arith.mulf %130, %122 : vector<8x8xf32>
    %132 = vector.extract_strided_slice %91 {offsets = [0, 0], sizes = [8, 16], strides = [1, 1]} : vector<8x64xf32> to vector<8x16xf32>
    %133 = vector.extract_strided_slice %107 {offsets = [0, 0], sizes = [8, 1], strides = [1, 1]} : vector<8x4xf32> to vector<8x1xf32>
    %134 = vector.broadcast %133 : vector<8x1xf32> to vector<8x16xf32>
    %135 = arith.mulf %132, %134 : vector<8x16xf32>
    %cst_41 = arith.constant dense<0.000000e+00> : vector<8x16xf32>
    %136 = tpu.matmul %131, %135, %cst_41 {dimension_numbers = #tpu.dot_dimension_numbers<[1], [0], [0], [1], [0, 0, 1, 1], [], []>} : vector<8x8xf32>, vector<8x16xf32>, vector<8x16xf32> -> vector<8x16xf32>
    %c2_42 = arith.constant 2 : index
    %c0_43 = arith.constant 0 : index
    %137 = vector.load %arg8[%c2_42, %c0_43] : memref<4x4xf32, #tpu.memory_space<vmem>>, vector<1x1xf32>
    %138 = vector.broadcast %137 : vector<1x1xf32> to vector<8x16xf32>
    %139 = arith.mulf %138, %132 : vector<8x16xf32>
    %140 = arith.addf %136, %139 : vector<8x16xf32>
    %c0_44 = arith.constant 0 : index
    %c0_45 = arith.constant 0 : index
    %141 = vector.load %arg13[%c0_44, %c0_45] : memref<8x64xf32, #tpu.memory_space<vmem>>, vector<8x16xf32>
    tpu.vector_store %arg13[%c0_44, %c0_45], %140 {strides = array<i32>} : memref<8x64xf32, #tpu.memory_space<vmem>>, vector<8x16xf32>,
    %142 = vector.extract_strided_slice %120 {offsets = [0, 1], sizes = [8, 1], strides = [1, 1]} : vector<8x4xf32> to vector<8x1xf32>
    %143 = vector.extract_strided_slice %121 {offsets = [1, 0], sizes = [1, 8], strides = [1, 1]} : vector<4x8xf32> to vector<1x8xf32>
    %144 = vector.broadcast %142 : vector<8x1xf32> to vector<8x8xf32>
    %145 = vector.broadcast %143 : vector<1x8xf32> to vector<8x8xf32>
    %146 = arith.subf %144, %145 : vector<8x8xf32>
    %cst_46 = arith.constant -1.000000e+30 : f32
    %147 = vector.broadcast %cst_46 : f32 to vector<8x8xf32>
    %148 = arith.select %114, %146, %147 : vector<8x8xi1>, vector<8x8xf32>
    %149 = math.exp %148 : vector<8x8xf32>
    %150 = arith.mulf %149, %122 : vector<8x8xf32>
    %151 = vector.extract_strided_slice %91 {offsets = [0, 16], sizes = [8, 16], strides = [1, 1]} : vector<8x64xf32> to vector<8x16xf32>
    %152 = vector.extract_strided_slice %107 {offsets = [0, 1], sizes = [8, 1], strides = [1, 1]} : vector<8x4xf32> to vector<8x1xf32>
    %153 = vector.broadcast %152 : vector<8x1xf32> to vector<8x16xf32>
    %154 = arith.mulf %151, %153 : vector<8x16xf32>
    %cst_47 = arith.constant dense<0.000000e+00> : vector<8x16xf32>
    %155 = tpu.matmul %150, %154, %cst_47 {dimension_numbers = #tpu.dot_dimension_numbers<[1], [0], [0], [1], [0, 0, 1, 1], [], []>} : vector<8x8xf32>, vector<8x16xf32>, vector<8x16xf32> -> vector<8x16xf32>
    %c2_48 = arith.constant 2 : index
    %c1_49 = arith.constant 1 : index
    %156 = vector.load %arg8[%c2_48, %c1_49] : memref<4x4xf32, #tpu.memory_space<vmem>>, vector<1x1xf32>
    %157 = vector.broadcast %156 : vector<1x1xf32> to vector<8x16xf32>
    %158 = arith.mulf %157, %151 : vector<8x16xf32>
    %159 = arith.addf %155, %158 : vector<8x16xf32>
    %c0_50 = arith.constant 0 : index
    %c16 = arith.constant 16 : index
    %160 = vector.load %arg13[%c0_50, %c16] : memref<8x64xf32, #tpu.memory_space<vmem>>, vector<8x16xf32>
    tpu.vector_store %arg13[%c0_50, %c16], %159 {strides = array<i32>} : memref<8x64xf32, #tpu.memory_space<vmem>>, vector<8x16xf32>,
    %161 = vector.extract_strided_slice %120 {offsets = [0, 2], sizes = [8, 1], strides = [1, 1]} : vector<8x4xf32> to vector<8x1xf32>
    %162 = vector.extract_strided_slice %121 {offsets = [2, 0], sizes = [1, 8], strides = [1, 1]} : vector<4x8xf32> to vector<1x8xf32>
    %163 = vector.broadcast %161 : vector<8x1xf32> to vector<8x8xf32>
    %164 = vector.broadcast %162 : vector<1x8xf32> to vector<8x8xf32>
    %165 = arith.subf %163, %164 : vector<8x8xf32>
    %cst_51 = arith.constant -1.000000e+30 : f32
    %166 = vector.broadcast %cst_51 : f32 to vector<8x8xf32>
    %167 = arith.select %114, %165, %166 : vector<8x8xi1>, vector<8x8xf32>
    %168 = math.exp %167 : vector<8x8xf32>
    %169 = arith.mulf %168, %122 : vector<8x8xf32>
    %170 = vector.extract_strided_slice %91 {offsets = [0, 32], sizes = [8, 16], strides = [1, 1]} : vector<8x64xf32> to vector<8x16xf32>
    %171 = vector.extract_strided_slice %107 {offsets = [0, 2], sizes = [8, 1], strides = [1, 1]} : vector<8x4xf32> to vector<8x1xf32>
    %172 = vector.broadcast %171 : vector<8x1xf32> to vector<8x16xf32>
    %173 = arith.mulf %170, %172 : vector<8x16xf32>
    %cst_52 = arith.constant dense<0.000000e+00> : vector<8x16xf32>
    %174 = tpu.matmul %169, %173, %cst_52 {dimension_numbers = #tpu.dot_dimension_numbers<[1], [0], [0], [1], [0, 0, 1, 1], [], []>} : vector<8x8xf32>, vector<8x16xf32>, vector<8x16xf32> -> vector<8x16xf32>
    %c2_53 = arith.constant 2 : index
    %c2_54 = arith.constant 2 : index
    %175 = vector.load %arg8[%c2_53, %c2_54] : memref<4x4xf32, #tpu.memory_space<vmem>>, vector<1x1xf32>
    %176 = vector.broadcast %175 : vector<1x1xf32> to vector<8x16xf32>
    %177 = arith.mulf %176, %170 : vector<8x16xf32>
    %178 = arith.addf %174, %177 : vector<8x16xf32>
    %c0_55 = arith.constant 0 : index
    %c32 = arith.constant 32 : index
    %179 = vector.load %arg13[%c0_55, %c32] : memref<8x64xf32, #tpu.memory_space<vmem>>, vector<8x16xf32>
    tpu.vector_store %arg13[%c0_55, %c32], %178 {strides = array<i32>} : memref<8x64xf32, #tpu.memory_space<vmem>>, vector<8x16xf32>,
    %180 = vector.extract_strided_slice %120 {offsets = [0, 3], sizes = [8, 1], strides = [1, 1]} : vector<8x4xf32> to vector<8x1xf32>
    %181 = vector.extract_strided_slice %121 {offsets = [3, 0], sizes = [1, 8], strides = [1, 1]} : vector<4x8xf32> to vector<1x8xf32>
    %182 = vector.broadcast %180 : vector<8x1xf32> to vector<8x8xf32>
    %183 = vector.broadcast %181 : vector<1x8xf32> to vector<8x8xf32>
    %184 = arith.subf %182, %183 : vector<8x8xf32>
    %cst_56 = arith.constant -1.000000e+30 : f32
    %185 = vector.broadcast %cst_56 : f32 to vector<8x8xf32>
    %186 = arith.select %114, %184, %185 : vector<8x8xi1>, vector<8x8xf32>
    %187 = math.exp %186 : vector<8x8xf32>
    %188 = arith.mulf %187, %122 : vector<8x8xf32>
    %189 = vector.extract_strided_slice %91 {offsets = [0, 48], sizes = [8, 16], strides = [1, 1]} : vector<8x64xf32> to vector<8x16xf32>
    %190 = vector.extract_strided_slice %107 {offsets = [0, 3], sizes = [8, 1], strides = [1, 1]} : vector<8x4xf32> to vector<8x1xf32>
    %191 = vector.broadcast %190 : vector<8x1xf32> to vector<8x16xf32>
    %192 = arith.mulf %189, %191 : vector<8x16xf32>
    %cst_57 = arith.constant dense<0.000000e+00> : vector<8x16xf32>
    %193 = tpu.matmul %188, %192, %cst_57 {dimension_numbers = #tpu.dot_dimension_numbers<[1], [0], [0], [1], [0, 0, 1, 1], [], []>} : vector<8x8xf32>, vector<8x16xf32>, vector<8x16xf32> -> vector<8x16xf32>
    %c2_58 = arith.constant 2 : index
    %c3_59 = arith.constant 3 : index
    %194 = vector.load %arg8[%c2_58, %c3_59] : memref<4x4xf32, #tpu.memory_space<vmem>>, vector<1x1xf32>
    %195 = vector.broadcast %194 : vector<1x1xf32> to vector<8x16xf32>
    %196 = arith.mulf %195, %189 : vector<8x16xf32>
    %197 = arith.addf %193, %196 : vector<8x16xf32>
    %c0_60 = arith.constant 0 : index
    %c48 = arith.constant 48 : index
    %198 = vector.load %arg13[%c0_60, %c48] : memref<8x64xf32, #tpu.memory_space<vmem>>, vector<8x16xf32>
    tpu.vector_store %arg13[%c0_60, %c48], %197 {strides = array<i32>} : memref<8x64xf32, #tpu.memory_space<vmem>>, vector<8x16xf32>,
    %c0_61 = arith.constant 0 : index
    %c0_62 = arith.constant 0 : index
    %199 = vector.load %arg13[%c0_61, %c0_62] : memref<8x64xf32, #tpu.memory_space<vmem>>, vector<8x64xf32>
    %200 = vector.extract_strided_slice %38 {offsets = [0, 128], sizes = [8, 64], strides = [1, 1]} : vector<8x256xf32> to vector<8x64xf32>
    %201 = arith.negf %200 : vector<8x64xf32>
    %202 = math.exp %201 : vector<8x64xf32>
    %cst_63 = arith.constant 1.000000e+00 : f32
    %203 = vector.broadcast %cst_63 : f32 to vector<8x64xf32>
    %204 = arith.addf %203, %202 : vector<8x64xf32>
    %205 = arith.divf %203, %204 : vector<8x64xf32>
    %206 = arith.mulf %200, %205 : vector<8x64xf32>
    %207 = arith.mulf %199, %206 : vector<8x64xf32>
    %208 = arith.mulf %207, %207 : vector<8x64xf32>
    %cst_64 = arith.constant dense<0.000000e+00> : vector<8xf32>
    %209 = vector.multi_reduction <add>, %208, %cst_64 [1] : vector<8x64xf32> to vector<8xf32>
    %210 = vector.shape_cast %209 : vector<8xf32> to vector<8x1xf32>
    %cst_65 = arith.constant 6.400000e+01 : f32
    %211 = vector.broadcast %cst_65 : f32 to vector<8x1xf32>
    %212 = arith.divf %210, %211 : vector<8x1xf32>
    %cst_66 = arith.constant 9.99999974E-6 : f32
    %213 = vector.broadcast %cst_66 : f32 to vector<8x1xf32>
    %214 = arith.addf %212, %213 : vector<8x1xf32>
    %215 = math.rsqrt %214 : vector<8x1xf32>
    %216 = vector.broadcast %215 : vector<8x1xf32> to vector<8x64xf32>
    %217 = arith.mulf %207, %216 : vector<8x64xf32>
    %c0_67 = arith.constant 0 : index
    %c0_68 = arith.constant 0 : index
    %218 = vector.load %arg9[%c0_67, %c0_68] : memref<1x64xbf16, #tpu.memory_space<vmem>>, vector<1x64xbf16>
    %219 = arith.extf %218 : vector<1x64xbf16> to vector<1x64xf32>
    %220 = vector.broadcast %219 : vector<1x64xf32> to vector<8x64xf32>
    %221 = arith.mulf %217, %220 : vector<8x64xf32>
    %222 = arith.truncf %221 : vector<8x64xf32> to vector<8x64xbf16>
    %c0_69 = arith.constant 0 : index
    %c0_70 = arith.constant 0 : index
    %223 = vector.load %arg10[%c0_69, %c0_70] : memref<64x128xbf16, #tpu.memory_space<vmem>>, vector<64x128xbf16>
    %cst_71 = arith.constant dense<0.000000e+00> : vector<8x128xf32>
    %224 = tpu.matmul %222, %223, %cst_71 {dimension_numbers = #tpu.dot_dimension_numbers<[1], [0], [0], [1], [0, 0, 1, 1], [], []>} : vector<8x64xbf16>, vector<64x128xbf16>, vector<8x128xf32> -> vector<8x128xf32>
    %225 = arith.truncf %224 : vector<8x128xf32> to vector<8x128xbf16>
    %c0_72 = arith.constant 0 : index
    %c0_73 = arith.constant 0 : index
    %226 = vector.load %arg12[%c0_72, %c0_73] : memref<8x128xbf16, #tpu.memory_space<vmem>>, vector<8x128xbf16>
    tpu.vector_store %arg12[%c0_72, %c0_73], %225 {strides = array<i32>} : memref<8x128xbf16, #tpu.memory_space<vmem>>, vector<8x128xbf16>,
    return
  }
  func.func @transform_0(%arg0: i32) -> (i32, i32) {
    %c0_i32 = arith.constant 0 : i32
    %c0_i32_0 = arith.constant 0 : i32
    return %arg0, %c0_i32 : i32, i32
  }
  func.func @transform_1(%arg0: i32) -> (i32, i32) {
    %c0_i32 = arith.constant 0 : i32
    %c0_i32_0 = arith.constant 0 : i32
    return %arg0, %c0_i32 : i32, i32
  }
  func.func @transform_2(%arg0: i32) -> (i32, i32) {
    %c0_i32 = arith.constant 0 : i32
    %c0_i32_0 = arith.constant 0 : i32
    %c0_i32_1 = arith.constant 0 : i32
    return %c0_i32, %c0_i32_0 : i32, i32
  }
  func.func @transform_3(%arg0: i32) -> (i32, i32) {
    %c0_i32 = arith.constant 0 : i32
    %c0_i32_0 = arith.constant 0 : i32
    %c0_i32_1 = arith.constant 0 : i32
    return %c0_i32, %c0_i32_0 : i32, i32
  }
  func.func @transform_4(%arg0: i32) -> (i32, i32) {
    %c0_i32 = arith.constant 0 : i32
    %c0_i32_0 = arith.constant 0 : i32
    %c0_i32_1 = arith.constant 0 : i32
    return %c0_i32, %c0_i32_0 : i32, i32
  }
  func.func @transform_5(%arg0: i32) -> (i32, i32) {
    %c0_i32 = arith.constant 0 : i32
    %c0_i32_0 = arith.constant 0 : i32
    %c0_i32_1 = arith.constant 0 : i32
    return %c0_i32, %c0_i32_0 : i32, i32
  }
  func.func @transform_6(%arg0: i32) -> (i32, i32) {
    %c0_i32 = arith.constant 0 : i32
    %c0_i32_0 = arith.constant 0 : i32
    %c0_i32_1 = arith.constant 0 : i32
    return %c0_i32, %c0_i32_0 : i32, i32
  }
  func.func @transform_7(%arg0: i32) -> (i32, i32) {
    %c0_i32 = arith.constant 0 : i32
    %c0_i32_0 = arith.constant 0 : i32
    %c0_i32_1 = arith.constant 0 : i32
    return %c0_i32, %c0_i32_0 : i32, i32
  }
  func.func @transform_8(%arg0: i32) -> (i32, i32) {
    %c0_i32 = arith.constant 0 : i32
    %c0_i32_0 = arith.constant 0 : i32
    %c0_i32_1 = arith.constant 0 : i32
    return %c0_i32, %c0_i32_0 : i32, i32
  }
  func.func @transform_9(%arg0: i32) -> (i32, i32) {
    %c0_i32 = arith.constant 0 : i32
    %c0_i32_0 = arith.constant 0 : i32
    %c0_i32_1 = arith.constant 0 : i32
    return %c0_i32, %c0_i32_0 : i32, i32
  }
  func.func @transform_10(%arg0: i32) -> (i32, i32) {
    %c0_i32 = arith.constant 0 : i32
    %c0_i32_0 = arith.constant 0 : i32
    return %arg0, %c0_i32 : i32, i32
  }
  func.func @transform_11(%arg0: i32) -> (i32, i32) {
    %c0_i32 = arith.constant 0 : i32
    %c0_i32_0 = arith.constant 0 : i32
    return %arg0, %c0_i32 : i32, i32
  }
}

module attributes {stable_mosaic.version = 11 : i64} {
  func.func @_layer_kernel(%arg0: i32, %arg1: memref<8x128xbf16, #tpu.memory_space<vmem>>, %arg2: memref<8x128xbf16, #tpu.memory_space<vmem>>, %arg3: memref<1x128xbf16, #tpu.memory_space<vmem>>, %arg4: memref<1x128xbf16, #tpu.memory_space<vmem>>, %arg5: memref<128x256xbf16, #tpu.memory_space<vmem>>, %arg6: memref<4x128xbf16, #tpu.memory_space<vmem>>, %arg7: memref<1x128xbf16, #tpu.memory_space<vmem>>, %arg8: memref<4x4xf32, #tpu.memory_space<vmem>>, %arg9: memref<1x64xbf16, #tpu.memory_space<vmem>>, %arg10: memref<64x128xbf16, #tpu.memory_space<vmem>>, %arg11: memref<8x128xbf16, #tpu.memory_space<vmem>>, %arg12: memref<8x128xbf16, #tpu.memory_space<vmem>>, %arg13: memref<8x64xf32, #tpu.memory_space<vmem>>) attributes {dimension_semantics = [#tpu.dimension_semantics<parallel>], iteration_bounds = array<i64: 2>, scalar_prefetch = 0 : i64, scratch_operands = 1 : i64, tpu.core_type = #tpu.core_type<tc>, window_params = [{transform_indices = @transform_0, window_bounds = array<i64: 8, 128>}, {transform_indices = @transform_1, window_bounds = array<i64: 8, 128>}, {pipeline_mode = #tpu.pipeline_mode<synchronous>, transform_indices = @transform_2, window_bounds = array<i64: 1, 128>}, {pipeline_mode = #tpu.pipeline_mode<synchronous>, transform_indices = @transform_3, window_bounds = array<i64: 1, 128>}, {pipeline_mode = #tpu.pipeline_mode<synchronous>, transform_indices = @transform_4, window_bounds = array<i64: 128, 256>}, {pipeline_mode = #tpu.pipeline_mode<synchronous>, transform_indices = @transform_5, window_bounds = array<i64: 4, 128>}, {pipeline_mode = #tpu.pipeline_mode<synchronous>, transform_indices = @transform_6, window_bounds = array<i64: 1, 128>}, {pipeline_mode = #tpu.pipeline_mode<synchronous>, transform_indices = @transform_7, window_bounds = array<i64: 4, 4>}, {pipeline_mode = #tpu.pipeline_mode<synchronous>, transform_indices = @transform_8, window_bounds = array<i64: 1, 64>}, {pipeline_mode = #tpu.pipeline_mode<synchronous>, transform_indices = @transform_9, window_bounds = array<i64: 64, 128>}, {transform_indices = @transform_10, window_bounds = array<i64: 8, 128>}, {transform_indices = @transform_11, window_bounds = array<i64: 8, 128>}]} {
    %c0 = arith.constant 0 : index
    %c0_0 = arith.constant 0 : index
    %0 = vector.load %arg1[%c0, %c0_0] : memref<8x128xbf16, #tpu.memory_space<vmem>>, vector<8x128xbf16>
    %1 = arith.extf %0 : vector<8x128xbf16> to vector<8x128xf32>
    %c0_1 = arith.constant 0 : index
    %c0_2 = arith.constant 0 : index
    %2 = vector.load %arg2[%c0_1, %c0_2] : memref<8x128xbf16, #tpu.memory_space<vmem>>, vector<8x128xbf16>
    %3 = arith.extf %2 : vector<8x128xbf16> to vector<8x128xf32>
    %4 = arith.addf %1, %3 : vector<8x128xf32>
    %5 = arith.truncf %4 : vector<8x128xf32> to vector<8x128xbf16>
    %c0_3 = arith.constant 0 : index
    %c0_4 = arith.constant 0 : index
    %6 = vector.load %arg11[%c0_3, %c0_4] : memref<8x128xbf16, #tpu.memory_space<vmem>>, vector<8x128xbf16>
    tpu.vector_store %arg11[%c0_3, %c0_4], %5 {strides = array<i32>} : memref<8x128xbf16, #tpu.memory_space<vmem>>, vector<8x128xbf16>,
    %7 = tpu.iota {dimensions = array<i32: 1>} : vector<8x128xi32>
    %c32_i32 = arith.constant 32 : i32
    %8 = vector.broadcast %c32_i32 : i32 to vector<8x128xi32>
    %9 = arith.cmpi slt, %7, %8 : vector<8x128xi32>
    %cst = arith.constant dense<0.000000e+00> : vector<8xf32>
    %10 = vector.multi_reduction <add>, %4, %cst [1] : vector<8x128xf32> to vector<8xf32>
    %11 = vector.shape_cast %10 : vector<8xf32> to vector<8x1xf32>
    %cst_5 = arith.constant 3.200000e+01 : f32
    %12 = vector.broadcast %cst_5 : f32 to vector<8x1xf32>
    %13 = arith.divf %11, %12 : vector<8x1xf32>
    %14 = vector.broadcast %13 : vector<8x1xf32> to vector<8x128xf32>
    %15 = arith.subf %4, %14 : vector<8x128xf32>
    %16 = arith.mulf %15, %15 : vector<8x128xf32>
    %cst_6 = arith.constant 0.000000e+00 : f32
    %17 = vector.broadcast %cst_6 : f32 to vector<8x128xf32>
    %18 = arith.select %9, %16, %17 : vector<8x128xi1>, vector<8x128xf32>
    %cst_7 = arith.constant dense<0.000000e+00> : vector<8xf32>
    %19 = vector.multi_reduction <add>, %18, %cst_7 [1] : vector<8x128xf32> to vector<8xf32>
    %20 = vector.shape_cast %19 : vector<8xf32> to vector<8x1xf32>
    %cst_8 = arith.constant 3.200000e+01 : f32
    %21 = vector.broadcast %cst_8 : f32 to vector<8x1xf32>
    %22 = arith.divf %20, %21 : vector<8x1xf32>
    %cst_9 = arith.constant 9.99999974E-6 : f32
    %23 = vector.broadcast %cst_9 : f32 to vector<8x1xf32>
    %24 = arith.addf %22, %23 : vector<8x1xf32>
    %25 = math.rsqrt %24 : vector<8x1xf32>
    %26 = vector.broadcast %25 : vector<8x1xf32> to vector<8x128xf32>
    %27 = arith.mulf %15, %26 : vector<8x128xf32>
    %c0_10 = arith.constant 0 : index
    %c0_11 = arith.constant 0 : index
    %28 = vector.load %arg3[%c0_10, %c0_11] : memref<1x128xbf16, #tpu.memory_space<vmem>>, vector<1x128xbf16>
    %29 = arith.extf %28 : vector<1x128xbf16> to vector<1x128xf32>
    %30 = vector.broadcast %29 : vector<1x128xf32> to vector<8x128xf32>
    %31 = arith.mulf %27, %30 : vector<8x128xf32>
    %c0_12 = arith.constant 0 : index
    %c0_13 = arith.constant 0 : index
    %32 = vector.load %arg4[%c0_12, %c0_13] : memref<1x128xbf16, #tpu.memory_space<vmem>>, vector<1x128xbf16>
    %33 = arith.extf %32 : vector<1x128xbf16> to vector<1x128xf32>
    %34 = vector.broadcast %33 : vector<1x128xf32> to vector<8x128xf32>
    %35 = arith.addf %31, %34 : vector<8x128xf32>
    %36 = arith.truncf %35 : vector<8x128xf32> to vector<8x128xbf16>
    %c0_14 = arith.constant 0 : index
    %c0_15 = arith.constant 0 : index
    %37 = vector.load %arg5[%c0_14, %c0_15] : memref<128x256xbf16, #tpu.memory_space<vmem>>, vector<128x256xbf16>
    %cst_16 = arith.constant dense<0.000000e+00> : vector<8x256xf32>
    %38 = tpu.matmul %36, %37, %cst_16 {dimension_numbers = #tpu.dot_dimension_numbers<[1], [0], [0], [1], [0, 0, 1, 1], [], []>} : vector<8x128xbf16>, vector<128x256xbf16>, vector<8x256xf32> -> vector<8x256xf32>
    %39 = vector.extract_strided_slice %38 {offsets = [0, 0], sizes = [8, 128], strides = [1, 1]} : vector<8x256xf32> to vector<8x128xf32>
    %40 = tpu.iota {dimensions = array<i32: 0>} : vector<8x8xi32>
    %41 = tpu.iota {dimensions = array<i32: 1>} : vector<8x8xi32>
    %cst_17 = arith.constant 0.000000e+00 : f32
    %42 = vector.broadcast %cst_17 : f32 to vector<8x128xf32>
    %c0_18 = arith.constant 0 : index
    %c0_19 = arith.constant 0 : index
    %43 = vector.load %arg7[%c0_18, %c0_19] : memref<1x128xbf16, #tpu.memory_space<vmem>>, vector<1x128xbf16>
    %44 = arith.extf %43 : vector<1x128xbf16> to vector<1x128xf32>
    %45 = vector.broadcast %44 : vector<1x128xf32> to vector<8x128xf32>
    %46 = arith.addf %42, %45 : vector<8x128xf32>
    %47 = arith.subi %40, %41 : vector<8x8xi32>
    %c3_i32 = arith.constant 3 : i32
    %48 = vector.broadcast %c3_i32 : i32 to vector<8x8xi32>
    %49 = arith.cmpi eq, %47, %48 : vector<8x8xi32>
    %50 = arith.extui %49 : vector<8x8xi1> to vector<8x8xi32>
    %51 = arith.sitofp %50 : vector<8x8xi32> to vector<8x8xf32>
    %cst_20 = arith.constant dense<0.000000e+00> : vector<8x128xf32>
    %52 = tpu.matmul %51, %39, %cst_20 {dimension_numbers = #tpu.dot_dimension_numbers<[1], [0], [0], [1], [0, 0, 1, 1], [], []>} : vector<8x8xf32>, vector<8x128xf32>, vector<8x128xf32> -> vector<8x128xf32>
    %c0_21 = arith.constant 0 : index
    %c0_22 = arith.constant 0 : index
    %53 = vector.load %arg6[%c0_21, %c0_22] : memref<4x128xbf16, #tpu.memory_space<vmem>>, vector<1x128xbf16>
    %54 = arith.extf %53 : vector<1x128xbf16> to vector<1x128xf32>
    %55 = vector.broadcast %54 : vector<1x128xf32> to vector<8x128xf32>
    %56 = arith.mulf %52, %55 : vector<8x128xf32>
    %57 = arith.addf %46, %56 : vector<8x128xf32>
    %58 = arith.subi %40, %41 : vector<8x8xi32>
    %c2_i32 = arith.constant 2 : i32
    %59 = vector.broadcast %c2_i32 : i32 to vector<8x8xi32>
    %60 = arith.cmpi eq, %58, %59 : vector<8x8xi32>
    %61 = arith.extui %60 : vector<8x8xi1> to vector<8x8xi32>
    %62 = arith.sitofp %61 : vector<8x8xi32> to vector<8x8xf32>
    %cst_23 = arith.constant dense<0.000000e+00> : vector<8x128xf32>
    %63 = tpu.matmul %62, %39, %cst_23 {dimension_numbers = #tpu.dot_dimension_numbers<[1], [0], [0], [1], [0, 0, 1, 1], [], []>} : vector<8x8xf32>, vector<8x128xf32>, vector<8x128xf32> -> vector<8x128xf32>
    %c1 = arith.constant 1 : index
    %c0_24 = arith.constant 0 : index
    %64 = vector.load %arg6[%c1, %c0_24] : memref<4x128xbf16, #tpu.memory_space<vmem>>, vector<1x128xbf16>
    %65 = arith.extf %64 : vector<1x128xbf16> to vector<1x128xf32>
    %66 = vector.broadcast %65 : vector<1x128xf32> to vector<8x128xf32>
    %67 = arith.mulf %63, %66 : vector<8x128xf32>
    %68 = arith.addf %57, %67 : vector<8x128xf32>
    %69 = arith.subi %40, %41 : vector<8x8xi32>
    %c1_i32 = arith.constant 1 : i32
    %70 = vector.broadcast %c1_i32 : i32 to vector<8x8xi32>
    %71 = arith.cmpi eq, %69, %70 : vector<8x8xi32>
    %72 = arith.extui %71 : vector<8x8xi1> to vector<8x8xi32>
    %73 = arith.sitofp %72 : vector<8x8xi32> to vector<8x8xf32>
    %cst_25 = arith.constant dense<0.000000e+00> : vector<8x128xf32>
    %74 = tpu.matmul %73, %39, %cst_25 {dimension_numbers = #tpu.dot_dimension_numbers<[1], [0], [0], [1], [0, 0, 1, 1], [], []>} : vector<8x8xf32>, vector<8x128xf32>, vector<8x128xf32> -> vector<8x128xf32>
    %c2 = arith.constant 2 : index
    %c0_26 = arith.constant 0 : index
    %75 = vector.load %arg6[%c2, %c0_26] : memref<4x128xbf16, #tpu.memory_space<vmem>>, vector<1x128xbf16>
    %76 = arith.extf %75 : vector<1x128xbf16> to vector<1x128xf32>
    %77 = vector.broadcast %76 : vector<1x128xf32> to vector<8x128xf32>
    %78 = arith.mulf %74, %77 : vector<8x128xf32>
    %79 = arith.addf %68, %78 : vector<8x128xf32>
    %c3 = arith.constant 3 : index
    %c0_27 = arith.constant 0 : index
    %80 = vector.load %arg6[%c3, %c0_27] : memref<4x128xbf16, #tpu.memory_space<vmem>>, vector<1x128xbf16>
    %81 = arith.extf %80 : vector<1x128xbf16> to vector<1x128xf32>
    %82 = vector.broadcast %81 : vector<1x128xf32> to vector<8x128xf32>
    %83 = arith.mulf %39, %82 : vector<8x128xf32>
    %84 = arith.addf %79, %83 : vector<8x128xf32>
    %85 = arith.negf %84 : vector<8x128xf32>
    %86 = math.exp %85 : vector<8x128xf32>
    %cst_28 = arith.constant 1.000000e+00 : f32
    %87 = vector.broadcast %cst_28 : f32 to vector<8x128xf32>
    %88 = arith.addf %87, %86 : vector<8x128xf32>
    %89 = arith.divf %87, %88 : vector<8x128xf32>
    %90 = arith.mulf %84, %89 : vector<8x128xf32>
    %91 = vector.extract_strided_slice %90 {offsets = [0, 0], sizes = [8, 64], strides = [1, 1]} : vector<8x128xf32> to vector<8x64xf32>
    %92 = vector.extract_strided_slice %90 {offsets = [0, 64], sizes = [8, 16], strides = [1, 1]} : vector<8x128xf32> to vector<8x16xf32>
    %93 = vector.extract_strided_slice %90 {offsets = [0, 80], sizes = [8, 16], strides = [1, 1]} : vector<8x128xf32> to vector<8x16xf32>
    %94 = vector.extract_strided_slice %38 {offsets = [0, 192], sizes = [8, 4], strides = [1, 1]} : vector<8x256xf32> to vector<8x4xf32>
    %c0_29 = arith.constant 0 : index
    %c0_30 = arith.constant 0 : index
    %95 = vector.load %arg8[%c0_29, %c0_30] : memref<4x4xf32, #tpu.memory_space<vmem>>, vector<1x4xf32>
    %96 = vector.broadcast %95 : vector<1x4xf32> to vector<8x4xf32>
    %97 = arith.addf %94, %96 : vector<8x4xf32>
    %cst_31 = arith.constant 0.000000e+00 : f32
    %98 = vector.broadcast %cst_31 : f32 to vector<8x4xf32>
    %99 = arith.maximumf %97, %98 : vector<8x4xf32>
    %100 = math.absf %97 : vector<8x4xf32>
    %cst_32 = arith.constant 0.000000e+00 : f32
    %101 = vector.broadcast %cst_32 : f32 to vector<8x4xf32>
    %102 = arith.subf %101, %100 : vector<8x4xf32>
    %103 = math.exp %102 : vector<8x4xf32>
    %cst_33 = arith.constant 1.000000e+00 : f32
    %104 = vector.broadcast %cst_33 : f32 to vector<8x4xf32>
    %105 = arith.addf %104, %103 : vector<8x4xf32>
    %106 = math.log %105 : vector<8x4xf32>
    %107 = arith.addf %99, %106 : vector<8x4xf32>
    %c1_34 = arith.constant 1 : index
    %c0_35 = arith.constant 0 : index
    %108 = vector.load %arg8[%c1_34, %c0_35] : memref<4x4xf32, #tpu.memory_space<vmem>>, vector<1x4xf32>
    %109 = math.exp %108 : vector<1x4xf32>
    %cst_36 = arith.constant 0.000000e+00 : f32
    %110 = vector.broadcast %cst_36 : f32 to vector<1x4xf32>
    %111 = arith.subf %110, %109 : vector<1x4xf32>
    %112 = vector.broadcast %111 : vector<1x4xf32> to vector<8x4xf32>
    %113 = arith.mulf %107, %112 : vector<8x4xf32>
    %114 = arith.cmpi sle, %41, %40 : vector<8x8xi32>
    %115 = arith.extui %114 : vector<8x8xi1> to vector<8x8xi32>
    %116 = arith.sitofp %115 : vector<8x8xi32> to vector<8x8xf32>
    %117 = arith.cmpi sle, %40, %41 : vector<8x8xi32>
    %118 = arith.extui %117 : vector<8x8xi1> to vector<8x8xi32>
    %119 = arith.sitofp %118 : vector<8x8xi32> to vector<8x8xf32>
    %cst_37 = arith.constant dense<0.000000e+00> : vector<8x4xf32>
    %120 = tpu.matmul %116, %113, %cst_37 {dimension_numbers = #tpu.dot_dimension_numbers<[1], [0], [0], [1], [0, 0, 1, 1], [], []>} : vector<8x8xf32>, vector<8x4xf32>, vector<8x4xf32> -> vector<8x4xf32>
    %cst_38 = arith.constant dense<0.000000e+00> : vector<4x8xf32>
    %121 = tpu.matmul %113, %119, %cst_38 {dimension_numbers = #tpu.dot_dimension_numbers<[0], [0], [1], [1], [0, 1, 1, 1], [], []>} : vector<8x4xf32>, vector<8x8xf32>, vector<4x8xf32> -> vector<4x8xf32>
    %cst_39 = arith.constant dense<0.000000e+00> : vector<8x8xf32>
    %122 = tpu.matmul %93, %92, %cst_39 {dimension_numbers = #tpu.dot_dimension_numbers<[1], [1], [0], [0], [0, 0, 1, 0], [], []>} : vector<8x16xf32>, vector<8x16xf32>, vector<8x8xf32> -> vector<8x8xf32>
    %123 = vector.extract_strided_slice %120 {offsets = [0, 0], sizes = [8, 1], strides = [1, 1]} : vector<8x4xf32> to vector<8x1xf32>
    %124 = vector.extract_strided_slice %121 {offsets = [0, 0], sizes = [1, 8], strides = [1, 1]} : vector<4x8xf32> to vector<1x8xf32>
    %125 = vector.broadcast %123 : vector<8x1xf32> to vector<8x8xf32>
    %126 = vector.broadcast %124 : vector<1x8xf32> to vector<8x8xf32>
    %127 = arith.subf %125, %126 : vector<8x8xf32>
    %cst_40 = arith.constant -1.000000e+30 : f32
    %128 = vector.broadcast %cst_40 : f32 to vector<8x8xf32>
    %129 = arith.select %114, %127, %128 : vector<8x8xi1>, vector<8x8xf32>
    %130 = math.exp %129 : vector<8x8xf32>
    %131 = arith.mulf %130, %122 : vector<8x8xf32>
    %132 = vector.extract_strided_slice %91 {offsets = [0, 0], sizes = [8, 16], strides = [1, 1]} : vector<8x64xf32> to vector<8x16xf32>
    %133 = vector.extract_strided_slice %107 {offsets = [0, 0], sizes = [8, 1], strides = [1, 1]} : vector<8x4xf32> to vector<8x1xf32>
    %134 = vector.broadcast %133 : vector<8x1xf32> to vector<8x16xf32>
    %135 = arith.mulf %132, %134 : vector<8x16xf32>
    %cst_41 = arith.constant dense<0.000000e+00> : vector<8x16xf32>
    %136 = tpu.matmul %131, %135, %cst_41 {dimension_numbers = #tpu.dot_dimension_numbers<[1], [0], [0], [1], [0, 0, 1, 1], [], []>} : vector<8x8xf32>, vector<8x16xf32>, vector<8x16xf32> -> vector<8x16xf32>
    %c2_42 = arith.constant 2 : index
    %c0_43 = arith.constant 0 : index
    %137 = vector.load %arg8[%c2_42, %c0_43] : memref<4x4xf32, #tpu.memory_space<vmem>>, vector<1x1xf32>
    %138 = vector.broadcast %137 : vector<1x1xf32> to vector<8x16xf32>
    %139 = arith.mulf %138, %132 : vector<8x16xf32>
    %140 = arith.addf %136, %139 : vector<8x16xf32>
    %c0_44 = arith.constant 0 : index
    %c0_45 = arith.constant 0 : index
    %141 = vector.load %arg13[%c0_44, %c0_45] : memref<8x64xf32, #tpu.memory_space<vmem>>, vector<8x16xf32>
    tpu.vector_store %arg13[%c0_44, %c0_45], %140 {strides = array<i32>} : memref<8x64xf32, #tpu.memory_space<vmem>>, vector<8x16xf32>,
    %142 = vector.extract_strided_slice %120 {offsets = [0, 1], sizes = [8, 1], strides = [1, 1]} : vector<8x4xf32> to vector<8x1xf32>
    %143 = vector.extract_strided_slice %121 {offsets = [1, 0], sizes = [1, 8], strides = [1, 1]} : vector<4x8xf32> to vector<1x8xf32>
    %144 = vector.broadcast %142 : vector<8x1xf32> to vector<8x8xf32>
    %145 = vector.broadcast %143 : vector<1x8xf32> to vector<8x8xf32>
    %146 = arith.subf %144, %145 : vector<8x8xf32>
    %cst_46 = arith.constant -1.000000e+30 : f32
    %147 = vector.broadcast %cst_46 : f32 to vector<8x8xf32>
    %148 = arith.select %114, %146, %147 : vector<8x8xi1>, vector<8x8xf32>
    %149 = math.exp %148 : vector<8x8xf32>
    %150 = arith.mulf %149, %122 : vector<8x8xf32>
    %151 = vector.extract_strided_slice %91 {offsets = [0, 16], sizes = [8, 16], strides = [1, 1]} : vector<8x64xf32> to vector<8x16xf32>
    %152 = vector.extract_strided_slice %107 {offsets = [0, 1], sizes = [8, 1], strides = [1, 1]} : vector<8x4xf32> to vector<8x1xf32>
    %153 = vector.broadcast %152 : vector<8x1xf32> to vector<8x16xf32>
    %154 = arith.mulf %151, %153 : vector<8x16xf32>
    %cst_47 = arith.constant dense<0.000000e+00> : vector<8x16xf32>
    %155 = tpu.matmul %150, %154, %cst_47 {dimension_numbers = #tpu.dot_dimension_numbers<[1], [0], [0], [1], [0, 0, 1, 1], [], []>} : vector<8x8xf32>, vector<8x16xf32>, vector<8x16xf32> -> vector<8x16xf32>
    %c2_48 = arith.constant 2 : index
    %c1_49 = arith.constant 1 : index
    %156 = vector.load %arg8[%c2_48, %c1_49] : memref<4x4xf32, #tpu.memory_space<vmem>>, vector<1x1xf32>
    %157 = vector.broadcast %156 : vector<1x1xf32> to vector<8x16xf32>
    %158 = arith.mulf %157, %151 : vector<8x16xf32>
    %159 = arith.addf %155, %158 : vector<8x16xf32>
    %c0_50 = arith.constant 0 : index
    %c16 = arith.constant 16 : index
    %160 = vector.load %arg13[%c0_50, %c16] : memref<8x64xf32, #tpu.memory_space<vmem>>, vector<8x16xf32>
    tpu.vector_store %arg13[%c0_50, %c16], %159 {strides = array<i32>} : memref<8x64xf32, #tpu.memory_space<vmem>>, vector<8x16xf32>,
    %161 = vector.extract_strided_slice %120 {offsets = [0, 2], sizes = [8, 1], strides = [1, 1]} : vector<8x4xf32> to vector<8x1xf32>
    %162 = vector.extract_strided_slice %121 {offsets = [2, 0], sizes = [1, 8], strides = [1, 1]} : vector<4x8xf32> to vector<1x8xf32>
    %163 = vector.broadcast %161 : vector<8x1xf32> to vector<8x8xf32>
    %164 = vector.broadcast %162 : vector<1x8xf32> to vector<8x8xf32>
    %165 = arith.subf %163, %164 : vector<8x8xf32>
    %cst_51 = arith.constant -1.000000e+30 : f32
    %166 = vector.broadcast %cst_51 : f32 to vector<8x8xf32>
    %167 = arith.select %114, %165, %166 : vector<8x8xi1>, vector<8x8xf32>
    %168 = math.exp %167 : vector<8x8xf32>
    %169 = arith.mulf %168, %122 : vector<8x8xf32>
    %170 = vector.extract_strided_slice %91 {offsets = [0, 32], sizes = [8, 16], strides = [1, 1]} : vector<8x64xf32> to vector<8x16xf32>
    %171 = vector.extract_strided_slice %107 {offsets = [0, 2], sizes = [8, 1], strides = [1, 1]} : vector<8x4xf32> to vector<8x1xf32>
    %172 = vector.broadcast %171 : vector<8x1xf32> to vector<8x16xf32>
    %173 = arith.mulf %170, %172 : vector<8x16xf32>
    %cst_52 = arith.constant dense<0.000000e+00> : vector<8x16xf32>
    %174 = tpu.matmul %169, %173, %cst_52 {dimension_numbers = #tpu.dot_dimension_numbers<[1], [0], [0], [1], [0, 0, 1, 1], [], []>} : vector<8x8xf32>, vector<8x16xf32>, vector<8x16xf32> -> vector<8x16xf32>
    %c2_53 = arith.constant 2 : index
    %c2_54 = arith.constant 2 : index
    %175 = vector.load %arg8[%c2_53, %c2_54] : memref<4x4xf32, #tpu.memory_space<vmem>>, vector<1x1xf32>
    %176 = vector.broadcast %175 : vector<1x1xf32> to vector<8x16xf32>
    %177 = arith.mulf %176, %170 : vector<8x16xf32>
    %178 = arith.addf %174, %177 : vector<8x16xf32>
    %c0_55 = arith.constant 0 : index
    %c32 = arith.constant 32 : index
    %179 = vector.load %arg13[%c0_55, %c32] : memref<8x64xf32, #tpu.memory_space<vmem>>, vector<8x16xf32>
    tpu.vector_store %arg13[%c0_55, %c32], %178 {strides = array<i32>} : memref<8x64xf32, #tpu.memory_space<vmem>>, vector<8x16xf32>,
    %180 = vector.extract_strided_slice %120 {offsets = [0, 3], sizes = [8, 1], strides = [1, 1]} : vector<8x4xf32> to vector<8x1xf32>
    %181 = vector.extract_strided_slice %121 {offsets = [3, 0], sizes = [1, 8], strides = [1, 1]} : vector<4x8xf32> to vector<1x8xf32>
    %182 = vector.broadcast %180 : vector<8x1xf32> to vector<8x8xf32>
    %183 = vector.broadcast %181 : vector<1x8xf32> to vector<8x8xf32>
    %184 = arith.subf %182, %183 : vector<8x8xf32>
    %cst_56 = arith.constant -1.000000e+30 : f32
    %185 = vector.broadcast %cst_56 : f32 to vector<8x8xf32>
    %186 = arith.select %114, %184, %185 : vector<8x8xi1>, vector<8x8xf32>
    %187 = math.exp %186 : vector<8x8xf32>
    %188 = arith.mulf %187, %122 : vector<8x8xf32>
    %189 = vector.extract_strided_slice %91 {offsets = [0, 48], sizes = [8, 16], strides = [1, 1]} : vector<8x64xf32> to vector<8x16xf32>
    %190 = vector.extract_strided_slice %107 {offsets = [0, 3], sizes = [8, 1], strides = [1, 1]} : vector<8x4xf32> to vector<8x1xf32>
    %191 = vector.broadcast %190 : vector<8x1xf32> to vector<8x16xf32>
    %192 = arith.mulf %189, %191 : vector<8x16xf32>
    %cst_57 = arith.constant dense<0.000000e+00> : vector<8x16xf32>
    %193 = tpu.matmul %188, %192, %cst_57 {dimension_numbers = #tpu.dot_dimension_numbers<[1], [0], [0], [1], [0, 0, 1, 1], [], []>} : vector<8x8xf32>, vector<8x16xf32>, vector<8x16xf32> -> vector<8x16xf32>
    %c2_58 = arith.constant 2 : index
    %c3_59 = arith.constant 3 : index
    %194 = vector.load %arg8[%c2_58, %c3_59] : memref<4x4xf32, #tpu.memory_space<vmem>>, vector<1x1xf32>
    %195 = vector.broadcast %194 : vector<1x1xf32> to vector<8x16xf32>
    %196 = arith.mulf %195, %189 : vector<8x16xf32>
    %197 = arith.addf %193, %196 : vector<8x16xf32>
    %c0_60 = arith.constant 0 : index
    %c48 = arith.constant 48 : index
    %198 = vector.load %arg13[%c0_60, %c48] : memref<8x64xf32, #tpu.memory_space<vmem>>, vector<8x16xf32>
    tpu.vector_store %arg13[%c0_60, %c48], %197 {strides = array<i32>} : memref<8x64xf32, #tpu.memory_space<vmem>>, vector<8x16xf32>,
    %c0_61 = arith.constant 0 : index
    %c0_62 = arith.constant 0 : index
    %199 = vector.load %arg13[%c0_61, %c0_62] : memref<8x64xf32, #tpu.memory_space<vmem>>, vector<8x64xf32>
    %200 = vector.extract_strided_slice %38 {offsets = [0, 128], sizes = [8, 64], strides = [1, 1]} : vector<8x256xf32> to vector<8x64xf32>
    %201 = arith.negf %200 : vector<8x64xf32>
    %202 = math.exp %201 : vector<8x64xf32>
    %cst_63 = arith.constant 1.000000e+00 : f32
    %203 = vector.broadcast %cst_63 : f32 to vector<8x64xf32>
    %204 = arith.addf %203, %202 : vector<8x64xf32>
    %205 = arith.divf %203, %204 : vector<8x64xf32>
    %206 = arith.mulf %200, %205 : vector<8x64xf32>
    %207 = arith.mulf %199, %206 : vector<8x64xf32>
    %208 = arith.mulf %207, %207 : vector<8x64xf32>
    %cst_64 = arith.constant dense<0.000000e+00> : vector<8xf32>
    %209 = vector.multi_reduction <add>, %208, %cst_64 [1] : vector<8x64xf32> to vector<8xf32>
    %210 = vector.shape_cast %209 : vector<8xf32> to vector<8x1xf32>
    %cst_65 = arith.constant 6.400000e+01 : f32
    %211 = vector.broadcast %cst_65 : f32 to vector<8x1xf32>
    %212 = arith.divf %210, %211 : vector<8x1xf32>
    %cst_66 = arith.constant 9.99999974E-6 : f32
    %213 = vector.broadcast %cst_66 : f32 to vector<8x1xf32>
    %214 = arith.addf %212, %213 : vector<8x1xf32>
    %215 = math.rsqrt %214 : vector<8x1xf32>
    %216 = vector.broadcast %215 : vector<8x1xf32> to vector<8x64xf32>
    %217 = arith.mulf %207, %216 : vector<8x64xf32>
    %c0_67 = arith.constant 0 : index
    %c0_68 = arith.constant 0 : index
    %218 = vector.load %arg9[%c0_67, %c0_68] : memref<1x64xbf16, #tpu.memory_space<vmem>>, vector<1x64xbf16>
    %219 = arith.extf %218 : vector<1x64xbf16> to vector<1x64xf32>
    %220 = vector.broadcast %219 : vector<1x64xf32> to vector<8x64xf32>
    %221 = arith.mulf %217, %220 : vector<8x64xf32>
    %222 = arith.truncf %221 : vector<8x64xf32> to vector<8x64xbf16>
    %c0_69 = arith.constant 0 : index
    %c0_70 = arith.constant 0 : index
    %223 = vector.load %arg10[%c0_69, %c0_70] : memref<64x128xbf16, #tpu.memory_space<vmem>>, vector<64x128xbf16>
    %cst_71 = arith.constant dense<0.000000e+00> : vector<8x128xf32>
    %224 = tpu.matmul %222, %223, %cst_71 {dimension_numbers = #tpu.dot_dimension_numbers<[1], [0], [0], [1], [0, 0, 1, 1], [], []>} : vector<8x64xbf16>, vector<64x128xbf16>, vector<8x128xf32> -> vector<8x128xf32>
    %225 = arith.truncf %224 : vector<8x128xf32> to vector<8x128xbf16>
    %c0_72 = arith.constant 0 : index
    %c0_73 = arith.constant 0 : index
    %226 = vector.load %arg12[%c0_72, %c0_73] : memref<8x128xbf16, #tpu.memory_space<vmem>>, vector<8x128xbf16>
    tpu.vector_store %arg12[%c0_72, %c0_73], %225 {strides = array<i32>} : memref<8x128xbf16, #tpu.memory_space<vmem>>, vector<8x128xbf16>,
    return
  }
  func.func @transform_0(%arg0: i32) -> (i32, i32) {
    %c0_i32 = arith.constant 0 : i32
    %c0_i32_0 = arith.constant 0 : i32
    return %arg0, %c0_i32 : i32, i32
  }
  func.func @transform_1(%arg0: i32) -> (i32, i32) {
    %c0_i32 = arith.constant 0 : i32
    %c0_i32_0 = arith.constant 0 : i32
    return %arg0, %c0_i32 : i32, i32
  }
  func.func @transform_2(%arg0: i32) -> (i32, i32) {
    %c0_i32 = arith.constant 0 : i32
    %c0_i32_0 = arith.constant 0 : i32
    %c0_i32_1 = arith.constant 0 : i32
    return %c0_i32, %c0_i32_0 : i32, i32
  }
  func.func @transform_3(%arg0: i32) -> (i32, i32) {
    %c0_i32 = arith.constant 0 : i32
    %c0_i32_0 = arith.constant 0 : i32
    %c0_i32_1 = arith.constant 0 : i32
    return %c0_i32, %c0_i32_0 : i32, i32
  }
  func.func @transform_4(%arg0: i32) -> (i32, i32) {
    %c0_i32 = arith.constant 0 : i32
    %c0_i32_0 = arith.constant 0 : i32
    %c0_i32_1 = arith.constant 0 : i32
    return %c0_i32, %c0_i32_0 : i32, i32
  }
  func.func @transform_5(%arg0: i32) -> (i32, i32) {
    %c0_i32 = arith.constant 0 : i32
    %c0_i32_0 = arith.constant 0 : i32
    %c0_i32_1 = arith.constant 0 : i32
    return %c0_i32, %c0_i32_0 : i32, i32
  }
  func.func @transform_6(%arg0: i32) -> (i32, i32) {
    %c0_i32 = arith.constant 0 : i32
    %c0_i32_0 = arith.constant 0 : i32
    %c0_i32_1 = arith.constant 0 : i32
    return %c0_i32, %c0_i32_0 : i32, i32
  }
  func.func @transform_7(%arg0: i32) -> (i32, i32) {
    %c0_i32 = arith.constant 0 : i32
    %c0_i32_0 = arith.constant 0 : i32
    %c0_i32_1 = arith.constant 0 : i32
    return %c0_i32, %c0_i32_0 : i32, i32
  }
  func.func @transform_8(%arg0: i32) -> (i32, i32) {
    %c0_i32 = arith.constant 0 : i32
    %c0_i32_0 = arith.constant 0 : i32
    %c0_i32_1 = arith.constant 0 : i32
    return %c0_i32, %c0_i32_0 : i32, i32
  }
  func.func @transform_9(%arg0: i32) -> (i32, i32) {
    %c0_i32 = arith.constant 0 : i32
    %c0_i32_0 = arith.constant 0 : i32
    %c0_i32_1 = arith.constant 0 : i32
    return %c0_i32, %c0_i32_0 : i32, i32
  }
  func.func @transform_10(%arg0: i32) -> (i32, i32) {
    %c0_i32 = arith.constant 0 : i32
    %c0_i32_0 = arith.constant 0 : i32
    return %arg0, %c0_i32 : i32, i32
  }
  func.func @transform_11(%arg0: i32) -> (i32, i32) {
    %c0_i32 = arith.constant 0 : i32
    %c0_i32_0 = arith.constant 0 : i32
    return %arg0, %c0_i32 : i32, i32
  }
}

module attributes {stable_mosaic.version = 11 : i64} {
  func.func @_final_kernel(%arg0: memref<16x128xbf16, #tpu.memory_space<vmem>>, %arg1: memref<16x128xbf16, #tpu.memory_space<vmem>>, %arg2: memref<1x128xbf16, #tpu.memory_space<vmem>>, %arg3: memref<1x128xbf16, #tpu.memory_space<vmem>>, %arg4: memref<128x128xbf16, #tpu.memory_space<vmem>>, %arg5: memref<16x1xi32, #tpu.memory_space<vmem>>, %arg6: memref<16x128xbf16, #tpu.memory_space<vmem>>, %arg7: memref<1x1xf32, #tpu.memory_space<vmem>>) attributes {dimension_semantics = [], scalar_prefetch = 0 : i64, scratch_operands = 0 : i64, tpu.core_type = #tpu.core_type<tc>} {
    %c0 = arith.constant 0 : index
    %c0_0 = arith.constant 0 : index
    %0 = vector.load %arg0[%c0, %c0_0] : memref<16x128xbf16, #tpu.memory_space<vmem>>, vector<16x128xbf16>
    %1 = arith.extf %0 : vector<16x128xbf16> to vector<16x128xf32>
    %c0_1 = arith.constant 0 : index
    %c0_2 = arith.constant 0 : index
    %2 = vector.load %arg1[%c0_1, %c0_2] : memref<16x128xbf16, #tpu.memory_space<vmem>>, vector<16x128xbf16>
    %3 = arith.extf %2 : vector<16x128xbf16> to vector<16x128xf32>
    %4 = arith.addf %1, %3 : vector<16x128xf32>
    %5 = tpu.iota {dimensions = array<i32: 1>} : vector<16x128xi32>
    %c32_i32 = arith.constant 32 : i32
    %6 = vector.broadcast %c32_i32 : i32 to vector<16x128xi32>
    %7 = arith.cmpi slt, %5, %6 : vector<16x128xi32>
    %cst = arith.constant dense<0.000000e+00> : vector<16xf32>
    %8 = vector.multi_reduction <add>, %4, %cst [1] : vector<16x128xf32> to vector<16xf32>
    %9 = vector.shape_cast %8 : vector<16xf32> to vector<16x1xf32>
    %cst_3 = arith.constant 3.200000e+01 : f32
    %10 = vector.broadcast %cst_3 : f32 to vector<16x1xf32>
    %11 = arith.divf %9, %10 : vector<16x1xf32>
    %12 = vector.broadcast %11 : vector<16x1xf32> to vector<16x128xf32>
    %13 = arith.subf %4, %12 : vector<16x128xf32>
    %14 = arith.mulf %13, %13 : vector<16x128xf32>
    %cst_4 = arith.constant 0.000000e+00 : f32
    %15 = vector.broadcast %cst_4 : f32 to vector<16x128xf32>
    %16 = arith.select %7, %14, %15 : vector<16x128xi1>, vector<16x128xf32>
    %cst_5 = arith.constant dense<0.000000e+00> : vector<16xf32>
    %17 = vector.multi_reduction <add>, %16, %cst_5 [1] : vector<16x128xf32> to vector<16xf32>
    %18 = vector.shape_cast %17 : vector<16xf32> to vector<16x1xf32>
    %cst_6 = arith.constant 3.200000e+01 : f32
    %19 = vector.broadcast %cst_6 : f32 to vector<16x1xf32>
    %20 = arith.divf %18, %19 : vector<16x1xf32>
    %cst_7 = arith.constant 9.99999974E-6 : f32
    %21 = vector.broadcast %cst_7 : f32 to vector<16x1xf32>
    %22 = arith.addf %20, %21 : vector<16x1xf32>
    %23 = math.rsqrt %22 : vector<16x1xf32>
    %24 = vector.broadcast %23 : vector<16x1xf32> to vector<16x128xf32>
    %25 = arith.mulf %13, %24 : vector<16x128xf32>
    %c0_8 = arith.constant 0 : index
    %c0_9 = arith.constant 0 : index
    %26 = vector.load %arg2[%c0_8, %c0_9] : memref<1x128xbf16, #tpu.memory_space<vmem>>, vector<1x128xbf16>
    %27 = arith.extf %26 : vector<1x128xbf16> to vector<1x128xf32>
    %28 = vector.broadcast %27 : vector<1x128xf32> to vector<16x128xf32>
    %29 = arith.mulf %25, %28 : vector<16x128xf32>
    %c0_10 = arith.constant 0 : index
    %c0_11 = arith.constant 0 : index
    %30 = vector.load %arg3[%c0_10, %c0_11] : memref<1x128xbf16, #tpu.memory_space<vmem>>, vector<1x128xbf16>
    %31 = arith.extf %30 : vector<1x128xbf16> to vector<1x128xf32>
    %32 = vector.broadcast %31 : vector<1x128xf32> to vector<16x128xf32>
    %33 = arith.addf %29, %32 : vector<16x128xf32>
    %34 = arith.truncf %33 : vector<16x128xf32> to vector<16x128xbf16>
    %c0_12 = arith.constant 0 : index
    %c0_13 = arith.constant 0 : index
    %35 = vector.load %arg4[%c0_12, %c0_13] : memref<128x128xbf16, #tpu.memory_space<vmem>>, vector<128x128xbf16>
    %cst_14 = arith.constant dense<0.000000e+00> : vector<16x128xf32>
    %36 = tpu.matmul %34, %35, %cst_14 {dimension_numbers = #tpu.dot_dimension_numbers<[1], [0], [0], [1], [0, 0, 1, 1], [], []>} : vector<16x128xbf16>, vector<128x128xbf16>, vector<16x128xf32> -> vector<16x128xf32>
    %37 = arith.truncf %36 : vector<16x128xf32> to vector<16x128xbf16>
    %c0_15 = arith.constant 0 : index
    %c0_16 = arith.constant 0 : index
    %38 = vector.load %arg6[%c0_15, %c0_16] : memref<16x128xbf16, #tpu.memory_space<vmem>>, vector<16x128xbf16>
    tpu.vector_store %arg6[%c0_15, %c0_16], %37 {strides = array<i32>} : memref<16x128xbf16, #tpu.memory_space<vmem>>, vector<16x128xbf16>,
    %39 = tpu.iota {dimensions = array<i32: 1>} : vector<16x128xi32>
    %c65_i32 = arith.constant 65 : i32
    %40 = vector.broadcast %c65_i32 : i32 to vector<16x128xi32>
    %41 = arith.cmpi slt, %39, %40 : vector<16x128xi32>
    %cst_17 = arith.constant -1.000000e+30 : f32
    %42 = vector.broadcast %cst_17 : f32 to vector<16x128xf32>
    %43 = arith.select %41, %36, %42 : vector<16x128xi1>, vector<16x128xf32>
    %cst_18 = arith.constant dense<0xFF800000> : vector<16xf32>
    %44 = vector.multi_reduction <maximumf>, %43, %cst_18 [1] : vector<16x128xf32> to vector<16xf32>
    %45 = vector.shape_cast %44 : vector<16xf32> to vector<16x1xf32>
    %46 = vector.broadcast %45 : vector<16x1xf32> to vector<16x128xf32>
    %47 = arith.subf %43, %46 : vector<16x128xf32>
    %48 = math.exp %47 : vector<16x128xf32>
    %cst_19 = arith.constant dense<0.000000e+00> : vector<16xf32>
    %49 = vector.multi_reduction <add>, %48, %cst_19 [1] : vector<16x128xf32> to vector<16xf32>
    %50 = vector.shape_cast %49 : vector<16xf32> to vector<16x1xf32>
    %51 = math.log %50 : vector<16x1xf32>
    %52 = arith.addf %51, %45 : vector<16x1xf32>
    %c0_20 = arith.constant 0 : index
    %c0_21 = arith.constant 0 : index
    %53 = vector.load %arg5[%c0_20, %c0_21] : memref<16x1xi32, #tpu.memory_space<vmem>>, vector<16x1xi32>
    %54 = vector.broadcast %53 : vector<16x1xi32> to vector<16x128xi32>
    %55 = arith.cmpi eq, %39, %54 : vector<16x128xi32>
    %cst_22 = arith.constant 0.000000e+00 : f32
    %56 = vector.broadcast %cst_22 : f32 to vector<16x128xf32>
    %57 = arith.select %55, %36, %56 : vector<16x128xi1>, vector<16x128xf32>
    %cst_23 = arith.constant dense<0.000000e+00> : vector<16xf32>
    %58 = vector.multi_reduction <add>, %57, %cst_23 [1] : vector<16x128xf32> to vector<16xf32>
    %59 = vector.shape_cast %58 : vector<16xf32> to vector<16x1xf32>
    %60 = arith.subf %52, %59 : vector<16x1xf32>
    %cst_24 = arith.constant dense<0.000000e+00> : vector<1xf32>
    %61 = vector.multi_reduction <add>, %60, %cst_24 [0] : vector<16x1xf32> to vector<1xf32>
    %62 = vector.shape_cast %61 : vector<1xf32> to vector<1x1xf32>
    %cst_25 = arith.constant 1.600000e+01 : f32
    %63 = vector.broadcast %cst_25 : f32 to vector<1x1xf32>
    %64 = arith.divf %62, %63 : vector<1x1xf32>
    %c0_26 = arith.constant 0 : index
    %c0_27 = arith.constant 0 : index
    %65 = vector.load %arg7[%c0_26, %c0_27] : memref<1x1xf32, #tpu.memory_space<vmem>>, vector<1x1xf32>
    tpu.vector_store %arg7[%c0_26, %c0_27], %64 {strides = array<i32>} : memref<1x1xf32, #tpu.memory_space<vmem>>, vector<1x1xf32>,
    return
  }
}

</mosaic_0001>

<llo_original>
// kernel: mpt_forward.5
$region0: #{mpt_forward.5}
  #allocation0 [shape = 'u32[]', space=smem, size = 0x4, offset = 0x4, fixed_abs, tag = 'smem constant byte address 0x4 - core index']
  #allocation1 [shape = 'u32[144,128]{1,0:T(1,128)}', space=vmem, size = 0x12000, scoped, tag = 'internal scratch']
  %s0 = inlined_call_operand.vmem [shape: bf16[16,128], index: 0, kind: input, shape index: {}]
  %s1 = inlined_call_operand.vmem [shape: bf16[16,128], index: 1, kind: input, shape index: {}]
  %s2 = inlined_call_operand.vmem [shape: bf16[1,128], index: 2, kind: input, shape index: {}]
  %s3 = inlined_call_operand.vmem [shape: bf16[1,128], index: 3, kind: input, shape index: {}]
  %s4 = inlined_call_operand.vmem [shape: bf16[128,128], index: 4, kind: input, shape index: {}]
  %s5 = inlined_call_operand.vmem [shape: s32[16,1], index: 5, kind: input, shape index: {}]
  %s6 = inlined_call_operand.hbm [shape: bf16[16,128], index: 6, kind: output, shape index: {0}]
  %s7 = inlined_call_operand.hbm [shape: f32[1,1], index: 7, kind: output, shape index: {1}]
  %8 = xla_tuple %s6, %s7
  %s9 = sld [smem:[#allocation0]]
  $region42: #{mpt_forward.5} parent=0
    _
  %s11 = ssub.s32 1, %s9
  %s12 = scalar_select 0, %s11, %s9
  $region1: #{mpt_forward.5} parent=0
    #allocation2 [shape = 'u8[4096]{0}', space=vmem, size = 0x1000, scoped, tag = 'output window, operand 0, single buffered']
    #allocation3 [shape = 's32[1]{0}', space=sflag, size = 0x4, scoped, tag = 'scoped memory for mpt_forward.5']
    #allocation4 [shape = 'u8[512]{0}', space=vmem, size = 0x400, scoped, tag = 'output window, operand 1, single buffered']
    #allocation5 [shape = 's32[1]{0}', space=sflag, size = 0x4, scoped, tag = 'scoped memory for mpt_forward.5']
    %13 = vsyncpa [#allocation3], 0
    %14 = vsyncpa [#allocation5], 0
    // Predicated region
    $region2: #{mpt_forward.5} parent=1 // pred_check
      _
    $region3: #{mpt_forward.5} parent=1 // pred_check_branch
      %16 = sbr.rel (0) target = $region5
    $region4: #{mpt_forward.5} parent=1 // pred_region
      _
    $region5: #{mpt_forward.5} parent=1 // pred_fallthru
      _
    // Predicated region
    $region6: #{mpt_forward.5} parent=1 // pred_check
      _
    $region7: #{mpt_forward.5} parent=1 // pred_check_branch
      %18 = sbr.rel (0) target = $region9
    $region8: #{mpt_forward.5} parent=1 // pred_region
      _
    $region9: #{mpt_forward.5} parent=1 // pred_fallthru
      _
    // Predicated region
    $region10: #{mpt_forward.5} parent=1 // pred_check
      _
    $region11: #{mpt_forward.5} parent=1 // pred_check_branch
      %20 = sbr.rel (0) target = $region13
    $region12: #{mpt_forward.5} parent=1 // pred_region
      _
    $region13: #{mpt_forward.5} parent=1 // pred_fallthru
      _
    // Predicated region
    $region14: #{mpt_forward.5} parent=1 // pred_check
      _
    $region15: #{mpt_forward.5} parent=1 // pred_check_branch
      %22 = sbr.rel (0) target = $region17
    $region16: #{mpt_forward.5} parent=1 // pred_region
      _
    $region17: #{mpt_forward.5} parent=1 // pred_fallthru
      _
    // Predicated region
    $region18: #{mpt_forward.5} parent=1 // pred_check
      _
    $region19: #{mpt_forward.5} parent=1 // pred_check_branch
      %24 = sbr.rel (0) target = $region21
    $region20: #{mpt_forward.5} parent=1 // pred_region
      _
    $region21: #{mpt_forward.5} parent=1 // pred_fallthru
      _
    // Predicated region
    $region22: #{mpt_forward.5} parent=1 // pred_check
      _
    $region23: #{mpt_forward.5} parent=1 // pred_check_branch
      %26 = sbr.rel (0) target = $region25
    $region24: #{mpt_forward.5} parent=1 // pred_region
      _
    $region25: #{mpt_forward.5} parent=1 // pred_fallthru
      _
    %v28 = vld [vmem:[%s0] sm:$0xf]
    %v29 = vld [vmem:[%s0 + $0x4] sm:$0xf]
    %v30 = vunpack.c.l.bf16 %v28
    %v31 = vunpack.c.l.bf16 %v29
    %v32 = vld [vmem:[%s1] sm:$0xf]
    %v33 = vld [vmem:[%s1 + $0x4] sm:$0xf]
    %v34 = vunpack.c.l.bf16 %v32
    %v35 = vunpack.c.l.bf16 %v33
    %v36 = vadd.f32 %v30, %v34
    %v37 = vadd.f32 %v31, %v35
    %v38 = vlaneseq
    %v39 = vand.u32 %v38, 127
    %vm40 = vcmp.lt.s32.totalorder %v39, 32
    %41 = vadd.xlane.f32.xlu0 %v36
    %v42 = vpop.xlane.xlu0 %41
    %43 = vadd.xlane.f32.xlu0 %v37
    %v44 = vpop.xlane.xlu0 %43
    %v45 = vrcp.pop 32.0
    %v46 = vmul.f32 %v42, %v45
    %v47 = vmul.f32 %v44, %v45
    %v48 = vsub.f32 %v36, %v46
    %v49 = vsub.f32 %v37, %v47
    %v50 = vmul.f32 %v48, %v48
    %v51 = vmul.f32 %v49, %v49
    %v52 = vsel %vm40, %v50, 0.0
    %v53 = vsel %vm40, %v51, 0.0
    %54 = vadd.xlane.f32.xlu0 %v52
    %v55 = vpop.xlane.xlu0 %54
    %56 = vadd.xlane.f32.xlu0 %v53
    %v57 = vpop.xlane.xlu0 %56
    %v58 = vmul.f32 %v55, %v45
    %v59 = vmul.f32 %v57, %v45
    %v60 = vadd.f32 %v58, 1e-05
    %v61 = vadd.f32 %v59, 1e-05
    %v62 = vrsqrt.pop %v60
    %v63 = vrsqrt.pop %v61
    %v64 = vmul.f32 %v48, %v62
    %v65 = vmul.f32 %v49, %v63
    %v66 = vld [vmem:[%s2] sm:$0x1]
    %v67 = vunpack.c.l.bf16 %v66
    %v68 = vlaneseq
    %v69 = vshrl.u32 %v68, 7
    %v70 = vsub.s32 0, %v69
    %v71 = vrot.slane %v67, %v70
    %v72 = vmul.f32 %v64, %v71
    %v73 = vmul.f32 %v65, %v71
    %v74 = vld [vmem:[%s3] sm:$0x1]
    %v75 = vunpack.c.l.bf16 %v74
    %v76 = vlaneseq
    %v77 = vshrl.u32 %v76, 7
    %v78 = vsub.s32 0, %v77
    %v79 = vrot.slane %v75, %v78
    %v80 = vadd.f32 %v72, %v79
    %v81 = vadd.f32 %v73, %v79
    %v82 = vpack.c.bf16 %v81, %v80
    %v83 = vld [vmem:[%s4] sm:$0xf]
    %v84 = vld [vmem:[%s4 + $0x4] sm:$0xf]
    %v85 = vld [vmem:[%s4 + $0x8] sm:$0xf]
    %v86 = vld [vmem:[%s4 + $0xc] sm:$0xf]
    %v87 = vld [vmem:[%s4 + $0x10] sm:$0xf]
    %v88 = vld [vmem:[%s4 + $0x14] sm:$0xf]
    %v89 = vld [vmem:[%s4 + $0x18] sm:$0xf]
    %v90 = vld [vmem:[%s4 + $0x1c] sm:$0xf]
    %v91 = vld [vmem:[%s4 + $0x20] sm:$0xf]
    %v92 = vld [vmem:[%s4 + $0x24] sm:$0xf]
    %v93 = vld [vmem:[%s4 + $0x28] sm:$0xf]
    %v94 = vld [vmem:[%s4 + $0x2c] sm:$0xf]
    %v95 = vld [vmem:[%s4 + $0x30] sm:$0xf]
    %v96 = vld [vmem:[%s4 + $0x34] sm:$0xf]
    %v97 = vld [vmem:[%s4 + $0x38] sm:$0xf]
    %v98 = vld [vmem:[%s4 + $0x3c] sm:$0xf]
    %v115 = vunpack.c.l.b16 %v83
    %v116 = vunpack.c.l.b16 %v84
    %v117 = vunpack.c.l.b16 %v85
    %v118 = vunpack.c.l.b16 %v86
    %v119 = vunpack.c.l.b16 %v87
    %v120 = vunpack.c.l.b16 %v88
    %v121 = vunpack.c.l.b16 %v89
    %v122 = vunpack.c.l.b16 %v90
    %v123 = vunpack.c.l.b16 %v91
    %v124 = vunpack.c.l.b16 %v92
    %v125 = vunpack.c.l.b16 %v93
    %v126 = vunpack.c.l.b16 %v94
    %v127 = vunpack.c.l.b16 %v95
    %v128 = vunpack.c.l.b16 %v96
    %v129 = vunpack.c.l.b16 %v97
    %v130 = vunpack.c.l.b16 %v98
    %v131 = vpack.c.b16 %v116, %v115
    %v132 = vpack.c.b16 %v118, %v117
    %v133 = vpack.c.b16 %v120, %v119
    %v134 = vpack.c.b16 %v122, %v121
    %v135 = vpack.c.b16 %v124, %v123
    %v136 = vpack.c.b16 %v126, %v125
    %v137 = vpack.c.b16 %v128, %v127
    %v138 = vpack.c.b16 %v130, %v129
    %147 = vmatprep.subr.bf16.mxu0 0
    %148 = vmatpush1.bf16.msra.mxu0 %v131
    %149 = vmatprep.subr.bf16.mxu0 0
    %150 = vmatpush1.bf16.msra.mxu0 %v132
    %151 = vmatprep.subr.bf16.mxu0 0
    %152 = vmatpush1.bf16.msra.mxu0 %v133
    %153 = vmatprep.subr.bf16.mxu0 0
    %154 = vmatpush1.bf16.msra.mxu0 %v134
    %155 = vmatprep.subr.bf16.mxu0 0
    %156 = vmatpush1.bf16.msra.mxu0 %v135
    %157 = vmatprep.subr.bf16.mxu0 0
    %158 = vmatpush1.bf16.msra.mxu0 %v136
    %159 = vmatprep.subr.bf16.mxu0 0
    %160 = vmatpush1.bf16.msra.mxu0 %v137
    %161 = vmatprep.subr.bf16.mxu0 0
    %162 = vmatpush1.bf16.msra.mxu0 %v138
    %163 = vmatprep.subr.bf16.mxu0 0
    %164 = vmatpush1.bf16.msra.mxu0 0
    %165 = vmatprep.subr.bf16.mxu0 0
    %166 = vmatpush1.bf16.msra.mxu0 0
    %167 = vmatprep.subr.bf16.mxu0 0
    %168 = vmatpush1.bf16.msra.mxu0 0
    %169 = vmatprep.subr.bf16.mxu0 0
    %170 = vmatpush1.bf16.msra.mxu0 0
    %171 = vmatprep.subr.bf16.mxu0 0
    %172 = vmatpush1.bf16.msra.mxu0 0
    %173 = vmatprep.subr.bf16.mxu0 0
    %174 = vmatpush1.bf16.msra.mxu0 0
    %175 = vmatprep.subr.bf16.mxu0 0
    %176 = vmatpush1.bf16.msra.mxu0 0
    %177 = vmatprep.subr.bf16.mxu0 0
    %178 = vmatpush1.bf16.msra.mxu0 0
    %179 = vmatprep.mubr.bf16.mxu0 0
    %180 = vmatmul.mubr.bf16.gmra.mrb[0].mxu0 %v82
    %v181 = vpop.f32.mrb[0].mxu0
    %v182 = vadd.f32 0.0, %v181
    %v183 = vpop.f32.mrb[0].mxu0
    %v184 = vpop.f32.mrb[0].mxu0
    %v185 = vadd.f32 0.0, %v184
    %v186 = vpop.f32.mrb[0].mxu0
    %187 = vdwg.mxu0
    %v188 = vpack.c.bf16 %v185, %v182
    %v190 = vunpack.c.l.b16 %v188
    %v191 = vunpack.c.h.b16 %v188
    %v192 = vpack.c.b16 %v190, %v190
    %v193 = vpack.c.b16 %v191, %v191
    %196 = vst [vmem:[#allocation2] sm:$0xf] %v192
    %197 = vst [vmem:[#allocation2 + $0x4] sm:$0xf] %v193
    %vm198 = vcmp.lt.s32.totalorder %v39, 65
    %v199 = vsel %vm198, %v182, -1e+30
    %v200 = vsel %vm198, %v185, -1e+30
    %201 = vmax.xlane.f32.xlu0 %v199
    %v202 = vpop.xlane.xlu0 %201
    %203 = vmax.xlane.f32.xlu0 %v200
    %v204 = vpop.xlane.xlu0 %203
    %v205 = vsub.f32 %v199, %v202
    %v206 = vsub.f32 %v200, %v204
    %v207 = vmul.f32 %v205, 1.442695
    %v208 = vpow.pop %v207
    %v209 = vmul.f32 %v206, 1.442695
    %v210 = vpow.pop %v209
    %211 = vadd.xlane.f32.xlu0 %v208
    %v212 = vpop.xlane.xlu0 %211
    %213 = vadd.xlane.f32.xlu0 %v210
    %v214 = vpop.xlane.xlu0 %213
    %v215 = vlog2.pop %v212
    %v216 = vmul.f32 %v215, 0.6931472
    %v217 = vlog2.pop %v214
    %v218 = vmul.f32 %v217, 0.6931472
    %v219 = vadd.f32 %v216, %v202
    %v220 = vadd.f32 %v218, %v204
    %v221 = vld [vmem:[%s5] sm:$0xff]
    %v222 = vld [vmem:[%s5 + $0x8] sm:$0xff]
    %223 = vset.pattern.permute.xlu0 0
    %224 = vperm.xlu0 %223, %v221
    %v225 = vpop.permute.xlu0 %224
    %226 = vset.pattern.permute.xlu0 0
    %227 = vperm.xlu0 %226, %v222
    %v228 = vpop.permute.xlu0 %227
    %vm229 = vcmp.eq.s32.totalorder %v39, %v225
    %vm230 = vcmp.eq.s32.totalorder %v39, %v228
    %v231 = vsel %vm229, %v182, 0.0
    %v232 = vsel %vm230, %v185, 0.0
    %233 = vadd.xlane.f32.xlu0 %v231
    %v234 = vpop.xlane.xlu0 %233
    %235 = vadd.xlane.f32.xlu0 %v232
    %v236 = vpop.xlane.xlu0 %235
    %v237 = vsub.f32 %v219, %v234
    %v238 = vsub.f32 %v220, %v236
    %v239 = vadd.f32 %v237, %v238
    %v240 = vrot.slane %v239, 4
    %v241 = vadd.f32 %v239, %v240
    %v242 = vrot.slane %v241, 2
    %v243 = vadd.f32 %v241, %v242
    %v244 = vrot.slane %v243, 1
    %v245 = vadd.f32 %v243, %v244
    %v246 = vrcp.pop 16.0
    %v247 = vmul.f32 %v245, %v246
    %vm248 = vcmask 0
    %249 = vst.msk [vmem:[#allocation4] sm:$0x1] %vm248, %v247
    // Predicated region
    $region26: #{mpt_forward.5} parent=1 // pred_check
      _
    $region27: #{mpt_forward.5} parent=1 // pred_check_branch
      %251 = sbr.rel (0) target = $region29
    $region28: #{mpt_forward.5} parent=1 // pred_region
      %s253 = ssub.s32 128, 128
      %254 = vsyncadd [#allocation3], %s253
      %s255 = sshll.u32 [#allocation2], 4
      %s256 = int_to_ptr.vmem [resolvable:$true] %s255
      %261 = dma.vmem_to_hbm [thread:$0]  %s256, 128, %s6, [#allocation3], 64, 64, 4
    $region29: #{mpt_forward.5} parent=1 // pred_fallthru
      _
    // Predicated region
    $region30: #{mpt_forward.5} parent=1 // pred_check
      _
    $region31: #{mpt_forward.5} parent=1 // pred_check_branch
      %263 = sbr.rel (0) target = $region33
    $region32: #{mpt_forward.5} parent=1 // pred_region
      %s265 = ssub.s32 16, 16
      %266 = vsyncadd [#allocation5], %s265
      %s268 = sshll.u32 [#allocation4], 4
      %s269 = int_to_ptr.vmem [resolvable:$true] %s268
      %271 = dma.vmem_to_hbm [thread:$0]  %s269, 16, %s7, [#allocation5]
    $region33: #{mpt_forward.5} parent=1 // pred_fallthru
      _
    // Predicated region
    $region34: #{mpt_forward.5} parent=1 // pred_check
      _
    $region35: #{mpt_forward.5} parent=1 // pred_check_branch
      %273 = sbr.rel (0) target = $region37
    $region36: #{mpt_forward.5} parent=1 // pred_region
      %274 = dma.done [#allocation3], 128
    $region37: #{mpt_forward.5} parent=1 // pred_fallthru
      _
    // Predicated region
    $region38: #{mpt_forward.5} parent=1 // pred_check
      _
    $region39: #{mpt_forward.5} parent=1 // pred_check_branch
      %276 = sbr.rel (0) target = $region41
    $region40: #{mpt_forward.5} parent=1 // pred_region
      %277 = dma.done [#allocation5], 16
    $region41: #{mpt_forward.5} parent=1 // pred_fallthru
      _
    %278 = vsyncpa [#allocation3], 1
    %279 = vsyncpa [#allocation5], 1

// kernel: mpt_forward.3
$region0: #{mpt_forward.3}
  #allocation0 [shape = 'u32[]', space=smem, size = 0x4, offset = 0x4, fixed_abs, tag = 'smem constant byte address 0x4 - core index']
  #allocation1 [shape = 'u32[144,128]{1,0:T(1,128)}', space=vmem, size = 0x12000, scoped, tag = 'internal scratch']
  #allocation2 [shape = 'f32[8,64]{1,0:T(8,128)}', space=vmem, size = 0x1000, scoped, tag = 'scratch operand']
  %s0 = inlined_call_operand.vmem [shape: bf16[16,128], index: 0, kind: input, shape index: {}]
  %s1 = inlined_call_operand.vmem [shape: bf16[16,128], index: 1, kind: input, shape index: {}]
  %s2 = inlined_call_operand.vmem [shape: bf16[1,128], index: 2, kind: input, shape index: {}]
  %s3 = inlined_call_operand.vmem [shape: bf16[1,128], index: 3, kind: input, shape index: {}]
  %s4 = inlined_call_operand.hbm [shape: bf16[128,256], index: 4, kind: input, shape index: {}]
  %s5 = inlined_call_operand.vmem [shape: bf16[4,128], index: 5, kind: input, shape index: {}]
  %s6 = inlined_call_operand.vmem [shape: bf16[1,128], index: 6, kind: input, shape index: {}]
  %s7 = inlined_call_operand.vmem [shape: f32[4,4], index: 7, kind: input, shape index: {}]
  %s8 = inlined_call_operand.vmem [shape: bf16[1,64], index: 8, kind: input, shape index: {}]
  %s9 = inlined_call_operand.vmem [shape: bf16[64,128], index: 9, kind: input, shape index: {}]
  %s10 = inlined_call_operand.vmem [shape: bf16[16,128], index: 10, kind: output, shape index: {0}]
  %s11 = inlined_call_operand.vmem [shape: bf16[16,128], index: 11, kind: output, shape index: {1}]
  %12 = xla_tuple %s10, %s11
  %s13 = sld [smem:[#allocation0]]
  $region85: #{mpt_forward.3} parent=0
    _
  %s15 = ssub.s32 1, %s13
  %s16 = scalar_select 0, %s15, %s13
  $region1: #{mpt_forward.3} parent=0
    #allocation3 [shape = 'u8[65536]{0}', space=vmem, size = 0x10000, scoped, tag = 'input window, operand 4, single buffered']
    #allocation4 [shape = 's32[2]{0}', space=sflag, size = 0x8, scoped, tag = 'scoped memory for mpt_forward.3']
    %17 = vsyncpa [#allocation4], 0
    loop: start=0, step=1, limit=4
    $region2: #{mpt_forward.3} parent=1 // loop_pre_header
      _
    $region3: #{mpt_forward.3} parent=1 // loop_header
      %s19 = sphi 0, %s23
      %p20 = scmp.ge.s32.totalorder %s19, 4
      %s29 = sphi 0, %s31
      %s32 = sphi 0, %s29
      %s33 = sphi 0, %s32
      %s49 = sphi 0, %s33
      %s55 = sphi 0, %s57
      %s58 = sphi 0, %s55
      %s59 = sphi 0, %s58
      %s75 = sphi 0, %s59
      %s79 = sphi 0, %s79
      %s81 = sphi 0, %s79
      %s82 = sphi 0, %s81
      %s96 = sphi 0, %s82
      %s100 = sphi 0, %s100
      %s102 = sphi 0, %s100
      %s103 = sphi 0, %s102
      %s117 = sphi 0, %s103
      %s121 = sphi 0, %s121
      %s123 = sphi 0, %s121
      %s124 = sphi 0, %s123
      %s138 = sphi 0, %s124
      %s142 = sphi 0, %s142
      %s144 = sphi 0, %s142
      %s145 = sphi 0, %s144
      %s159 = sphi 0, %s145
      %s163 = sphi 0, %s163
      %s165 = sphi 0, %s163
      %s166 = sphi 0, %s165
      %s180 = sphi 0, %s166
      %s184 = sphi 0, %s184
      %s186 = sphi 0, %s184
      %s187 = sphi 0, %s186
      %s201 = sphi 0, %s187
      %s205 = sphi 0, %s205
      %s207 = sphi 0, %s205
      %s208 = sphi 0, %s207
      %s222 = sphi 0, %s208
      %s226 = sphi 0, %s226
      %s228 = sphi 0, %s226
      %s229 = sphi 0, %s228
      %s243 = sphi 0, %s229
      %s249 = sphi 0, %s251
      %s252 = sphi 0, %s249
      %s253 = sphi 0, %s252
      %s269 = sphi 0, %s253
      %s275 = sphi 0, %s277
      %s278 = sphi 0, %s275
      %s279 = sphi 0, %s278
      %s295 = sphi 0, %s279
    $region4: #{mpt_forward.3} parent=1 // loop_header_branch
      %22 = sbr.rel (%p20) target = $region8
    $region5: #{mpt_forward.3} parent=1 // loop_body
      %s24 = ssub.s32 %s19, 1
      %s25 = ssub.s32 %s19, 2
      %s26 = sadd.s32 %s19, 1
      %s27 = ssub.s32 %s19, %s26
      %p28 = scmp.eq.s32.totalorder %s27, 0
      %s30 = sadd.s32 %s29, 1
      %s31 = scalar_select %p28, %s29, %s30
      %p34 = pneg %p28
      %p35 = scmp.eq.s32.totalorder %s19, 1
      %p36 = por %p34, %p35
      %p37 = scmp.ne.s32.totalorder %s29, %s32
      %p38 = scmp.eq.s32.totalorder %s19, 0
      %p39 = por %p37, %p38
      %p40 = scmp.ne.s32.totalorder %s29, %s32
      %p41 = scmp.eq.s32.totalorder %s24, 1
      %p42 = por %p40, %p41
      %p43 = scmp.ne.s32.totalorder %s32, %s33
      %p44 = scmp.eq.s32.totalorder %s24, 0
      %p45 = por %p43, %p44
      %p46 = scmp.ne.s32.totalorder %s32, %s33
      %p47 = scmp.eq.s32.totalorder %s25, 1
      %p48 = por %p46, %p47
      %p50 = scmp.ne.s32.totalorder %s33, %s49
      %p51 = scmp.eq.s32.totalorder %s25, 0
      %p52 = por %p50, %p51
      %s53 = ssub.s32 %s19, %s26
      %p54 = scmp.eq.s32.totalorder %s53, 0
      %s56 = sadd.s32 %s55, 1
      %s57 = scalar_select %p54, %s55, %s56
      %p60 = pneg %p54
      %p61 = scmp.eq.s32.totalorder %s19, 1
      %p62 = por %p60, %p61
      %p63 = scmp.ne.s32.totalorder %s55, %s58
      %p64 = scmp.eq.s32.totalorder %s19, 0
      %p65 = por %p63, %p64
      %p66 = scmp.ne.s32.totalorder %s55, %s58
      %p67 = scmp.eq.s32.totalorder %s24, 1
      %p68 = por %p66, %p67
      %p69 = scmp.ne.s32.totalorder %s58, %s59
      %p70 = scmp.eq.s32.totalorder %s24, 0
      %p71 = por %p69, %p70
      %p72 = scmp.ne.s32.totalorder %s58, %s59
      %p73 = scmp.eq.s32.totalorder %s25, 1
      %p74 = por %p72, %p73
      %p76 = scmp.ne.s32.totalorder %s59, %s75
      %p77 = scmp.eq.s32.totalorder %s25, 0
      %p78 = por %p76, %p77
      %s80 = sadd.s32 %s79, 1
      %p83 = scmp.eq.s32.totalorder %s19, 1
      %p84 = scmp.ne.s32.totalorder %s79, %s81
      %p85 = scmp.eq.s32.totalorder %s19, 0
      %p86 = por %p84, %p85
      %p87 = scmp.ne.s32.totalorder %s79, %s81
      %p88 = scmp.eq.s32.totalorder %s24, 1
      %p89 = por %p87, %p88
      %p90 = scmp.ne.s32.totalorder %s81, %s82
      %p91 = scmp.eq.s32.totalorder %s24, 0
      %p92 = por %p90, %p91
      %p93 = scmp.ne.s32.totalorder %s81, %s82
      %p94 = scmp.eq.s32.totalorder %s25, 1
      %p95 = por %p93, %p94
      %p97 = scmp.ne.s32.totalorder %s82, %s96
      %p98 = scmp.eq.s32.totalorder %s25, 0
      %p99 = por %p97, %p98
      %s101 = sadd.s32 %s100, 1
      %p104 = scmp.eq.s32.totalorder %s19, 1
      %p105 = scmp.ne.s32.totalorder %s100, %s102
      %p106 = scmp.eq.s32.totalorder %s19, 0
      %p107 = por %p105, %p106
      %p108 = scmp.ne.s32.totalorder %s100, %s102
      %p109 = scmp.eq.s32.totalorder %s24, 1
      %p110 = por %p108, %p109
      %p111 = scmp.ne.s32.totalorder %s102, %s103
      %p112 = scmp.eq.s32.totalorder %s24, 0
      %p113 = por %p111, %p112
      %p114 = scmp.ne.s32.totalorder %s102, %s103
      %p115 = scmp.eq.s32.totalorder %s25, 1
      %p116 = por %p114, %p115
      %p118 = scmp.ne.s32.totalorder %s103, %s117
      %p119 = scmp.eq.s32.totalorder %s25, 0
      %p120 = por %p118, %p119
      %s122 = sadd.s32 %s121, 1
      %p125 = scmp.eq.s32.totalorder %s19, 1
      %p126 = scmp.ne.s32.totalorder %s121, %s123
      %p127 = scmp.eq.s32.totalorder %s19, 0
      %p128 = por %p126, %p127
      %p129 = scmp.ne.s32.totalorder %s121, %s123
      %p130 = scmp.eq.s32.totalorder %s24, 1
      %p131 = por %p129, %p130
      %p132 = scmp.ne.s32.totalorder %s123, %s124
      %p133 = scmp.eq.s32.totalorder %s24, 0
      %p134 = por %p132, %p133
      %p135 = scmp.ne.s32.totalorder %s123, %s124
      %p136 = scmp.eq.s32.totalorder %s25, 1
      %p137 = por %p135, %p136
      %p139 = scmp.ne.s32.totalorder %s124, %s138
      %p140 = scmp.eq.s32.totalorder %s25, 0
      %p141 = por %p139, %p140
      %s143 = sadd.s32 %s142, 1
      %p146 = scmp.eq.s32.totalorder %s19, 1
      %p147 = scmp.ne.s32.totalorder %s142, %s144
      %p148 = scmp.eq.s32.totalorder %s19, 0
      %p149 = por %p147, %p148
      %p150 = scmp.ne.s32.totalorder %s142, %s144
      %p151 = scmp.eq.s32.totalorder %s24, 1
      %p152 = por %p150, %p151
      %p153 = scmp.ne.s32.totalorder %s144, %s145
      %p154 = scmp.eq.s32.totalorder %s24, 0
      %p155 = por %p153, %p154
      %p156 = scmp.ne.s32.totalorder %s144, %s145
      %p157 = scmp.eq.s32.totalorder %s25, 1
      %p158 = por %p156, %p157
      %p160 = scmp.ne.s32.totalorder %s145, %s159
      %p161 = scmp.eq.s32.totalorder %s25, 0
      %p162 = por %p160, %p161
      %s164 = sadd.s32 %s163, 1
      %p167 = scmp.eq.s32.totalorder %s19, 1
      %p168 = scmp.ne.s32.totalorder %s163, %s165
      %p169 = scmp.eq.s32.totalorder %s19, 0
      %p170 = por %p168, %p169
      %p171 = scmp.ne.s32.totalorder %s163, %s165
      %p172 = scmp.eq.s32.totalorder %s24, 1
      %p173 = por %p171, %p172
      %p174 = scmp.ne.s32.totalorder %s165, %s166
      %p175 = scmp.eq.s32.totalorder %s24, 0
      %p176 = por %p174, %p175
      %p177 = scmp.ne.s32.totalorder %s165, %s166
      %p178 = scmp.eq.s32.totalorder %s25, 1
      %p179 = por %p177, %p178
      %p181 = scmp.ne.s32.totalorder %s166, %s180
      %p182 = scmp.eq.s32.totalorder %s25, 0
      %p183 = por %p181, %p182
      %s185 = sadd.s32 %s184, 1
      %p188 = scmp.eq.s32.totalorder %s19, 1
      %p189 = scmp.ne.s32.totalorder %s184, %s186
      %p190 = scmp.eq.s32.totalorder %s19, 0
      %p191 = por %p189, %p190
      %p192 = scmp.ne.s32.totalorder %s184, %s186
      %p193 = scmp.eq.s32.totalorder %s24, 1
      %p194 = por %p192, %p193
      %p195 = scmp.ne.s32.totalorder %s186, %s187
      %p196 = scmp.eq.s32.totalorder %s24, 0
      %p197 = por %p195, %p196
      %p198 = scmp.ne.s32.totalorder %s186, %s187
      %p199 = scmp.eq.s32.totalorder %s25, 1
      %p200 = por %p198, %p199
      %p202 = scmp.ne.s32.totalorder %s187, %s201
      %p203 = scmp.eq.s32.totalorder %s25, 0
      %p204 = por %p202, %p203
      %s206 = sadd.s32 %s205, 1
      %p209 = scmp.eq.s32.totalorder %s19, 1
      %p210 = scmp.ne.s32.totalorder %s205, %s207
      %p211 = scmp.eq.s32.totalorder %s19, 0
      %p212 = por %p210, %p211
      %p213 = scmp.ne.s32.totalorder %s205, %s207
      %p214 = scmp.eq.s32.totalorder %s24, 1
      %p215 = por %p213, %p214
      %p216 = scmp.ne.s32.totalorder %s207, %s208
      %p217 = scmp.eq.s32.totalorder %s24, 0
      %p218 = por %p216, %p217
      %p219 = scmp.ne.s32.totalorder %s207, %s208
      %p220 = scmp.eq.s32.totalorder %s25, 1
      %p221 = por %p219, %p220
      %p223 = scmp.ne.s32.totalorder %s208, %s222
      %p224 = scmp.eq.s32.totalorder %s25, 0
      %p225 = por %p223, %p224
      %s227 = sadd.s32 %s226, 1
      %p230 = scmp.eq.s32.totalorder %s19, 1
      %p231 = scmp.ne.s32.totalorder %s226, %s228
      %p232 = scmp.eq.s32.totalorder %s19, 0
      %p233 = por %p231, %p232
      %p234 = scmp.ne.s32.totalorder %s226, %s228
      %p235 = scmp.eq.s32.totalorder %s24, 1
      %p236 = por %p234, %p235
      %p237 = scmp.ne.s32.totalorder %s228, %s229
      %p238 = scmp.eq.s32.totalorder %s24, 0
      %p239 = por %p237, %p238
      %p240 = scmp.ne.s32.totalorder %s228, %s229
      %p241 = scmp.eq.s32.totalorder %s25, 1
      %p242 = por %p240, %p241
      %p244 = scmp.ne.s32.totalorder %s229, %s243
      %p245 = scmp.eq.s32.totalorder %s25, 0
      %p246 = por %p244, %p245
      %s247 = ssub.s32 %s19, %s26
      %p248 = scmp.eq.s32.totalorder %s247, 0
      %s250 = sadd.s32 %s249, 1
      %s251 = scalar_select %p248, %s249, %s250
      %p254 = pneg %p248
      %p255 = scmp.eq.s32.totalorder %s19, 1
      %p256 = por %p254, %p255
      %p257 = scmp.ne.s32.totalorder %s249, %s252
      %p258 = scmp.eq.s32.totalorder %s19, 0
      %p259 = por %p257, %p258
      %p260 = scmp.ne.s32.totalorder %s249, %s252
      %p261 = scmp.eq.s32.totalorder %s24, 1
      %p262 = por %p260, %p261
      %p263 = scmp.ne.s32.totalorder %s252, %s253
      %p264 = scmp.eq.s32.totalorder %s24, 0
      %p265 = por %p263, %p264
      %p266 = scmp.ne.s32.totalorder %s252, %s253
      %p267 = scmp.eq.s32.totalorder %s25, 1
      %p268 = por %p266, %p267
      %p270 = scmp.ne.s32.totalorder %s253, %s269
      %p271 = scmp.eq.s32.totalorder %s25, 0
      %p272 = por %p270, %p271
      %s273 = ssub.s32 %s19, %s26
      %p274 = scmp.eq.s32.totalorder %s273, 0
      %s276 = sadd.s32 %s275, 1
      %s277 = scalar_select %p274, %s275, %s276
      %p280 = pneg %p274
      %p281 = scmp.eq.s32.totalorder %s19, 1
      %p282 = por %p280, %p281
      %p283 = scmp.ne.s32.totalorder %s275, %s278
      %p284 = scmp.eq.s32.totalorder %s19, 0
      %p285 = por %p283, %p284
      %p286 = scmp.ne.s32.totalorder %s275, %s278
      %p287 = scmp.eq.s32.totalorder %s24, 1
      %p288 = por %p286, %p287
      %p289 = scmp.ne.s32.totalorder %s278, %s279
      %p290 = scmp.eq.s32.totalorder %s24, 0
      %p291 = por %p289, %p290
      %p292 = scmp.ne.s32.totalorder %s278, %s279
      %p293 = scmp.eq.s32.totalorder %s25, 1
      %p294 = por %p292, %p293
      %p296 = scmp.ne.s32.totalorder %s279, %s295
      %p297 = scmp.eq.s32.totalorder %s25, 0
      %p298 = por %p296, %p297
      %p299 = scmp.le.s32.totalorder 1, %s19
      %p300 = scmp.lt.s32.totalorder %s19, 3
      %p301 = pnand %p299, %p300
      %p302 = pneg %p301
      // Predicated region
      $region9: #{mpt_forward.3} parent=5 // pred_check
        _
      $region10: #{mpt_forward.3} parent=5 // pred_check_branch
        %304 = sbr.rel (%p301) target = $region12
      $region11: #{mpt_forward.3} parent=5 // pred_region
        %s305 = ssub.s32 %s19, 1
        // Predicated region
        $region13: #{mpt_forward.3} parent=11 // pred_check
          %p306 = pneg %p92
        $region14: #{mpt_forward.3} parent=11 // pred_check_branch
          %308 = sbr.rel (%p306) target = $region16
        $region15: #{mpt_forward.3} parent=11 // pred_region
          _
        $region16: #{mpt_forward.3} parent=11 // pred_fallthru
          _
        // Predicated region
        $region17: #{mpt_forward.3} parent=11 // pred_check
          %p309 = pneg %p113
        $region18: #{mpt_forward.3} parent=11 // pred_check_branch
          %311 = sbr.rel (%p309) target = $region20
        $region19: #{mpt_forward.3} parent=11 // pred_region
          _
        $region20: #{mpt_forward.3} parent=11 // pred_fallthru
          _
        // Predicated region
        $region21: #{mpt_forward.3} parent=11 // pred_check
          %p312 = pneg %p134
        $region22: #{mpt_forward.3} parent=11 // pred_check_branch
          %314 = sbr.rel (%p312) target = $region24
        $region23: #{mpt_forward.3} parent=11 // pred_region
          %s316 = ssub.s32 2048, 2048
          %317 = vsyncadd [#allocation4], %s316
          %s318 = sshll.u32 [#allocation3], 4
          %s319 = int_to_ptr.vmem [resolvable:$true] %s318
          %324 = dma.hbm_to_vmem [thread:$0]  %s4, 2048, %s319, [#allocation4], 128, 128, 8
        $region24: #{mpt_forward.3} parent=11 // pred_fallthru
          _
        // Predicated region
        $region25: #{mpt_forward.3} parent=11 // pred_check
          %p325 = pneg %p155
        $region26: #{mpt_forward.3} parent=11 // pred_check_branch
          %327 = sbr.rel (%p325) target = $region28
        $region27: #{mpt_forward.3} parent=11 // pred_region
          _
        $region28: #{mpt_forward.3} parent=11 // pred_fallthru
          _
        // Predicated region
        $region29: #{mpt_forward.3} parent=11 // pred_check
          %p328 = pneg %p176
        $region30: #{mpt_forward.3} parent=11 // pred_check_branch
          %330 = sbr.rel (%p328) target = $region32
        $region31: #{mpt_forward.3} parent=11 // pred_region
          _
        $region32: #{mpt_forward.3} parent=11 // pred_fallthru
          _
        // Predicated region
        $region33: #{mpt_forward.3} parent=11 // pred_check
          %p331 = pneg %p197
        $region34: #{mpt_forward.3} parent=11 // pred_check_branch
          %333 = sbr.rel (%p331) target = $region36
        $region35: #{mpt_forward.3} parent=11 // pred_region
          _
        $region36: #{mpt_forward.3} parent=11 // pred_fallthru
          _
        // Predicated region
        $region37: #{mpt_forward.3} parent=11 // pred_check
          %p334 = pneg %p218
        $region38: #{mpt_forward.3} parent=11 // pred_check_branch
          %336 = sbr.rel (%p334) target = $region40
        $region39: #{mpt_forward.3} parent=11 // pred_region
          _
        $region40: #{mpt_forward.3} parent=11 // pred_fallthru
          _
        // Predicated region
        $region41: #{mpt_forward.3} parent=11 // pred_check
          %p337 = pneg %p239
        $region42: #{mpt_forward.3} parent=11 // pred_check_branch
          %339 = sbr.rel (%p337) target = $region44
        $region43: #{mpt_forward.3} parent=11 // pred_region
          _
        $region44: #{mpt_forward.3} parent=11 // pred_fallthru
          _
      $region12: #{mpt_forward.3} parent=5 // pred_fallthru
        _
      %p340 = scmp.lt.s32.totalorder %s19, 2
      // Predicated region
      $region45: #{mpt_forward.3} parent=5 // pred_check
        %p341 = pneg %p340
      $region46: #{mpt_forward.3} parent=5 // pred_check_branch
        %343 = sbr.rel (%p341) target = $region48
      $region47: #{mpt_forward.3} parent=5 // pred_region
        // Predicated region
        $region49: #{mpt_forward.3} parent=47 // pred_check
          %p344 = pneg %p39
        $region50: #{mpt_forward.3} parent=47 // pred_check_branch
          %346 = sbr.rel (%p344) target = $region52
        $region51: #{mpt_forward.3} parent=47 // pred_region
          %p347 = scmp.lt.s32.totalorder %s19, 1
          %s348 = scalar_select %p347, %s19, 1
          %s349 = smul.addr %s348, 4
          %s350 = scalar_lea.vmem %s0, %s349
        $region52: #{mpt_forward.3} parent=47 // pred_fallthru
          _
        // Predicated region
        $region53: #{mpt_forward.3} parent=47 // pred_check
          %p351 = pneg %p65
        $region54: #{mpt_forward.3} parent=47 // pred_check_branch
          %353 = sbr.rel (%p351) target = $region56
        $region55: #{mpt_forward.3} parent=47 // pred_region
          %p354 = scmp.lt.s32.totalorder %s19, 1
          %s355 = scalar_select %p354, %s19, 1
          %s356 = smul.addr %s355, 4
          %s357 = scalar_lea.vmem %s1, %s356
        $region56: #{mpt_forward.3} parent=47 // pred_fallthru
          _
      $region48: #{mpt_forward.3} parent=5 // pred_fallthru
        _
      %p358 = scmp.le.s32.totalorder 1, %s19
      %p359 = scmp.lt.s32.totalorder %s19, 3
      %p360 = pnand %p358, %p359
      %p361 = pneg %p360
      // Predicated region
      $region57: #{mpt_forward.3} parent=5 // pred_check
        _
      $region58: #{mpt_forward.3} parent=5 // pred_check_branch
        %363 = sbr.rel (%p360) target = $region60
      $region59: #{mpt_forward.3} parent=5 // pred_region
        %s364 = ssub.s32 %s19, 1
        // Predicated region
        $region61: #{mpt_forward.3} parent=59 // pred_check
          %p365 = pneg %p134
        $region62: #{mpt_forward.3} parent=59 // pred_check_branch
          %367 = sbr.rel (%p365) target = $region64
        $region63: #{mpt_forward.3} parent=59 // pred_region
          %368 = dma.done [#allocation4], 2048
        $region64: #{mpt_forward.3} parent=59 // pred_fallthru
          _
        %p369 = scmp.lt.s32.totalorder %s24, 1
        %s370 = scalar_select %p369, %s24, 1
        %s371 = smul.addr %s370, 4
        %s372 = scalar_lea.vmem %s0, %s371
        %p373 = pneg %p45
        %p374 = pneg %p42
        %p375 = scmp.lt.s32.totalorder %s24, 1
        %s376 = scalar_select %p375, %s24, 1
        %s377 = smul.addr %s376, 4
        %s378 = scalar_lea.vmem %s1, %s377
        %p379 = pneg %p71
        %p380 = pneg %p68
        %p381 = pneg %p92
        %p382 = pneg %p89
        %p383 = pneg %p113
        %p384 = pneg %p110
        %p385 = pneg %p134
        %p386 = pneg %p131
        %p387 = pneg %p155
        %p388 = pneg %p152
        %p389 = pneg %p176
        %p390 = pneg %p173
        %p391 = pneg %p197
        %p392 = pneg %p194
        %p393 = pneg %p218
        %p394 = pneg %p215
        %p395 = pneg %p239
        %p396 = pneg %p236
        %p397 = pneg %p265
        %p398 = pneg %p262
        %p399 = scmp.lt.s32.totalorder %s24, 1
        %s400 = scalar_select %p399, %s24, 1
        %s401 = smul.addr %s400, 4
        %s402 = scalar_lea.vmem %s10, %s401
        %p403 = pneg %p291
        %p404 = pneg %p288
        %p405 = scmp.lt.s32.totalorder %s24, 1
        %s406 = scalar_select %p405, %s24, 1
        %s407 = smul.addr %s406, 4
        %s408 = scalar_lea.vmem %s11, %s407
        %p409 = scmp.lt.s32.totalorder %s24, 1
        %s410 = scalar_select %p409, %s24, 1
        %s411 = smul.addr %s410, 4
        %s412 = scalar_lea.vmem %s0, %s411
        %p413 = scmp.lt.s32.totalorder %s24, 1
        %s414 = scalar_select %p413, %s24, 1
        %s415 = smul.addr %s414, 4
        %s416 = scalar_lea.vmem %s1, %s415
        %p417 = scmp.lt.s32.totalorder %s24, 1
        %s418 = scalar_select %p417, %s24, 1
        %s419 = smul.addr %s418, 4
        %s420 = scalar_lea.vmem %s10, %s419
        %p421 = scmp.lt.s32.totalorder %s24, 1
        %s422 = scalar_select %p421, %s24, 1
        %s423 = smul.addr %s422, 4
        %s424 = scalar_lea.vmem %s11, %s423
        %v426 = vld [vmem:[%s412] sm:$0xf]
        %v427 = vunpack.c.l.bf16 %v426
        %v428 = vld [vmem:[%s416] sm:$0xf]
        %v429 = vunpack.c.l.bf16 %v428
        %v430 = vadd.f32 %v427, %v429
        %v431 = vpack.c.bf16 %v430, %v430
        %432 = vst [vmem:[%s420] sm:$0xf] %v431
        %v433 = vlaneseq
        %v434 = vand.u32 %v433, 127
        %vm435 = vcmp.lt.s32.totalorder %v434, 32
        %436 = vadd.xlane.f32.xlu0 %v430
        %v437 = vpop.xlane.xlu0 %436
        %v438 = vrcp.pop 32.0
        %v439 = vmul.f32 %v437, %v438
        %v440 = vsub.f32 %v430, %v439
        %v441 = vmul.f32 %v440, %v440
        %v442 = vsel %vm435, %v441, 0.0
        %443 = vadd.xlane.f32.xlu0 %v442
        %v444 = vpop.xlane.xlu0 %443
        %v445 = vmul.f32 %v444, %v438
        %v446 = vadd.f32 %v445, 1e-05
        %v447 = vrsqrt.pop %v446
        %v448 = vmul.f32 %v440, %v447
        %v449 = vld [vmem:[%s2] sm:$0x1]
        %v450 = vunpack.c.l.bf16 %v449
        %v451 = vlaneseq
        %v452 = vshrl.u32 %v451, 7
        %v453 = vsub.s32 0, %v452
        %v454 = vrot.slane %v450, %v453
        %v455 = vmul.f32 %v448, %v454
        %v456 = vld [vmem:[%s3] sm:$0x1]
        %v457 = vunpack.c.l.bf16 %v456
        %v458 = vlaneseq
        %v459 = vshrl.u32 %v458, 7
        %v460 = vsub.s32 0, %v459
        %v461 = vrot.slane %v457, %v460
        %v462 = vadd.f32 %v455, %v461
        %v463 = vpack.c.bf16 %v462, %v462
        %v464 = vld [vmem:[#allocation3] sm:$0xff]
        %v465 = vld [vmem:[#allocation3 + $0x8] sm:$0xff]
        %v466 = vld [vmem:[#allocation3 + $0x10] sm:$0xff]
        %v467 = vld [vmem:[#allocation3 + $0x18] sm:$0xff]
        %v468 = vld [vmem:[#allocation3 + $0x20] sm:$0xff]
        %v469 = vld [vmem:[#allocation3 + $0x28] sm:$0xff]
        %v470 = vld [vmem:[#allocation3 + $0x30] sm:$0xff]
        %v471 = vld [vmem:[#allocation3 + $0x38] sm:$0xff]
        %v472 = vld [vmem:[#allocation3 + $0x40] sm:$0xff]
        %v473 = vld [vmem:[#allocation3 + $0x48] sm:$0xff]
        %v474 = vld [vmem:[#allocation3 + $0x50] sm:$0xff]
        %v475 = vld [vmem:[#allocation3 + $0x58] sm:$0xff]
        %v476 = vld [vmem:[#allocation3 + $0x60] sm:$0xff]
        %v477 = vld [vmem:[#allocation3 + $0x68] sm:$0xff]
        %v478 = vld [vmem:[#allocation3 + $0x70] sm:$0xff]
        %v479 = vld [vmem:[#allocation3 + $0x78] sm:$0xff]
        %v496 = vunpack.c.l.b16 %v464
        %v497 = vunpack.c.h.b16 %v464
        %v498 = vunpack.c.l.b16 %v465
        %v499 = vunpack.c.h.b16 %v465
        %v500 = vunpack.c.l.b16 %v466
        %v501 = vunpack.c.h.b16 %v466
        %v502 = vunpack.c.l.b16 %v467
        %v503 = vunpack.c.h.b16 %v467
        %v504 = vunpack.c.l.b16 %v468
        %v505 = vunpack.c.h.b16 %v468
        %v506 = vunpack.c.l.b16 %v469
        %v507 = vunpack.c.h.b16 %v469
        %v508 = vunpack.c.l.b16 %v470
        %v509 = vunpack.c.h.b16 %v470
        %v510 = vunpack.c.l.b16 %v471
        %v511 = vunpack.c.h.b16 %v471
        %v512 = vunpack.c.l.b16 %v472
        %v513 = vunpack.c.h.b16 %v472
        %v514 = vunpack.c.l.b16 %v473
        %v515 = vunpack.c.h.b16 %v473
        %v516 = vunpack.c.l.b16 %v474
        %v517 = vunpack.c.h.b16 %v474
        %v518 = vunpack.c.l.b16 %v475
        %v519 = vunpack.c.h.b16 %v475
        %v520 = vunpack.c.l.b16 %v476
        %v521 = vunpack.c.h.b16 %v476
        %v522 = vunpack.c.l.b16 %v477
        %v523 = vunpack.c.h.b16 %v477
        %v524 = vunpack.c.l.b16 %v478
        %v525 = vunpack.c.h.b16 %v478
        %v526 = vunpack.c.l.b16 %v479
        %v527 = vunpack.c.h.b16 %v479
        %v528 = vpack.c.b16 %v498, %v496
        %v529 = vpack.c.b16 %v499, %v497
        %v530 = vpack.c.b16 %v502, %v500
        %v531 = vpack.c.b16 %v503, %v501
        %v532 = vpack.c.b16 %v506, %v504
        %v533 = vpack.c.b16 %v507, %v505
        %v534 = vpack.c.b16 %v510, %v508
        %v535 = vpack.c.b16 %v511, %v509
        %v536 = vpack.c.b16 %v514, %v512
        %v537 = vpack.c.b16 %v515, %v513
        %v538 = vpack.c.b16 %v518, %v516
        %v539 = vpack.c.b16 %v519, %v517
        %v540 = vpack.c.b16 %v522, %v520
        %v541 = vpack.c.b16 %v523, %v521
        %v542 = vpack.c.b16 %v526, %v524
        %v543 = vpack.c.b16 %v527, %v525
        %560 = vmatprep.subr.bf16.mxu0 %v529
        %561 = vmatpush1.bf16.msra.mxu0 %v528
        %562 = vmatprep.subr.bf16.mxu0 %v531
        %563 = vmatpush1.bf16.msra.mxu0 %v530
        %564 = vmatprep.subr.bf16.mxu0 %v533
        %565 = vmatpush1.bf16.msra.mxu0 %v532
        %566 = vmatprep.subr.bf16.mxu0 %v535
        %567 = vmatpush1.bf16.msra.mxu0 %v534
        %568 = vmatprep.subr.bf16.mxu0 %v537
        %569 = vmatpush1.bf16.msra.mxu0 %v536
        %570 = vmatprep.subr.bf16.mxu0 %v539
        %571 = vmatpush1.bf16.msra.mxu0 %v538
        %572 = vmatprep.subr.bf16.mxu0 %v541
        %573 = vmatpush1.bf16.msra.mxu0 %v540
        %574 = vmatprep.subr.bf16.mxu0 %v543
        %575 = vmatpush1.bf16.msra.mxu0 %v542
        %576 = vmatprep.subr.bf16.mxu0 0
        %577 = vmatpush1.bf16.msra.mxu0 0
        %578 = vmatprep.subr.bf16.mxu0 0
        %579 = vmatpush1.bf16.msra.mxu0 0
        %580 = vmatprep.subr.bf16.mxu0 0
        %581 = vmatpush1.bf16.msra.mxu0 0
        %582 = vmatprep.subr.bf16.mxu0 0
        %583 = vmatpush1.bf16.msra.mxu0 0
        %584 = vmatprep.subr.bf16.mxu0 0
        %585 = vmatpush1.bf16.msra.mxu0 0
        %586 = vmatprep.subr.bf16.mxu0 0
        %587 = vmatpush1.bf16.msra.mxu0 0
        %588 = vmatprep.subr.bf16.mxu0 0
        %589 = vmatpush1.bf16.msra.mxu0 0
        %590 = vmatprep.subr.bf16.mxu0 0
        %591 = vmatpush1.bf16.msra.mxu0 0
        %592 = vmatprep.mubr.bf16.mxu0 0
        %593 = vmatmul.mubr.bf16.gmra.mrb[0].mxu0 %v463
        %v594 = vpop.f32.mrb[0].mxu0
        %v595 = vadd.f32 0.0, %v594
        %v596 = vpop.f32.mrb[0].mxu0
        %v597 = vadd.f32 0.0, %v596
        %v598 = vpop.f32.mrb[0].mxu0
        %v599 = vpop.f32.mrb[0].mxu0
        %600 = vdwg.mxu0
        %v601 = vlaneseq
        %v602 = vshrl.u32 %v601, 7
        %v603 = vld [vmem:[%s6] sm:$0x1]
        %v604 = vunpack.c.l.bf16 %v603
        %v605 = vlaneseq
        %v606 = vshrl.u32 %v605, 7
        %v607 = vsub.s32 0, %v606
        %v608 = vrot.slane %v604, %v607
        %v609 = vadd.f32 %v608, 0.0
        %v610 = vsub.s32 %v602, %v434
        %vm611 = vcmp.eq.s32.totalorder %v610, 3
        %v612 = vsel %vm611, 1, 0
        %v613 = vcvt.s32.f32 %v612
        %vm614 = vcmask 64512
        %v616 = vsel %vm614, %v613, 0
        %618 = vmatprep.subr.mxu0 0.0
        %619 = vmatpush1.msra.mxu0 %v595
        %620 = vmatprep.subr.mxu0 0.0
        %621 = vmatpush1.msra.mxu0 0.0
        %622 = vmatprep.subr.mxu0 0.0
        %623 = vmatpush1.msra.mxu0 0.0
        %624 = vmatprep.subr.mxu0 0.0
        %625 = vmatpush1.msra.mxu0 0.0
        %626 = vmatprep.subr.mxu0 0.0
        %627 = vmatpush1.msra.mxu0 0.0
        %628 = vmatprep.subr.mxu0 0.0
        %629 = vmatpush1.msra.mxu0 0.0
        %630 = vmatprep.subr.mxu0 0.0
        %631 = vmatpush1.msra.mxu0 0.0
        %632 = vmatprep.subr.mxu0 0.0
        %633 = vmatpush1.msra.mxu0 0.0
        %634 = vmatprep.subr.mxu0 0.0
        %635 = vmatpush1.msra.mxu0 0.0
        %636 = vmatprep.subr.mxu0 0.0
        %637 = vmatpush1.msra.mxu0 0.0
        %638 = vmatprep.subr.mxu0 0.0
        %639 = vmatpush1.msra.mxu0 0.0
        %640 = vmatprep.subr.mxu0 0.0
        %641 = vmatpush1.msra.mxu0 0.0
        %642 = vmatprep.subr.mxu0 0.0
        %643 = vmatpush1.msra.mxu0 0.0
        %644 = vmatprep.subr.mxu0 0.0
        %645 = vmatpush1.msra.mxu0 0.0
        %646 = vmatprep.subr.mxu0 0.0
        %647 = vmatpush1.msra.mxu0 0.0
        %648 = vmatprep.subr.mxu0 0.0
        %649 = vmatpush1.msra.mxu0 0.0
        %650 = vmatprep.subr.mxu0 0.0
        %651 = vmatpush1.msra.mxu0 0.0
        %652 = vmatprep.subr.mxu0 0.0
        %653 = vmatpush1.msra.mxu0 0.0
        %654 = vmatprep.subr.mxu0 0.0
        %655 = vmatpush1.msra.mxu0 0.0
        %656 = vmatprep.subr.mxu0 0.0
        %657 = vmatpush1.msra.mxu0 0.0
        %658 = vmatprep.subr.mxu0 0.0
        %659 = vmatpush1.msra.mxu0 0.0
        %660 = vmatprep.subr.mxu0 0.0
        %661 = vmatpush1.msra.mxu0 0.0
        %662 = vmatprep.subr.mxu0 0.0
        %663 = vmatpush1.msra.mxu0 0.0
        %664 = vmatprep.subr.mxu0 0.0
        %665 = vmatpush1.msra.mxu0 0.0
        %666 = vmatprep.subr.mxu0 0.0
        %667 = vmatpush1.msra.mxu0 0.0
        %668 = vmatprep.subr.mxu0 0.0
        %669 = vmatpush1.msra.mxu0 0.0
        %670 = vmatprep.subr.mxu0 0.0
        %671 = vmatpush1.msra.mxu0 0.0
        %672 = vmatprep.subr.mxu0 0.0
        %673 = vmatpush1.msra.mxu0 0.0
        %674 = vmatprep.subr.mxu0 0.0
        %675 = vmatpush1.msra.mxu0 0.0
        %676 = vmatprep.subr.mxu0 0.0
        %677 = vmatpush1.msra.mxu0 0.0
        %678 = vmatprep.subr.mxu0 0.0
        %679 = vmatpush1.msra.mxu0 0.0
        %680 = vmatprep.subr.mxu0 0.0
        %681 = vmatpush1.msra.mxu0 0.0
        %682 = vmatprep.mubr.f32.mxu0 0.0
        %683 = vmatmul.mubr.f32.gmra.mrb[0].mxu0 %v616
        %v684 = vpop.f32.mrb[0].mxu0
        %v685 = vadd.f32 0.0, %v684
        %v686 = vpop.f32.mrb[0].mxu0
        %687 = vdwg.mxu0
        %v688 = vld [vmem:[%s5] sm:$0x1]
        %v689 = vunpack.c.l.bf16 %v688
        %v690 = vlaneseq
        %v691 = vshrl.u32 %v690, 7
        %v692 = vsub.s32 0, %v691
        %v693 = vrot.slane %v689, %v692
        %v694 = vmul.f32 %v685, %v693
        %v695 = vadd.f32 %v609, %v694
        %vm696 = vcmp.eq.s32.totalorder %v610, 2
        %v697 = vsel %vm696, 1, 0
        %v698 = vcvt.s32.f32 %v697
        %v700 = vsel %vm614, %v698, 0
        %702 = vmatprep.subr.mxu0 0.0
        %703 = vmatpush1.msra.mxu0 %v595
        %704 = vmatprep.subr.mxu0 0.0
        %705 = vmatpush1.msra.mxu0 0.0
        %706 = vmatprep.subr.mxu0 0.0
        %707 = vmatpush1.msra.mxu0 0.0
        %708 = vmatprep.subr.mxu0 0.0
        %709 = vmatpush1.msra.mxu0 0.0
        %710 = vmatprep.subr.mxu0 0.0
        %711 = vmatpush1.msra.mxu0 0.0
        %712 = vmatprep.subr.mxu0 0.0
        %713 = vmatpush1.msra.mxu0 0.0
        %714 = vmatprep.subr.mxu0 0.0
        %715 = vmatpush1.msra.mxu0 0.0
        %716 = vmatprep.subr.mxu0 0.0
        %717 = vmatpush1.msra.mxu0 0.0
        %718 = vmatprep.subr.mxu0 0.0
        %719 = vmatpush1.msra.mxu0 0.0
        %720 = vmatprep.subr.mxu0 0.0
        %721 = vmatpush1.msra.mxu0 0.0
        %722 = vmatprep.subr.mxu0 0.0
        %723 = vmatpush1.msra.mxu0 0.0
        %724 = vmatprep.subr.mxu0 0.0
        %725 = vmatpush1.msra.mxu0 0.0
        %726 = vmatprep.subr.mxu0 0.0
        %727 = vmatpush1.msra.mxu0 0.0
        %728 = vmatprep.subr.mxu0 0.0
        %729 = vmatpush1.msra.mxu0 0.0
        %730 = vmatprep.subr.mxu0 0.0
        %731 = vmatpush1.msra.mxu0 0.0
        %732 = vmatprep.subr.mxu0 0.0
        %733 = vmatpush1.msra.mxu0 0.0
        %734 = vmatprep.subr.mxu0 0.0
        %735 = vmatpush1.msra.mxu0 0.0
        %736 = vmatprep.subr.mxu0 0.0
        %737 = vmatpush1.msra.mxu0 0.0
        %738 = vmatprep.subr.mxu0 0.0
        %739 = vmatpush1.msra.mxu0 0.0
        %740 = vmatprep.subr.mxu0 0.0
        %741 = vmatpush1.msra.mxu0 0.0
        %742 = vmatprep.subr.mxu0 0.0
        %743 = vmatpush1.msra.mxu0 0.0
        %744 = vmatprep.subr.mxu0 0.0
        %745 = vmatpush1.msra.mxu0 0.0
        %746 = vmatprep.subr.mxu0 0.0
        %747 = vmatpush1.msra.mxu0 0.0
        %748 = vmatprep.subr.mxu0 0.0
        %749 = vmatpush1.msra.mxu0 0.0
        %750 = vmatprep.subr.mxu0 0.0
        %751 = vmatpush1.msra.mxu0 0.0
        %752 = vmatprep.subr.mxu0 0.0
        %753 = vmatpush1.msra.mxu0 0.0
        %754 = vmatprep.subr.mxu0 0.0
        %755 = vmatpush1.msra.mxu0 0.0
        %756 = vmatprep.subr.mxu0 0.0
        %757 = vmatpush1.msra.mxu0 0.0
        %758 = vmatprep.subr.mxu0 0.0
        %759 = vmatpush1.msra.mxu0 0.0
        %760 = vmatprep.subr.mxu0 0.0
        %761 = vmatpush1.msra.mxu0 0.0
        %762 = vmatprep.subr.mxu0 0.0
        %763 = vmatpush1.msra.mxu0 0.0
        %764 = vmatprep.subr.mxu0 0.0
        %765 = vmatpush1.msra.mxu0 0.0
        %766 = vmatprep.mubr.f32.mxu0 0.0
        %767 = vmatmul.mubr.f32.gmra.mrb[0].mxu0 %v700
        %v768 = vpop.f32.mrb[0].mxu0
        %v769 = vadd.f32 0.0, %v768
        %v770 = vpop.f32.mrb[0].mxu0
        %771 = vdwg.mxu0
        %v772 = vlaneseq
        %v773 = vshrl.u32 %v772, 7
        %v774 = vsub.s32 1, %v773
        %v775 = vrot.slane %v689, %v774
        %v776 = vmul.f32 %v769, %v775
        %v777 = vadd.f32 %v695, %v776
        %vm778 = vcmp.eq.s32.totalorder %v610, 1
        %v779 = vsel %vm778, 1, 0
        %v780 = vcvt.s32.f32 %v779
        %v782 = vsel %vm614, %v780, 0
        %784 = vmatprep.subr.mxu0 0.0
        %785 = vmatpush1.msra.mxu0 %v595
        %786 = vmatprep.subr.mxu0 0.0
        %787 = vmatpush1.msra.mxu0 0.0
        %788 = vmatprep.subr.mxu0 0.0
        %789 = vmatpush1.msra.mxu0 0.0
        %790 = vmatprep.subr.mxu0 0.0
        %791 = vmatpush1.msra.mxu0 0.0
        %792 = vmatprep.subr.mxu0 0.0
        %793 = vmatpush1.msra.mxu0 0.0
        %794 = vmatprep.subr.mxu0 0.0
        %795 = vmatpush1.msra.mxu0 0.0
        %796 = vmatprep.subr.mxu0 0.0
        %797 = vmatpush1.msra.mxu0 0.0
        %798 = vmatprep.subr.mxu0 0.0
        %799 = vmatpush1.msra.mxu0 0.0
        %800 = vmatprep.subr.mxu0 0.0
        %801 = vmatpush1.msra.mxu0 0.0
        %802 = vmatprep.subr.mxu0 0.0
        %803 = vmatpush1.msra.mxu0 0.0
        %804 = vmatprep.subr.mxu0 0.0
        %805 = vmatpush1.msra.mxu0 0.0
        %806 = vmatprep.subr.mxu0 0.0
        %807 = vmatpush1.msra.mxu0 0.0
        %808 = vmatprep.subr.mxu0 0.0
        %809 = vmatpush1.msra.mxu0 0.0
        %810 = vmatprep.subr.mxu0 0.0
        %811 = vmatpush1.msra.mxu0 0.0
        %812 = vmatprep.subr.mxu0 0.0
        %813 = vmatpush1.msra.mxu0 0.0
        %814 = vmatprep.subr.mxu0 0.0
        %815 = vmatpush1.msra.mxu0 0.0
        %816 = vmatprep.subr.mxu0 0.0
        %817 = vmatpush1.msra.mxu0 0.0
        %818 = vmatprep.subr.mxu0 0.0
        %819 = vmatpush1.msra.mxu0 0.0
        %820 = vmatprep.subr.mxu0 0.0
        %821 = vmatpush1.msra.mxu0 0.0
        %822 = vmatprep.subr.mxu0 0.0
        %823 = vmatpush1.msra.mxu0 0.0
        %824 = vmatprep.subr.mxu0 0.0
        %825 = vmatpush1.msra.mxu0 0.0
        %826 = vmatprep.subr.mxu0 0.0
        %827 = vmatpush1.msra.mxu0 0.0
        %828 = vmatprep.subr.mxu0 0.0
        %829 = vmatpush1.msra.mxu0 0.0
        %830 = vmatprep.subr.mxu0 0.0
        %831 = vmatpush1.msra.mxu0 0.0
        %832 = vmatprep.subr.mxu0 0.0
        %833 = vmatpush1.msra.mxu0 0.0
        %834 = vmatprep.subr.mxu0 0.0
        %835 = vmatpush1.msra.mxu0 0.0
        %836 = vmatprep.subr.mxu0 0.0
        %837 = vmatpush1.msra.mxu0 0.0
        %838 = vmatprep.subr.mxu0 0.0
        %839 = vmatpush1.msra.mxu0 0.0
        %840 = vmatprep.subr.mxu0 0.0
        %841 = vmatpush1.msra.mxu0 0.0
        %842 = vmatprep.subr.mxu0 0.0
        %843 = vmatpush1.msra.mxu0 0.0
        %844 = vmatprep.subr.mxu0 0.0
        %845 = vmatpush1.msra.mxu0 0.0
        %846 = vmatprep.subr.mxu0 0.0
        %847 = vmatpush1.msra.mxu0 0.0
        %848 = vmatprep.mubr.f32.mxu0 0.0
        %849 = vmatmul.mubr.f32.gmra.mrb[0].mxu0 %v782
        %v850 = vpop.f32.mrb[0].mxu0
        %v851 = vadd.f32 0.0, %v850
        %v852 = vpop.f32.mrb[0].mxu0
        %853 = vdwg.mxu0
        %v854 = vld [vmem:[%s5] sm:$0x2]
        %v855 = vunpack.c.l.bf16 %v854
        %v856 = vlaneseq
        %v857 = vshrl.u32 %v856, 7
        %v858 = vsub.s32 2, %v857
        %v859 = vrot.slane %v855, %v858
        %v860 = vmul.f32 %v851, %v859
        %v861 = vadd.f32 %v777, %v860
        %v862 = vlaneseq
        %v863 = vshrl.u32 %v862, 7
        %v864 = vsub.s32 3, %v863
        %v865 = vrot.slane %v855, %v864
        %v866 = vmul.f32 %v595, %v865
        %v867 = vadd.f32 %v861, %v866
        %v868 = vxor.u32 %v867, 2147483648
        %v869 = vmul.f32 %v868, 1.442695
        %v870 = vpow.pop %v869
        %v871 = vadd.f32 %v870, 1.0
        %v872 = vrcp.pop %v871
        %v873 = vmul.f32 1.0, %v872
        %v874 = vmul.f32 %v867, %v873
        %v875 = vld [vmem:[%s7] sm:$0x1]
        %v876 = vlaneseq
        %v877 = vshrl.u32 %v876, 7
        %v878 = vsub.s32 0, %v877
        %v879 = vrot.slane %v875, %v878
        %881 = vrot.lane.b32.xlu0 %v879, 64
        %v882 = vpop.permute.xlu0 %881
        %v884 = vadd.f32 %v597, %v882
        %v885 = vmax.f32 %v884, 0.0
        %v886 = vand.u32 2147483647, %v884
        %v887 = vsub.f32 0.0, %v886
        %v888 = vmul.f32 %v887, 1.442695
        %v889 = vpow.pop %v888
        %v890 = vadd.f32 %v889, 1.0
        %v891 = vlog2.pop %v890
        %v892 = vmul.f32 %v891, 0.6931472
        %v893 = vadd.f32 %v885, %v892
        %v894 = vld [vmem:[%s7 + $0x1] sm:$0x1]
        %v895 = vmul.f32 %v894, 1.442695
        %v896 = vpow.pop %v895
        %v897 = vsub.f32 0.0, %v896
        %v898 = vlaneseq
        %v899 = vshrl.u32 %v898, 7
        %v900 = vsub.s32 0, %v899
        %v901 = vrot.slane %v897, %v900
        %903 = vrot.lane.b32.xlu0 %v901, 64
        %v904 = vpop.permute.xlu0 %903
        %v906 = vmul.f32 %v893, %v904
        %vm907 = vcmp.le.s32.totalorder %v434, %v602
        %v908 = vsel %vm907, 1, 0
        %v909 = vcvt.s32.f32 %v908
        %vm910 = vcmp.le.s32.totalorder %v602, %v434
        %v911 = vsel %vm910, 1, 0
        %v912 = vcvt.s32.f32 %v911
        %914 = vrot.lane.b32.xlu0 %v906, 64
        %v915 = vpop.permute.xlu0 %914
        %v918 = vsel %vm614, %v909, 0
        %920 = vmatprep.subr.mxu0 0.0
        %921 = vmatpush1.msra.mxu0 %v915
        %922 = vmatprep.subr.mxu0 0.0
        %923 = vmatpush1.msra.mxu0 0.0
        %924 = vmatprep.subr.mxu0 0.0
        %925 = vmatpush1.msra.mxu0 0.0
        %926 = vmatprep.subr.mxu0 0.0
        %927 = vmatpush1.msra.mxu0 0.0
        %928 = vmatprep.subr.mxu0 0.0
        %929 = vmatpush1.msra.mxu0 0.0
        %930 = vmatprep.subr.mxu0 0.0
        %931 = vmatpush1.msra.mxu0 0.0
        %932 = vmatprep.subr.mxu0 0.0
        %933 = vmatpush1.msra.mxu0 0.0
        %934 = vmatprep.subr.mxu0 0.0
        %935 = vmatpush1.msra.mxu0 0.0
        %936 = vmatprep.subr.mxu0 0.0
        %937 = vmatpush1.msra.mxu0 0.0
        %938 = vmatprep.subr.mxu0 0.0
        %939 = vmatpush1.msra.mxu0 0.0
        %940 = vmatprep.subr.mxu0 0.0
        %941 = vmatpush1.msra.mxu0 0.0
        %942 = vmatprep.subr.mxu0 0.0
        %943 = vmatpush1.msra.mxu0 0.0
        %944 = vmatprep.subr.mxu0 0.0
        %945 = vmatpush1.msra.mxu0 0.0
        %946 = vmatprep.subr.mxu0 0.0
        %947 = vmatpush1.msra.mxu0 0.0
        %948 = vmatprep.subr.mxu0 0.0
        %949 = vmatpush1.msra.mxu0 0.0
        %950 = vmatprep.subr.mxu0 0.0
        %951 = vmatpush1.msra.mxu0 0.0
        %952 = vmatprep.subr.mxu0 0.0
        %953 = vmatpush1.msra.mxu0 0.0
        %954 = vmatprep.subr.mxu0 0.0
        %955 = vmatpush1.msra.mxu0 0.0
        %956 = vmatprep.subr.mxu0 0.0
        %957 = vmatpush1.msra.mxu0 0.0
        %958 = vmatprep.subr.mxu0 0.0
        %959 = vmatpush1.msra.mxu0 0.0
        %960 = vmatprep.subr.mxu0 0.0
        %961 = vmatpush1.msra.mxu0 0.0
        %962 = vmatprep.subr.mxu0 0.0
        %963 = vmatpush1.msra.mxu0 0.0
        %964 = vmatprep.subr.mxu0 0.0
        %965 = vmatpush1.msra.mxu0 0.0
        %966 = vmatprep.subr.mxu0 0.0
        %967 = vmatpush1.msra.mxu0 0.0
        %968 = vmatprep.subr.mxu0 0.0
        %969 = vmatpush1.msra.mxu0 0.0
        %970 = vmatprep.subr.mxu0 0.0
        %971 = vmatpush1.msra.mxu0 0.0
        %972 = vmatprep.subr.mxu0 0.0
        %973 = vmatpush1.msra.mxu0 0.0
        %974 = vmatprep.subr.mxu0 0.0
        %975 = vmatpush1.msra.mxu0 0.0
        %976 = vmatprep.subr.mxu0 0.0
        %977 = vmatpush1.msra.mxu0 0.0
        %978 = vmatprep.subr.mxu0 0.0
        %979 = vmatpush1.msra.mxu0 0.0
        %980 = vmatprep.subr.mxu0 0.0
        %981 = vmatpush1.msra.mxu0 0.0
        %982 = vmatprep.subr.mxu0 0.0
        %983 = vmatpush1.msra.mxu0 0.0
        %984 = vmatprep.mubr.f32.mxu0 0.0
        %985 = vmatmul.mubr.f32.gmra.mrb[0].mxu0 %v918
        %v986 = vpop.f32.mrb[0].mxu0
        %v987 = vadd.f32 0.0, %v986
        %v988 = vpop.f32.mrb[0].mxu0
        %989 = vdwg.mxu0
        %990 = vxpose.xlu0.b32.start [1/16] %v915, 128
        %991 = vxpose.xlu0.b32.cont [2/16] 0.0, 128
        %992 = vxpose.xlu0.b32.cont [3/16] 0.0, 128
        %993 = vxpose.xlu0.b32.cont [4/16] 0.0, 128
        %994 = vxpose.xlu0.b32.cont [5/16] 0.0, 128
        %995 = vxpose.xlu0.b32.cont [6/16] 0.0, 128
        %996 = vxpose.xlu0.b32.cont [7/16] 0.0, 128
        %997 = vxpose.xlu0.b32.cont [8/16] 0.0, 128
        %998 = vxpose.xlu0.b32.cont [9/16] 0.0, 128
        %999 = vxpose.xlu0.b32.cont [10/16] 0.0, 128
        %1000 = vxpose.xlu0.b32.cont [11/16] 0.0, 128
        %1001 = vxpose.xlu0.b32.cont [12/16] 0.0, 128
        %1002 = vxpose.xlu0.b32.cont [13/16] 0.0, 128
        %1003 = vxpose.xlu0.b32.cont [14/16] 0.0, 128
        %1004 = vxpose.xlu0.b32.cont [15/16] 0.0, 128
        %1005 = vxpose.xlu0.b32.end [16/16] 0.0, 128
        %v1006 = vpop.trf.xlu0
        %v1007 = vpop.trf.xlu0
        %v1008 = vpop.trf.xlu0
        %v1009 = vpop.trf.xlu0
        %v1010 = vpop.trf.xlu0
        %v1011 = vpop.trf.xlu0
        %v1012 = vpop.trf.xlu0
        %v1013 = vpop.trf.xlu0
        %v1014 = vpop.trf.xlu0
        %v1015 = vpop.trf.xlu0
        %v1016 = vpop.trf.xlu0
        %v1017 = vpop.trf.xlu0
        %v1018 = vpop.trf.xlu0
        %v1019 = vpop.trf.xlu0
        %v1020 = vpop.trf.xlu0
        %v1021 = vpop.trf.xlu0
        %v1023 = vsel %vm614, %v1006, 0
        %1025 = vmatprep.subr.mxu0 0.0
        %1026 = vmatpush1.msra.mxu0 %v912
        %1027 = vmatprep.subr.mxu0 0.0
        %1028 = vmatpush1.msra.mxu0 0.0
        %1029 = vmatprep.subr.mxu0 0.0
        %1030 = vmatpush1.msra.mxu0 0.0
        %1031 = vmatprep.subr.mxu0 0.0
        %1032 = vmatpush1.msra.mxu0 0.0
        %1033 = vmatprep.subr.mxu0 0.0
        %1034 = vmatpush1.msra.mxu0 0.0
        %1035 = vmatprep.subr.mxu0 0.0
        %1036 = vmatpush1.msra.mxu0 0.0
        %1037 = vmatprep.subr.mxu0 0.0
        %1038 = vmatpush1.msra.mxu0 0.0
        %1039 = vmatprep.subr.mxu0 0.0
        %1040 = vmatpush1.msra.mxu0 0.0
        %1041 = vmatprep.subr.mxu0 0.0
        %1042 = vmatpush1.msra.mxu0 0.0
        %1043 = vmatprep.subr.mxu0 0.0
        %1044 = vmatpush1.msra.mxu0 0.0
        %1045 = vmatprep.subr.mxu0 0.0
        %1046 = vmatpush1.msra.mxu0 0.0
        %1047 = vmatprep.subr.mxu0 0.0
        %1048 = vmatpush1.msra.mxu0 0.0
        %1049 = vmatprep.subr.mxu0 0.0
        %1050 = vmatpush1.msra.mxu0 0.0
        %1051 = vmatprep.subr.mxu0 0.0
        %1052 = vmatpush1.msra.mxu0 0.0
        %1053 = vmatprep.subr.mxu0 0.0
        %1054 = vmatpush1.msra.mxu0 0.0
        %1055 = vmatprep.subr.mxu0 0.0
        %1056 = vmatpush1.msra.mxu0 0.0
        %1057 = vmatprep.subr.mxu0 0.0
        %1058 = vmatpush1.msra.mxu0 0.0
        %1059 = vmatprep.subr.mxu0 0.0
        %1060 = vmatpush1.msra.mxu0 0.0
        %1061 = vmatprep.subr.mxu0 0.0
        %1062 = vmatpush1.msra.mxu0 0.0
        %1063 = vmatprep.subr.mxu0 0.0
        %1064 = vmatpush1.msra.mxu0 0.0
        %1065 = vmatprep.subr.mxu0 0.0
        %1066 = vmatpush1.msra.mxu0 0.0
        %1067 = vmatprep.subr.mxu0 0.0
        %1068 = vmatpush1.msra.mxu0 0.0
        %1069 = vmatprep.subr.mxu0 0.0
        %1070 = vmatpush1.msra.mxu0 0.0
        %1071 = vmatprep.subr.mxu0 0.0
        %1072 = vmatpush1.msra.mxu0 0.0
        %1073 = vmatprep.subr.mxu0 0.0
        %1074 = vmatpush1.msra.mxu0 0.0
        %1075 = vmatprep.subr.mxu0 0.0
        %1076 = vmatpush1.msra.mxu0 0.0
        %1077 = vmatprep.subr.mxu0 0.0
        %1078 = vmatpush1.msra.mxu0 0.0
        %1079 = vmatprep.subr.mxu0 0.0
        %1080 = vmatpush1.msra.mxu0 0.0
        %1081 = vmatprep.subr.mxu0 0.0
        %1082 = vmatpush1.msra.mxu0 0.0
        %1083 = vmatprep.subr.mxu0 0.0
        %1084 = vmatpush1.msra.mxu0 0.0
        %1085 = vmatprep.subr.mxu0 0.0
        %1086 = vmatpush1.msra.mxu0 0.0
        %1087 = vmatprep.subr.mxu0 0.0
        %1088 = vmatpush1.msra.mxu0 0.0
        %1089 = vmatprep.mubr.f32.mxu0 0.0
        %1090 = vmatmul.mubr.f32.gmra.mrb[0].mxu0 %v1023
        %v1091 = vpop.f32.mrb[0].mxu0
        %v1092 = vadd.f32 0.0, %v1091
        %v1093 = vpop.f32.mrb[0].mxu0
        %1094 = vdwg.mxu0
        %1096 = vrot.lane.b32.xlu0 %v874, 48
        %v1097 = vpop.permute.xlu0 %1096
        %1098 = vrot.lane.b32.xlu0 %v874, 64
        %v1099 = vpop.permute.xlu0 %1098
        %vm1100 = vcmask 130048
        %v1101 = vsel %vm1100, %v1097, 0
        %v1103 = vsel %vm1100, %v1099, 0
        %1105 = vmatprep.subr.mxu0 0.0
        %1106 = vmatpush1.xpose.msra.mxu0 %v1103
        %1107 = vmatprep.subr.mxu0 0.0
        %1108 = vmatpush1.xpose.msra.mxu0 0.0
        %1109 = vmatprep.subr.mxu0 0.0
        %1110 = vmatpush1.xpose.msra.mxu0 0.0
        %1111 = vmatprep.subr.mxu0 0.0
        %1112 = vmatpush1.xpose.msra.mxu0 0.0
        %1113 = vmatprep.subr.mxu0 0.0
        %1114 = vmatpush1.xpose.msra.mxu0 0.0
        %1115 = vmatprep.subr.mxu0 0.0
        %1116 = vmatpush1.xpose.msra.mxu0 0.0
        %1117 = vmatprep.subr.mxu0 0.0
        %1118 = vmatpush1.xpose.msra.mxu0 0.0
        %1119 = vmatprep.subr.mxu0 0.0
        %1120 = vmatpush1.xpose.msra.mxu0 0.0
        %1121 = vmatprep.subr.mxu0 0.0
        %1122 = vmatpush1.xpose.msra.mxu0 0.0
        %1123 = vmatprep.subr.mxu0 0.0
        %1124 = vmatpush1.xpose.msra.mxu0 0.0
        %1125 = vmatprep.subr.mxu0 0.0
        %1126 = vmatpush1.xpose.msra.mxu0 0.0
        %1127 = vmatprep.subr.mxu0 0.0
        %1128 = vmatpush1.xpose.msra.mxu0 0.0
        %1129 = vmatprep.subr.mxu0 0.0
        %1130 = vmatpush1.xpose.msra.mxu0 0.0
        %1131 = vmatprep.subr.mxu0 0.0
        %1132 = vmatpush1.xpose.msra.mxu0 0.0
        %1133 = vmatprep.subr.mxu0 0.0
        %1134 = vmatpush1.xpose.msra.mxu0 0.0
        %1135 = vmatprep.subr.mxu0 0.0
        %1136 = vmatpush1.xpose.msra.mxu0 0.0
        %1137 = vmatprep.subr.mxu0 0.0
        %1138 = vmatpush1.xpose.msra.mxu0 0.0
        %1139 = vmatprep.subr.mxu0 0.0
        %1140 = vmatpush1.xpose.msra.mxu0 0.0
        %1141 = vmatprep.subr.mxu0 0.0
        %1142 = vmatpush1.xpose.msra.mxu0 0.0
        %1143 = vmatprep.subr.mxu0 0.0
        %1144 = vmatpush1.xpose.msra.mxu0 0.0
        %1145 = vmatprep.subr.mxu0 0.0
        %1146 = vmatpush1.xpose.msra.mxu0 0.0
        %1147 = vmatprep.subr.mxu0 0.0
        %1148 = vmatpush1.xpose.msra.mxu0 0.0
        %1149 = vmatprep.subr.mxu0 0.0
        %1150 = vmatpush1.xpose.msra.mxu0 0.0
        %1151 = vmatprep.subr.mxu0 0.0
        %1152 = vmatpush1.xpose.msra.mxu0 0.0
        %1153 = vmatprep.subr.mxu0 0.0
        %1154 = vmatpush1.xpose.msra.mxu0 0.0
        %1155 = vmatprep.subr.mxu0 0.0
        %1156 = vmatpush1.xpose.msra.mxu0 0.0
        %1157 = vmatprep.subr.mxu0 0.0
        %1158 = vmatpush1.xpose.msra.mxu0 0.0
        %1159 = vmatprep.subr.mxu0 0.0
        %1160 = vmatpush1.xpose.msra.mxu0 0.0
        %1161 = vmatprep.subr.mxu0 0.0
        %1162 = vmatpush1.xpose.msra.mxu0 0.0
        %1163 = vmatprep.subr.mxu0 0.0
        %1164 = vmatpush1.xpose.msra.mxu0 0.0
        %1165 = vmatprep.subr.mxu0 0.0
        %1166 = vmatpush1.xpose.msra.mxu0 0.0
        %1167 = vmatprep.subr.mxu0 0.0
        %1168 = vmatpush1.xpose.msra.mxu0 0.0
        %1169 = vmatprep.mubr.f32.mxu0 0.0
        %1170 = vmatmul.mubr.f32.gmra.mrb[0].mxu0 %v1101
        %v1171 = vpop.f32.mrb[0].mxu0
        %v1172 = vadd.f32 0.0, %v1171
        %v1173 = vpop.f32.mrb[0].mxu0
        %1174 = vdwg.mxu0
        %1176 = vset.pattern.permute.xlu0 0
        %1177 = vperm.xlu0 %1176, %v987
        %v1178 = vpop.permute.xlu0 %1177
        %v1180 = vlaneseq
        %v1181 = vshrl.u32 %v1180, 7
        %v1182 = vsub.s32 0, %v1181
        %v1183 = vrot.slane %v1092, %v1182
        %v1184 = vsub.f32 %v1178, %v1183
        %v1185 = vsel %vm907, %v1184, -1e+30
        %v1186 = vmul.f32 %v1185, 1.442695
        %v1187 = vpow.pop %v1186
        %v1188 = vmul.f32 %v1187, %v1172
        %1190 = vset.pattern.permute.xlu0 64
        %1191 = vperm.xlu0 %1190, %v893
        %v1192 = vpop.permute.xlu0 %1191
        %v1194 = vmul.f32 %v874, %v1192
        %v1195 = vld [vmem:[%s7 + $0x2] sm:$0x1]
        %s1197 = vtos %v1195
        %v1198 = vstv %s1197
        %v1200 = vmul.f32 %v1198, %v874
        %v1202 = vsel %vm614, %v1188, 0
        %1204 = vmatprep.subr.mxu0 0.0
        %1205 = vmatpush1.msra.mxu0 %v1194
        %1206 = vmatprep.subr.mxu0 0.0
        %1207 = vmatpush1.msra.mxu0 0.0
        %1208 = vmatprep.subr.mxu0 0.0
        %1209 = vmatpush1.msra.mxu0 0.0
        %1210 = vmatprep.subr.mxu0 0.0
        %1211 = vmatpush1.msra.mxu0 0.0
        %1212 = vmatprep.subr.mxu0 0.0
        %1213 = vmatpush1.msra.mxu0 0.0
        %1214 = vmatprep.subr.mxu0 0.0
        %1215 = vmatpush1.msra.mxu0 0.0
        %1216 = vmatprep.subr.mxu0 0.0
        %1217 = vmatpush1.msra.mxu0 0.0
        %1218 = vmatprep.subr.mxu0 0.0
        %1219 = vmatpush1.msra.mxu0 0.0
        %1220 = vmatprep.subr.mxu0 0.0
        %1221 = vmatpush1.msra.mxu0 0.0
        %1222 = vmatprep.subr.mxu0 0.0
        %1223 = vmatpush1.msra.mxu0 0.0
        %1224 = vmatprep.subr.mxu0 0.0
        %1225 = vmatpush1.msra.mxu0 0.0
        %1226 = vmatprep.subr.mxu0 0.0
        %1227 = vmatpush1.msra.mxu0 0.0
        %1228 = vmatprep.subr.mxu0 0.0
        %1229 = vmatpush1.msra.mxu0 0.0
        %1230 = vmatprep.subr.mxu0 0.0
        %1231 = vmatpush1.msra.mxu0 0.0
        %1232 = vmatprep.subr.mxu0 0.0
        %1233 = vmatpush1.msra.mxu0 0.0
        %1234 = vmatprep.subr.mxu0 0.0
        %1235 = vmatpush1.msra.mxu0 0.0
        %1236 = vmatprep.subr.mxu0 0.0
        %1237 = vmatpush1.msra.mxu0 0.0
        %1238 = vmatprep.subr.mxu0 0.0
        %1239 = vmatpush1.msra.mxu0 0.0
        %1240 = vmatprep.subr.mxu0 0.0
        %1241 = vmatpush1.msra.mxu0 0.0
        %1242 = vmatprep.subr.mxu0 0.0
        %1243 = vmatpush1.msra.mxu0 0.0
        %1244 = vmatprep.subr.mxu0 0.0
        %1245 = vmatpush1.msra.mxu0 0.0
        %1246 = vmatprep.subr.mxu0 0.0
        %1247 = vmatpush1.msra.mxu0 0.0
        %1248 = vmatprep.subr.mxu0 0.0
        %1249 = vmatpush1.msra.mxu0 0.0
        %1250 = vmatprep.subr.mxu0 0.0
        %1251 = vmatpush1.msra.mxu0 0.0
        %1252 = vmatprep.subr.mxu0 0.0
        %1253 = vmatpush1.msra.mxu0 0.0
        %1254 = vmatprep.subr.mxu0 0.0
        %1255 = vmatpush1.msra.mxu0 0.0
        %1256 = vmatprep.subr.mxu0 0.0
        %1257 = vmatpush1.msra.mxu0 0.0
        %1258 = vmatprep.subr.mxu0 0.0
        %1259 = vmatpush1.msra.mxu0 0.0
        %1260 = vmatprep.subr.mxu0 0.0
        %1261 = vmatpush1.msra.mxu0 0.0
        %1262 = vmatprep.subr.mxu0 0.0
        %1263 = vmatpush1.msra.mxu0 0.0
        %1264 = vmatprep.subr.mxu0 0.0
        %1265 = vmatpush1.msra.mxu0 0.0
        %1266 = vmatprep.subr.mxu0 0.0
        %1267 = vmatpush1.msra.mxu0 0.0
        %1268 = vmatprep.mubr.f32.mxu0 0.0
        %1269 = vmatmul.mubr.f32.gmra.mrb[0].mxu0 %v1202
        %v1270 = vpop.f32.mrb[0].mxu0
        %v1271 = vadd.f32 %v1200, %v1270
        %v1272 = vpop.f32.mrb[0].mxu0
        %1273 = vdwg.mxu0
        %1274 = vst.msk [vmem:[#allocation2] sm:$0xff] %vm1100, %v1271
        %1275 = vset.pattern.permute.xlu0 1
        %1276 = vperm.xlu0 %1275, %v987
        %v1277 = vpop.permute.xlu0 %1276
        %v1279 = vlaneseq
        %v1280 = vshrl.u32 %v1279, 7
        %v1281 = vsub.s32 1, %v1280
        %v1282 = vrot.slane %v1092, %v1281
        %v1283 = vsub.f32 %v1277, %v1282
        %v1284 = vsel %vm907, %v1283, -1e+30
        %v1285 = vmul.f32 %v1284, 1.442695
        %v1286 = vpow.pop %v1285
        %v1287 = vmul.f32 %v1286, %v1172
        %1288 = vset.pattern.permute.xlu0 65
        %1289 = vperm.xlu0 %1288, %v893
        %v1290 = vpop.permute.xlu0 %1289
        %v1292 = vmul.f32 %v874, %v1290
        %v1293 = vld [vmem:[%s7 + $0x2] sm:$0x1]
        %1295 = vrot.lane.b32.xlu0 %v1293, 127
        %v1296 = vpop.permute.xlu0 %1295
        %s1297 = vtos %v1296
        %v1298 = vstv %s1297
        %v1300 = vmul.f32 %v1298, %v874
        %1302 = vrot.lane.b32.xlu0 %v1292, 112
        %v1303 = vpop.permute.xlu0 %1302
        %1306 = vrot.lane.b32.xlu0 %v1300, 112
        %v1307 = vpop.permute.xlu0 %1306
        %v1310 = vsel %vm614, %v1287, 0
        %1312 = vmatprep.subr.mxu0 0.0
        %1313 = vmatpush1.msra.mxu0 %v1303
        %1314 = vmatprep.subr.mxu0 0.0
        %1315 = vmatpush1.msra.mxu0 0.0
        %1316 = vmatprep.subr.mxu0 0.0
        %1317 = vmatpush1.msra.mxu0 0.0
        %1318 = vmatprep.subr.mxu0 0.0
        %1319 = vmatpush1.msra.mxu0 0.0
        %1320 = vmatprep.subr.mxu0 0.0
        %1321 = vmatpush1.msra.mxu0 0.0
        %1322 = vmatprep.subr.mxu0 0.0
        %1323 = vmatpush1.msra.mxu0 0.0
        %1324 = vmatprep.subr.mxu0 0.0
        %1325 = vmatpush1.msra.mxu0 0.0
        %1326 = vmatprep.subr.mxu0 0.0
        %1327 = vmatpush1.msra.mxu0 0.0
        %1328 = vmatprep.subr.mxu0 0.0
        %1329 = vmatpush1.msra.mxu0 0.0
        %1330 = vmatprep.subr.mxu0 0.0
        %1331 = vmatpush1.msra.mxu0 0.0
        %1332 = vmatprep.subr.mxu0 0.0
        %1333 = vmatpush1.msra.mxu0 0.0
        %1334 = vmatprep.subr.mxu0 0.0
        %1335 = vmatpush1.msra.mxu0 0.0
        %1336 = vmatprep.subr.mxu0 0.0
        %1337 = vmatpush1.msra.mxu0 0.0
        %1338 = vmatprep.subr.mxu0 0.0
        %1339 = vmatpush1.msra.mxu0 0.0
        %1340 = vmatprep.subr.mxu0 0.0
        %1341 = vmatpush1.msra.mxu0 0.0
        %1342 = vmatprep.subr.mxu0 0.0
        %1343 = vmatpush1.msra.mxu0 0.0
        %1344 = vmatprep.subr.mxu0 0.0
        %1345 = vmatpush1.msra.mxu0 0.0
        %1346 = vmatprep.subr.mxu0 0.0
        %1347 = vmatpush1.msra.mxu0 0.0
        %1348 = vmatprep.subr.mxu0 0.0
        %1349 = vmatpush1.msra.mxu0 0.0
        %1350 = vmatprep.subr.mxu0 0.0
        %1351 = vmatpush1.msra.mxu0 0.0
        %1352 = vmatprep.subr.mxu0 0.0
        %1353 = vmatpush1.msra.mxu0 0.0
        %1354 = vmatprep.subr.mxu0 0.0
        %1355 = vmatpush1.msra.mxu0 0.0
        %1356 = vmatprep.subr.mxu0 0.0
        %1357 = vmatpush1.msra.mxu0 0.0
        %1358 = vmatprep.subr.mxu0 0.0
        %1359 = vmatpush1.msra.mxu0 0.0
        %1360 = vmatprep.subr.mxu0 0.0
        %1361 = vmatpush1.msra.mxu0 0.0
        %1362 = vmatprep.subr.mxu0 0.0
        %1363 = vmatpush1.msra.mxu0 0.0
        %1364 = vmatprep.subr.mxu0 0.0
        %1365 = vmatpush1.msra.mxu0 0.0
        %1366 = vmatprep.subr.mxu0 0.0
        %1367 = vmatpush1.msra.mxu0 0.0
        %1368 = vmatprep.subr.mxu0 0.0
        %1369 = vmatpush1.msra.mxu0 0.0
        %1370 = vmatprep.subr.mxu0 0.0
        %1371 = vmatpush1.msra.mxu0 0.0
        %1372 = vmatprep.subr.mxu0 0.0
        %1373 = vmatpush1.msra.mxu0 0.0
        %1374 = vmatprep.subr.mxu0 0.0
        %1375 = vmatpush1.msra.mxu0 0.0
        %1376 = vmatprep.mubr.f32.mxu0 0.0
        %1377 = vmatmul.mubr.f32.gmra.mrb[0].mxu0 %v1310
        %v1378 = vpop.f32.mrb[0].mxu0
        %v1379 = vadd.f32 %v1307, %v1378
        %v1380 = vpop.f32.mrb[0].mxu0
        %1381 = vdwg.mxu0
        %1383 = vrot.lane.b32.xlu0 %v1379, 16
        %v1384 = vpop.permute.xlu0 %1383
        %vm1386 = vcmask 261248
        %1387 = vst.msk [vmem:[#allocation2] sm:$0xff] %vm1386, %v1384
        %1388 = vset.pattern.permute.xlu0 2
        %1389 = vperm.xlu0 %1388, %v987
        %v1390 = vpop.permute.xlu0 %1389
        %v1392 = vlaneseq
        %v1393 = vshrl.u32 %v1392, 7
        %v1394 = vsub.s32 2, %v1393
        %v1395 = vrot.slane %v1092, %v1394
        %v1396 = vsub.f32 %v1390, %v1395
        %v1397 = vsel %vm907, %v1396, -1e+30
        %v1398 = vmul.f32 %v1397, 1.442695
        %v1399 = vpow.pop %v1398
        %v1400 = vmul.f32 %v1399, %v1172
        %1401 = vset.pattern.permute.xlu0 66
        %1402 = vperm.xlu0 %1401, %v893
        %v1403 = vpop.permute.xlu0 %1402
        %v1405 = vmul.f32 %v874, %v1403
        %v1406 = vld [vmem:[%s7 + $0x2] sm:$0x1]
        %1408 = vrot.lane.b32.xlu0 %v1406, 126
        %v1409 = vpop.permute.xlu0 %1408
        %s1410 = vtos %v1409
        %v1411 = vstv %s1410
        %v1413 = vmul.f32 %v1411, %v874
        %1415 = vrot.lane.b32.xlu0 %v1405, 96
        %v1416 = vpop.permute.xlu0 %1415
        %1419 = vrot.lane.b32.xlu0 %v1413, 96
        %v1420 = vpop.permute.xlu0 %1419
        %v1423 = vsel %vm614, %v1400, 0
        %1425 = vmatprep.subr.mxu0 0.0
        %1426 = vmatpush1.msra.mxu0 %v1416
        %1427 = vmatprep.subr.mxu0 0.0
        %1428 = vmatpush1.msra.mxu0 0.0
        %1429 = vmatprep.subr.mxu0 0.0
        %1430 = vmatpush1.msra.mxu0 0.0
        %1431 = vmatprep.subr.mxu0 0.0
        %1432 = vmatpush1.msra.mxu0 0.0
        %1433 = vmatprep.subr.mxu0 0.0
        %1434 = vmatpush1.msra.mxu0 0.0
        %1435 = vmatprep.subr.mxu0 0.0
        %1436 = vmatpush1.msra.mxu0 0.0
        %1437 = vmatprep.subr.mxu0 0.0
        %1438 = vmatpush1.msra.mxu0 0.0
        %1439 = vmatprep.subr.mxu0 0.0
        %1440 = vmatpush1.msra.mxu0 0.0
        %1441 = vmatprep.subr.mxu0 0.0
        %1442 = vmatpush1.msra.mxu0 0.0
        %1443 = vmatprep.subr.mxu0 0.0
        %1444 = vmatpush1.msra.mxu0 0.0
        %1445 = vmatprep.subr.mxu0 0.0
        %1446 = vmatpush1.msra.mxu0 0.0
        %1447 = vmatprep.subr.mxu0 0.0
        %1448 = vmatpush1.msra.mxu0 0.0
        %1449 = vmatprep.subr.mxu0 0.0
        %1450 = vmatpush1.msra.mxu0 0.0
        %1451 = vmatprep.subr.mxu0 0.0
        %1452 = vmatpush1.msra.mxu0 0.0
        %1453 = vmatprep.subr.mxu0 0.0
        %1454 = vmatpush1.msra.mxu0 0.0
        %1455 = vmatprep.subr.mxu0 0.0
        %1456 = vmatpush1.msra.mxu0 0.0
        %1457 = vmatprep.subr.mxu0 0.0
        %1458 = vmatpush1.msra.mxu0 0.0
        %1459 = vmatprep.subr.mxu0 0.0
        %1460 = vmatpush1.msra.mxu0 0.0
        %1461 = vmatprep.subr.mxu0 0.0
        %1462 = vmatpush1.msra.mxu0 0.0
        %1463 = vmatprep.subr.mxu0 0.0
        %1464 = vmatpush1.msra.mxu0 0.0
        %1465 = vmatprep.subr.mxu0 0.0
        %1466 = vmatpush1.msra.mxu0 0.0
        %1467 = vmatprep.subr.mxu0 0.0
        %1468 = vmatpush1.msra.mxu0 0.0
        %1469 = vmatprep.subr.mxu0 0.0
        %1470 = vmatpush1.msra.mxu0 0.0
        %1471 = vmatprep.subr.mxu0 0.0
        %1472 = vmatpush1.msra.mxu0 0.0
        %1473 = vmatprep.subr.mxu0 0.0
        %1474 = vmatpush1.msra.mxu0 0.0
        %1475 = vmatprep.subr.mxu0 0.0
        %1476 = vmatpush1.msra.mxu0 0.0
        %1477 = vmatprep.subr.mxu0 0.0
        %1478 = vmatpush1.msra.mxu0 0.0
        %1479 = vmatprep.subr.mxu0 0.0
        %1480 = vmatpush1.msra.mxu0 0.0
        %1481 = vmatprep.subr.mxu0 0.0
        %1482 = vmatpush1.msra.mxu0 0.0
        %1483 = vmatprep.subr.mxu0 0.0
        %1484 = vmatpush1.msra.mxu0 0.0
        %1485 = vmatprep.subr.mxu0 0.0
        %1486 = vmatpush1.msra.mxu0 0.0
        %1487 = vmatprep.subr.mxu0 0.0
        %1488 = vmatpush1.msra.mxu0 0.0
        %1489 = vmatprep.mubr.f32.mxu0 0.0
        %1490 = vmatmul.mubr.f32.gmra.mrb[0].mxu0 %v1423
        %v1491 = vpop.f32.mrb[0].mxu0
        %v1492 = vadd.f32 %v1420, %v1491
        %v1493 = vpop.f32.mrb[0].mxu0
        %1494 = vdwg.mxu0
        %1496 = vrot.lane.b32.xlu0 %v1492, 32
        %v1497 = vpop.permute.xlu0 %1496
        %vm1499 = vcmask 392448
        %1500 = vst.msk [vmem:[#allocation2] sm:$0xff] %vm1499, %v1497
        %1501 = vset.pattern.permute.xlu0 3
        %1502 = vperm.xlu0 %1501, %v987
        %v1503 = vpop.permute.xlu0 %1502
        %v1505 = vlaneseq
        %v1506 = vshrl.u32 %v1505, 7
        %v1507 = vsub.s32 3, %v1506
        %v1508 = vrot.slane %v1092, %v1507
        %v1509 = vsub.f32 %v1503, %v1508
        %v1510 = vsel %vm907, %v1509, -1e+30
        %v1511 = vmul.f32 %v1510, 1.442695
        %v1512 = vpow.pop %v1511
        %v1513 = vmul.f32 %v1512, %v1172
        %1514 = vset.pattern.permute.xlu0 67
        %1515 = vperm.xlu0 %1514, %v893
        %v1516 = vpop.permute.xlu0 %1515
        %v1518 = vmul.f32 %v874, %v1516
        %v1519 = vld [vmem:[%s7 + $0x2] sm:$0x1]
        %1521 = vrot.lane.b32.xlu0 %v1519, 125
        %v1522 = vpop.permute.xlu0 %1521
        %s1523 = vtos %v1522
        %v1524 = vstv %s1523
        %v1526 = vmul.f32 %v1524, %v874
        %1528 = vrot.lane.b32.xlu0 %v1518, 80
        %v1529 = vpop.permute.xlu0 %1528
        %1532 = vrot.lane.b32.xlu0 %v1526, 80
        %v1533 = vpop.permute.xlu0 %1532
        %v1536 = vsel %vm614, %v1513, 0
        %1538 = vmatprep.subr.mxu0 0.0
        %1539 = vmatpush1.msra.mxu0 %v1529
        %1540 = vmatprep.subr.mxu0 0.0
        %1541 = vmatpush1.msra.mxu0 0.0
        %1542 = vmatprep.subr.mxu0 0.0
        %1543 = vmatpush1.msra.mxu0 0.0
        %1544 = vmatprep.subr.mxu0 0.0
        %1545 = vmatpush1.msra.mxu0 0.0
        %1546 = vmatprep.subr.mxu0 0.0
        %1547 = vmatpush1.msra.mxu0 0.0
        %1548 = vmatprep.subr.mxu0 0.0
        %1549 = vmatpush1.msra.mxu0 0.0
        %1550 = vmatprep.subr.mxu0 0.0
        %1551 = vmatpush1.msra.mxu0 0.0
        %1552 = vmatprep.subr.mxu0 0.0
        %1553 = vmatpush1.msra.mxu0 0.0
        %1554 = vmatprep.subr.mxu0 0.0
        %1555 = vmatpush1.msra.mxu0 0.0
        %1556 = vmatprep.subr.mxu0 0.0
        %1557 = vmatpush1.msra.mxu0 0.0
        %1558 = vmatprep.subr.mxu0 0.0
        %1559 = vmatpush1.msra.mxu0 0.0
        %1560 = vmatprep.subr.mxu0 0.0
        %1561 = vmatpush1.msra.mxu0 0.0
        %1562 = vmatprep.subr.mxu0 0.0
        %1563 = vmatpush1.msra.mxu0 0.0
        %1564 = vmatprep.subr.mxu0 0.0
        %1565 = vmatpush1.msra.mxu0 0.0
        %1566 = vmatprep.subr.mxu0 0.0
        %1567 = vmatpush1.msra.mxu0 0.0
        %1568 = vmatprep.subr.mxu0 0.0
        %1569 = vmatpush1.msra.mxu0 0.0
        %1570 = vmatprep.subr.mxu0 0.0
        %1571 = vmatpush1.msra.mxu0 0.0
        %1572 = vmatprep.subr.mxu0 0.0
        %1573 = vmatpush1.msra.mxu0 0.0
        %1574 = vmatprep.subr.mxu0 0.0
        %1575 = vmatpush1.msra.mxu0 0.0
        %1576 = vmatprep.subr.mxu0 0.0
        %1577 = vmatpush1.msra.mxu0 0.0
        %1578 = vmatprep.subr.mxu0 0.0
        %1579 = vmatpush1.msra.mxu0 0.0
        %1580 = vmatprep.subr.mxu0 0.0
        %1581 = vmatpush1.msra.mxu0 0.0
        %1582 = vmatprep.subr.mxu0 0.0
        %1583 = vmatpush1.msra.mxu0 0.0
        %1584 = vmatprep.subr.mxu0 0.0
        %1585 = vmatpush1.msra.mxu0 0.0
        %1586 = vmatprep.subr.mxu0 0.0
        %1587 = vmatpush1.msra.mxu0 0.0
        %1588 = vmatprep.subr.mxu0 0.0
        %1589 = vmatpush1.msra.mxu0 0.0
        %1590 = vmatprep.subr.mxu0 0.0
        %1591 = vmatpush1.msra.mxu0 0.0
        %1592 = vmatprep.subr.mxu0 0.0
        %1593 = vmatpush1.msra.mxu0 0.0
        %1594 = vmatprep.subr.mxu0 0.0
        %1595 = vmatpush1.msra.mxu0 0.0
        %1596 = vmatprep.subr.mxu0 0.0
        %1597 = vmatpush1.msra.mxu0 0.0
        %1598 = vmatprep.subr.mxu0 0.0
        %1599 = vmatpush1.msra.mxu0 0.0
        %1600 = vmatprep.subr.mxu0 0.0
        %1601 = vmatpush1.msra.mxu0 0.0
        %1602 = vmatprep.mubr.f32.mxu0 0.0
        %1603 = vmatmul.mubr.f32.gmra.mrb[0].mxu0 %v1536
        %v1604 = vpop.f32.mrb[0].mxu0
        %v1605 = vadd.f32 %v1533, %v1604
        %v1606 = vpop.f32.mrb[0].mxu0
        %1607 = vdwg.mxu0
        %1609 = vrot.lane.b32.xlu0 %v1605, 48
        %v1610 = vpop.permute.xlu0 %1609
        %vm1612 = vcmask 523648
        %1613 = vst.msk [vmem:[#allocation2] sm:$0xff] %vm1612, %v1610
        %v1614 = vld [vmem:[#allocation2] sm:$0xff]
        %v1615 = vxor.u32 %v597, 2147483648
        %v1616 = vmul.f32 %v1615, 1.442695
        %v1617 = vpow.pop %v1616
        %v1618 = vadd.f32 %v1617, 1.0
        %v1619 = vrcp.pop %v1618
        %v1620 = vmul.f32 1.0, %v1619
        %v1621 = vmul.f32 %v597, %v1620
        %v1622 = vmul.f32 %v1614, %v1621
        %v1623 = vmul.f32 %v1622, %v1622
        %vm1624 = vcmask 523264
        %v1625 = vsel %vm1624, %v1623, 0.0
        %1626 = vadd.xlane.f32.xlu0 %v1625
        %v1627 = vpop.xlane.xlu0 %1626
        %v1628 = vrcp.pop 64.0
        %v1629 = vmul.f32 %v1627, %v1628
        %v1630 = vadd.f32 %v1629, 1e-05
        %v1631 = vrsqrt.pop %v1630
        %v1632 = vmul.f32 %v1622, %v1631
        %v1633 = vld [vmem:[%s8] sm:$0x1]
        %v1634 = vunpack.c.l.bf16 %v1633
        %v1635 = vlaneseq
        %v1636 = vshrl.u32 %v1635, 7
        %v1637 = vsub.s32 0, %v1636
        %v1638 = vrot.slane %v1634, %v1637
        %v1639 = vmul.f32 %v1632, %v1638
        %v1640 = vpack.c.bf16 %v1639, %v1639
        %v1641 = vld [vmem:[%s9] sm:$0xf]
        %v1642 = vld [vmem:[%s9 + $0x4] sm:$0xf]
        %v1643 = vld [vmem:[%s9 + $0x8] sm:$0xf]
        %v1644 = vld [vmem:[%s9 + $0xc] sm:$0xf]
        %v1645 = vld [vmem:[%s9 + $0x10] sm:$0xf]
        %v1646 = vld [vmem:[%s9 + $0x14] sm:$0xf]
        %v1647 = vld [vmem:[%s9 + $0x18] sm:$0xf]
        %v1648 = vld [vmem:[%s9 + $0x1c] sm:$0xf]
        %v1657 = vunpack.c.l.b16 %v1641
        %v1658 = vunpack.c.l.b16 %v1642
        %v1659 = vunpack.c.l.b16 %v1643
        %v1660 = vunpack.c.l.b16 %v1644
        %v1661 = vunpack.c.l.b16 %v1645
        %v1662 = vunpack.c.l.b16 %v1646
        %v1663 = vunpack.c.l.b16 %v1647
        %v1664 = vunpack.c.l.b16 %v1648
        %v1665 = vpack.c.b16 %v1658, %v1657
        %v1666 = vpack.c.b16 %v1660, %v1659
        %v1667 = vpack.c.b16 %v1662, %v1661
        %v1668 = vpack.c.b16 %v1664, %v1663
        %v1674 = vsel %vm1624, %v1640, 0
        %1676 = vmatprep.subr.bf16.mxu0 0
        %1677 = vmatpush1.bf16.msra.mxu0 %v1665
        %1678 = vmatprep.subr.bf16.mxu0 0
        %1679 = vmatpush1.bf16.msra.mxu0 %v1666
        %1680 = vmatprep.subr.bf16.mxu0 0
        %1681 = vmatpush1.bf16.msra.mxu0 %v1667
        %1682 = vmatprep.subr.bf16.mxu0 0
        %1683 = vmatpush1.bf16.msra.mxu0 %v1668
        %1684 = vmatprep.subr.bf16.mxu0 0
        %1685 = vmatpush1.bf16.msra.mxu0 0
        %1686 = vmatprep.subr.bf16.mxu0 0
        %1687 = vmatpush1.bf16.msra.mxu0 0
        %1688 = vmatprep.subr.bf16.mxu0 0
        %1689 = vmatpush1.bf16.msra.mxu0 0
        %1690 = vmatprep.subr.bf16.mxu0 0
        %1691 = vmatpush1.bf16.msra.mxu0 0
        %1692 = vmatprep.subr.bf16.mxu0 0
        %1693 = vmatpush1.bf16.msra.mxu0 0
        %1694 = vmatprep.subr.bf16.mxu0 0
        %1695 = vmatpush1.bf16.msra.mxu0 0
        %1696 = vmatprep.subr.bf16.mxu0 0
        %1697 = vmatpush1.bf16.msra.mxu0 0
        %1698 = vmatprep.subr.bf16.mxu0 0
        %1699 = vmatpush1.bf16.msra.mxu0 0
        %1700 = vmatprep.subr.bf16.mxu0 0
        %1701 = vmatpush1.bf16.msra.mxu0 0
        %1702 = vmatprep.subr.bf16.mxu0 0
        %1703 = vmatpush1.bf16.msra.mxu0 0
        %1704 = vmatprep.subr.bf16.mxu0 0
        %1705 = vmatpush1.bf16.msra.mxu0 0
        %1706 = vmatprep.subr.bf16.mxu0 0
        %1707 = vmatpush1.bf16.msra.mxu0 0
        %1708 = vmatprep.mubr.bf16.mxu0 0
        %1709 = vmatmul.mubr.bf16.gmra.mrb[0].mxu0 %v1674
        %v1710 = vpop.f32.mrb[0].mxu0
        %v1711 = vadd.f32 0.0, %v1710
        %v1712 = vpop.f32.mrb[0].mxu0
        %v1713 = vpop.f32.mrb[0].mxu0
        %v1714 = vpop.f32.mrb[0].mxu0
        %1715 = vdwg.mxu0
        %v1716 = vpack.c.bf16 %v1711, %v1711
        %1717 = vst [vmem:[%s424] sm:$0xf] %v1716
        %p1718 = scmp.lt.s32.totalorder %s24, 1
        %s1719 = scalar_select %p1718, %s24, 1
        %s1720 = smul.addr %s1719, 4
        %s1721 = scalar_lea.vmem %s10, %s1720
        %p1722 = scmp.lt.s32.totalorder %s24, 1
        %s1723 = scalar_select %p1722, %s24, 1
        %s1724 = smul.addr %s1723, 4
        %s1725 = scalar_lea.vmem %s11, %s1724
        // Predicated region
        $region65: #{mpt_forward.3} parent=59 // pred_check
          %p1726 = pneg %p262
        $region66: #{mpt_forward.3} parent=59 // pred_check_branch
          %1728 = sbr.rel (%p1726) target = $region68
        $region67: #{mpt_forward.3} parent=59 // pred_region
          _
        $region68: #{mpt_forward.3} parent=59 // pred_fallthru
          _
        // Predicated region
        $region69: #{mpt_forward.3} parent=59 // pred_check
          %p1729 = pneg %p288
        $region70: #{mpt_forward.3} parent=59 // pred_check_branch
          %1731 = sbr.rel (%p1729) target = $region72
        $region71: #{mpt_forward.3} parent=59 // pred_region
          _
        $region72: #{mpt_forward.3} parent=59 // pred_fallthru
          _
      $region60: #{mpt_forward.3} parent=5 // pred_fallthru
        _
      %p1732 = scmp.le.s32.totalorder 2, %s19
      // Predicated region
      $region73: #{mpt_forward.3} parent=5 // pred_check
        %p1733 = pneg %p1732
      $region74: #{mpt_forward.3} parent=5 // pred_check_branch
        %1735 = sbr.rel (%p1733) target = $region76
      $region75: #{mpt_forward.3} parent=5 // pred_region
        %s1736 = ssub.s32 %s19, 2
        // Predicated region
        $region77: #{mpt_forward.3} parent=75 // pred_check
          %p1737 = pneg %p268
        $region78: #{mpt_forward.3} parent=75 // pred_check_branch
          %1739 = sbr.rel (%p1737) target = $region80
        $region79: #{mpt_forward.3} parent=75 // pred_region
          %p1740 = scmp.lt.s32.totalorder %s25, 1
          %s1741 = scalar_select %p1740, %s25, 1
          %s1742 = smul.addr %s1741, 4
          %s1743 = scalar_lea.vmem %s10, %s1742
        $region80: #{mpt_forward.3} parent=75 // pred_fallthru
          _
        // Predicated region
        $region81: #{mpt_forward.3} parent=75 // pred_check
          %p1744 = pneg %p294
        $region82: #{mpt_forward.3} parent=75 // pred_check_branch
          %1746 = sbr.rel (%p1744) target = $region84
        $region83: #{mpt_forward.3} parent=75 // pred_region
          %p1747 = scmp.lt.s32.totalorder %s25, 1
          %s1748 = scalar_select %p1747, %s25, 1
          %s1749 = smul.addr %s1748, 4
          %s1750 = scalar_lea.vmem %s11, %s1749
        $region84: #{mpt_forward.3} parent=75 // pred_fallthru
          _
      $region76: #{mpt_forward.3} parent=5 // pred_fallthru
        _
    $region6: #{mpt_forward.3} parent=1 // loop_footer
      %s23 = sadd.s32 1, %s19
    $region7: #{mpt_forward.3} parent=1 // loop_footer_branch
      %18 = sbr.rel target = $region3
    $region8: #{mpt_forward.3} parent=1 // loop_exit
      _
    %1751 = vsyncpa [#allocation4], 1
    %s1752 = scalar_lea.sflag [#allocation4], 1
    %1753 = vsyncpa %s1752, 1

// kernel: mpt_forward.4
$region0: #{mpt_forward.4}
  #allocation0 [shape = 'u32[]', space=smem, size = 0x4, offset = 0x4, fixed_abs, tag = 'smem constant byte address 0x4 - core index']
  #allocation1 [shape = 'u32[144,128]{1,0:T(1,128)}', space=vmem, size = 0x12000, scoped, tag = 'internal scratch']
  #allocation2 [shape = 'f32[8,64]{1,0:T(8,128)}', space=vmem, size = 0x1000, scoped, tag = 'scratch operand']
  %s0 = inlined_call_operand.vmem [shape: bf16[16,128], index: 0, kind: input, shape index: {}]
  %s1 = inlined_call_operand.vmem [shape: bf16[16,128], index: 1, kind: input, shape index: {}]
  %s2 = inlined_call_operand.vmem [shape: bf16[1,128], index: 2, kind: input, shape index: {}]
  %s3 = inlined_call_operand.vmem [shape: bf16[1,128], index: 3, kind: input, shape index: {}]
  %s4 = inlined_call_operand.vmem [shape: bf16[128,256], index: 4, kind: input, shape index: {}]
  %s5 = inlined_call_operand.vmem [shape: bf16[4,128], index: 5, kind: input, shape index: {}]
  %s6 = inlined_call_operand.vmem [shape: bf16[1,128], index: 6, kind: input, shape index: {}]
  %s7 = inlined_call_operand.vmem [shape: f32[4,4], index: 7, kind: input, shape index: {}]
  %s8 = inlined_call_operand.vmem [shape: bf16[1,64], index: 8, kind: input, shape index: {}]
  %s9 = inlined_call_operand.vmem [shape: bf16[64,128], index: 9, kind: input, shape index: {}]
  %s10 = inlined_call_operand.vmem [shape: bf16[16,128], index: 10, kind: output, shape index: {0}]
  %s11 = inlined_call_operand.vmem [shape: bf16[16,128], index: 11, kind: output, shape index: {1}]
  %12 = xla_tuple %s10, %s11
  %s13 = sld [smem:[#allocation0]]
  $region81: #{mpt_forward.4} parent=0
    _
  %s15 = ssub.s32 1, %s13
  %s16 = scalar_select 0, %s15, %s13
  loop: start=0, step=1, limit=4
  $region2: #{mpt_forward.4} parent=0 // loop_pre_header
    _
  $region3: #{mpt_forward.4} parent=0 // loop_header
    %s18 = sphi 0, %s22
    %p19 = scmp.ge.s32.totalorder %s18, 4
    %s28 = sphi 0, %s30
    %s31 = sphi 0, %s28
    %s32 = sphi 0, %s31
    %s48 = sphi 0, %s32
    %s54 = sphi 0, %s56
    %s57 = sphi 0, %s54
    %s58 = sphi 0, %s57
    %s74 = sphi 0, %s58
    %s78 = sphi 0, %s78
    %s80 = sphi 0, %s78
    %s81 = sphi 0, %s80
    %s95 = sphi 0, %s81
    %s99 = sphi 0, %s99
    %s101 = sphi 0, %s99
    %s102 = sphi 0, %s101
    %s116 = sphi 0, %s102
    %s120 = sphi 0, %s120
    %s122 = sphi 0, %s120
    %s123 = sphi 0, %s122
    %s137 = sphi 0, %s123
    %s141 = sphi 0, %s141
    %s143 = sphi 0, %s141
    %s144 = sphi 0, %s143
    %s158 = sphi 0, %s144
    %s162 = sphi 0, %s162
    %s164 = sphi 0, %s162
    %s165 = sphi 0, %s164
    %s179 = sphi 0, %s165
    %s183 = sphi 0, %s183
    %s185 = sphi 0, %s183
    %s186 = sphi 0, %s185
    %s200 = sphi 0, %s186
    %s204 = sphi 0, %s204
    %s206 = sphi 0, %s204
    %s207 = sphi 0, %s206
    %s221 = sphi 0, %s207
    %s225 = sphi 0, %s225
    %s227 = sphi 0, %s225
    %s228 = sphi 0, %s227
    %s242 = sphi 0, %s228
    %s248 = sphi 0, %s250
    %s251 = sphi 0, %s248
    %s252 = sphi 0, %s251
    %s268 = sphi 0, %s252
    %s274 = sphi 0, %s276
    %s277 = sphi 0, %s274
    %s278 = sphi 0, %s277
    %s294 = sphi 0, %s278
  $region4: #{mpt_forward.4} parent=0 // loop_header_branch
    %21 = sbr.rel (%p19) target = $region8
  $region5: #{mpt_forward.4} parent=0 // loop_body
    %s23 = ssub.s32 %s18, 1
    %s24 = ssub.s32 %s18, 2
    %s25 = sadd.s32 %s18, 1
    %s26 = ssub.s32 %s18, %s25
    %p27 = scmp.eq.s32.totalorder %s26, 0
    %s29 = sadd.s32 %s28, 1
    %s30 = scalar_select %p27, %s28, %s29
    %p33 = pneg %p27
    %p34 = scmp.eq.s32.totalorder %s18, 1
    %p35 = por %p33, %p34
    %p36 = scmp.ne.s32.totalorder %s28, %s31
    %p37 = scmp.eq.s32.totalorder %s18, 0
    %p38 = por %p36, %p37
    %p39 = scmp.ne.s32.totalorder %s28, %s31
    %p40 = scmp.eq.s32.totalorder %s23, 1
    %p41 = por %p39, %p40
    %p42 = scmp.ne.s32.totalorder %s31, %s32
    %p43 = scmp.eq.s32.totalorder %s23, 0
    %p44 = por %p42, %p43
    %p45 = scmp.ne.s32.totalorder %s31, %s32
    %p46 = scmp.eq.s32.totalorder %s24, 1
    %p47 = por %p45, %p46
    %p49 = scmp.ne.s32.totalorder %s32, %s48
    %p50 = scmp.eq.s32.totalorder %s24, 0
    %p51 = por %p49, %p50
    %s52 = ssub.s32 %s18, %s25
    %p53 = scmp.eq.s32.totalorder %s52, 0
    %s55 = sadd.s32 %s54, 1
    %s56 = scalar_select %p53, %s54, %s55
    %p59 = pneg %p53
    %p60 = scmp.eq.s32.totalorder %s18, 1
    %p61 = por %p59, %p60
    %p62 = scmp.ne.s32.totalorder %s54, %s57
    %p63 = scmp.eq.s32.totalorder %s18, 0
    %p64 = por %p62, %p63
    %p65 = scmp.ne.s32.totalorder %s54, %s57
    %p66 = scmp.eq.s32.totalorder %s23, 1
    %p67 = por %p65, %p66
    %p68 = scmp.ne.s32.totalorder %s57, %s58
    %p69 = scmp.eq.s32.totalorder %s23, 0
    %p70 = por %p68, %p69
    %p71 = scmp.ne.s32.totalorder %s57, %s58
    %p72 = scmp.eq.s32.totalorder %s24, 1
    %p73 = por %p71, %p72
    %p75 = scmp.ne.s32.totalorder %s58, %s74
    %p76 = scmp.eq.s32.totalorder %s24, 0
    %p77 = por %p75, %p76
    %s79 = sadd.s32 %s78, 1
    %p82 = scmp.eq.s32.totalorder %s18, 1
    %p83 = scmp.ne.s32.totalorder %s78, %s80
    %p84 = scmp.eq.s32.totalorder %s18, 0
    %p85 = por %p83, %p84
    %p86 = scmp.ne.s32.totalorder %s78, %s80
    %p87 = scmp.eq.s32.totalorder %s23, 1
    %p88 = por %p86, %p87
    %p89 = scmp.ne.s32.totalorder %s80, %s81
    %p90 = scmp.eq.s32.totalorder %s23, 0
    %p91 = por %p89, %p90
    %p92 = scmp.ne.s32.totalorder %s80, %s81
    %p93 = scmp.eq.s32.totalorder %s24, 1
    %p94 = por %p92, %p93
    %p96 = scmp.ne.s32.totalorder %s81, %s95
    %p97 = scmp.eq.s32.totalorder %s24, 0
    %p98 = por %p96, %p97
    %s100 = sadd.s32 %s99, 1
    %p103 = scmp.eq.s32.totalorder %s18, 1
    %p104 = scmp.ne.s32.totalorder %s99, %s101
    %p105 = scmp.eq.s32.totalorder %s18, 0
    %p106 = por %p104, %p105
    %p107 = scmp.ne.s32.totalorder %s99, %s101
    %p108 = scmp.eq.s32.totalorder %s23, 1
    %p109 = por %p107, %p108
    %p110 = scmp.ne.s32.totalorder %s101, %s102
    %p111 = scmp.eq.s32.totalorder %s23, 0
    %p112 = por %p110, %p111
    %p113 = scmp.ne.s32.totalorder %s101, %s102
    %p114 = scmp.eq.s32.totalorder %s24, 1
    %p115 = por %p113, %p114
    %p117 = scmp.ne.s32.totalorder %s102, %s116
    %p118 = scmp.eq.s32.totalorder %s24, 0
    %p119 = por %p117, %p118
    %s121 = sadd.s32 %s120, 1
    %p124 = scmp.eq.s32.totalorder %s18, 1
    %p125 = scmp.ne.s32.totalorder %s120, %s122
    %p126 = scmp.eq.s32.totalorder %s18, 0
    %p127 = por %p125, %p126
    %p128 = scmp.ne.s32.totalorder %s120, %s122
    %p129 = scmp.eq.s32.totalorder %s23, 1
    %p130 = por %p128, %p129
    %p131 = scmp.ne.s32.totalorder %s122, %s123
    %p132 = scmp.eq.s32.totalorder %s23, 0
    %p133 = por %p131, %p132
    %p134 = scmp.ne.s32.totalorder %s122, %s123
    %p135 = scmp.eq.s32.totalorder %s24, 1
    %p136 = por %p134, %p135
    %p138 = scmp.ne.s32.totalorder %s123, %s137
    %p139 = scmp.eq.s32.totalorder %s24, 0
    %p140 = por %p138, %p139
    %s142 = sadd.s32 %s141, 1
    %p145 = scmp.eq.s32.totalorder %s18, 1
    %p146 = scmp.ne.s32.totalorder %s141, %s143
    %p147 = scmp.eq.s32.totalorder %s18, 0
    %p148 = por %p146, %p147
    %p149 = scmp.ne.s32.totalorder %s141, %s143
    %p150 = scmp.eq.s32.totalorder %s23, 1
    %p151 = por %p149, %p150
    %p152 = scmp.ne.s32.totalorder %s143, %s144
    %p153 = scmp.eq.s32.totalorder %s23, 0
    %p154 = por %p152, %p153
    %p155 = scmp.ne.s32.totalorder %s143, %s144
    %p156 = scmp.eq.s32.totalorder %s24, 1
    %p157 = por %p155, %p156
    %p159 = scmp.ne.s32.totalorder %s144, %s158
    %p160 = scmp.eq.s32.totalorder %s24, 0
    %p161 = por %p159, %p160
    %s163 = sadd.s32 %s162, 1
    %p166 = scmp.eq.s32.totalorder %s18, 1
    %p167 = scmp.ne.s32.totalorder %s162, %s164
    %p168 = scmp.eq.s32.totalorder %s18, 0
    %p169 = por %p167, %p168
    %p170 = scmp.ne.s32.totalorder %s162, %s164
    %p171 = scmp.eq.s32.totalorder %s23, 1
    %p172 = por %p170, %p171
    %p173 = scmp.ne.s32.totalorder %s164, %s165
    %p174 = scmp.eq.s32.totalorder %s23, 0
    %p175 = por %p173, %p174
    %p176 = scmp.ne.s32.totalorder %s164, %s165
    %p177 = scmp.eq.s32.totalorder %s24, 1
    %p178 = por %p176, %p177
    %p180 = scmp.ne.s32.totalorder %s165, %s179
    %p181 = scmp.eq.s32.totalorder %s24, 0
    %p182 = por %p180, %p181
    %s184 = sadd.s32 %s183, 1
    %p187 = scmp.eq.s32.totalorder %s18, 1
    %p188 = scmp.ne.s32.totalorder %s183, %s185
    %p189 = scmp.eq.s32.totalorder %s18, 0
    %p190 = por %p188, %p189
    %p191 = scmp.ne.s32.totalorder %s183, %s185
    %p192 = scmp.eq.s32.totalorder %s23, 1
    %p193 = por %p191, %p192
    %p194 = scmp.ne.s32.totalorder %s185, %s186
    %p195 = scmp.eq.s32.totalorder %s23, 0
    %p196 = por %p194, %p195
    %p197 = scmp.ne.s32.totalorder %s185, %s186
    %p198 = scmp.eq.s32.totalorder %s24, 1
    %p199 = por %p197, %p198
    %p201 = scmp.ne.s32.totalorder %s186, %s200
    %p202 = scmp.eq.s32.totalorder %s24, 0
    %p203 = por %p201, %p202
    %s205 = sadd.s32 %s204, 1
    %p208 = scmp.eq.s32.totalorder %s18, 1
    %p209 = scmp.ne.s32.totalorder %s204, %s206
    %p210 = scmp.eq.s32.totalorder %s18, 0
    %p211 = por %p209, %p210
    %p212 = scmp.ne.s32.totalorder %s204, %s206
    %p213 = scmp.eq.s32.totalorder %s23, 1
    %p214 = por %p212, %p213
    %p215 = scmp.ne.s32.totalorder %s206, %s207
    %p216 = scmp.eq.s32.totalorder %s23, 0
    %p217 = por %p215, %p216
    %p218 = scmp.ne.s32.totalorder %s206, %s207
    %p219 = scmp.eq.s32.totalorder %s24, 1
    %p220 = por %p218, %p219
    %p222 = scmp.ne.s32.totalorder %s207, %s221
    %p223 = scmp.eq.s32.totalorder %s24, 0
    %p224 = por %p222, %p223
    %s226 = sadd.s32 %s225, 1
    %p229 = scmp.eq.s32.totalorder %s18, 1
    %p230 = scmp.ne.s32.totalorder %s225, %s227
    %p231 = scmp.eq.s32.totalorder %s18, 0
    %p232 = por %p230, %p231
    %p233 = scmp.ne.s32.totalorder %s225, %s227
    %p234 = scmp.eq.s32.totalorder %s23, 1
    %p235 = por %p233, %p234
    %p236 = scmp.ne.s32.totalorder %s227, %s228
    %p237 = scmp.eq.s32.totalorder %s23, 0
    %p238 = por %p236, %p237
    %p239 = scmp.ne.s32.totalorder %s227, %s228
    %p240 = scmp.eq.s32.totalorder %s24, 1
    %p241 = por %p239, %p240
    %p243 = scmp.ne.s32.totalorder %s228, %s242
    %p244 = scmp.eq.s32.totalorder %s24, 0
    %p245 = por %p243, %p244
    %s246 = ssub.s32 %s18, %s25
    %p247 = scmp.eq.s32.totalorder %s246, 0
    %s249 = sadd.s32 %s248, 1
    %s250 = scalar_select %p247, %s248, %s249
    %p253 = pneg %p247
    %p254 = scmp.eq.s32.totalorder %s18, 1
    %p255 = por %p253, %p254
    %p256 = scmp.ne.s32.totalorder %s248, %s251
    %p257 = scmp.eq.s32.totalorder %s18, 0
    %p258 = por %p256, %p257
    %p259 = scmp.ne.s32.totalorder %s248, %s251
    %p260 = scmp.eq.s32.totalorder %s23, 1
    %p261 = por %p259, %p260
    %p262 = scmp.ne.s32.totalorder %s251, %s252
    %p263 = scmp.eq.s32.totalorder %s23, 0
    %p264 = por %p262, %p263
    %p265 = scmp.ne.s32.totalorder %s251, %s252
    %p266 = scmp.eq.s32.totalorder %s24, 1
    %p267 = por %p265, %p266
    %p269 = scmp.ne.s32.totalorder %s252, %s268
    %p270 = scmp.eq.s32.totalorder %s24, 0
    %p271 = por %p269, %p270
    %s272 = ssub.s32 %s18, %s25
    %p273 = scmp.eq.s32.totalorder %s272, 0
    %s275 = sadd.s32 %s274, 1
    %s276 = scalar_select %p273, %s274, %s275
    %p279 = pneg %p273
    %p280 = scmp.eq.s32.totalorder %s18, 1
    %p281 = por %p279, %p280
    %p282 = scmp.ne.s32.totalorder %s274, %s277
    %p283 = scmp.eq.s32.totalorder %s18, 0
    %p284 = por %p282, %p283
    %p285 = scmp.ne.s32.totalorder %s274, %s277
    %p286 = scmp.eq.s32.totalorder %s23, 1
    %p287 = por %p285, %p286
    %p288 = scmp.ne.s32.totalorder %s277, %s278
    %p289 = scmp.eq.s32.totalorder %s23, 0
    %p290 = por %p288, %p289
    %p291 = scmp.ne.s32.totalorder %s277, %s278
    %p292 = scmp.eq.s32.totalorder %s24, 1
    %p293 = por %p291, %p292
    %p295 = scmp.ne.s32.totalorder %s278, %s294
    %p296 = scmp.eq.s32.totalorder %s24, 0
    %p297 = por %p295, %p296
    %p298 = scmp.le.s32.totalorder 1, %s18
    %p299 = scmp.lt.s32.totalorder %s18, 3
    %p300 = pnand %p298, %p299
    %p301 = pneg %p300
    // Predicated region
    $region9: #{mpt_forward.4} parent=5 // pred_check
      _
    $region10: #{mpt_forward.4} parent=5 // pred_check_branch
      %303 = sbr.rel (%p300) target = $region12
    $region11: #{mpt_forward.4} parent=5 // pred_region
      %s304 = ssub.s32 %s18, 1
      // Predicated region
      $region13: #{mpt_forward.4} parent=11 // pred_check
        %p305 = pneg %p91
      $region14: #{mpt_forward.4} parent=11 // pred_check_branch
        %307 = sbr.rel (%p305) target = $region16
      $region15: #{mpt_forward.4} parent=11 // pred_region
        _
      $region16: #{mpt_forward.4} parent=11 // pred_fallthru
        _
      // Predicated region
      $region17: #{mpt_forward.4} parent=11 // pred_check
        %p308 = pneg %p112
      $region18: #{mpt_forward.4} parent=11 // pred_check_branch
        %310 = sbr.rel (%p308) target = $region20
      $region19: #{mpt_forward.4} parent=11 // pred_region
        _
      $region20: #{mpt_forward.4} parent=11 // pred_fallthru
        _
      // Predicated region
      $region21: #{mpt_forward.4} parent=11 // pred_check
        %p311 = pneg %p133
      $region22: #{mpt_forward.4} parent=11 // pred_check_branch
        %313 = sbr.rel (%p311) target = $region24
      $region23: #{mpt_forward.4} parent=11 // pred_region
        _
      $region24: #{mpt_forward.4} parent=11 // pred_fallthru
        _
      // Predicated region
      $region25: #{mpt_forward.4} parent=11 // pred_check
        %p314 = pneg %p154
      $region26: #{mpt_forward.4} parent=11 // pred_check_branch
        %316 = sbr.rel (%p314) target = $region28
      $region27: #{mpt_forward.4} parent=11 // pred_region
        _
      $region28: #{mpt_forward.4} parent=11 // pred_fallthru
        _
      // Predicated region
      $region29: #{mpt_forward.4} parent=11 // pred_check
        %p317 = pneg %p175
      $region30: #{mpt_forward.4} parent=11 // pred_check_branch
        %319 = sbr.rel (%p317) target = $region32
      $region31: #{mpt_forward.4} parent=11 // pred_region
        _
      $region32: #{mpt_forward.4} parent=11 // pred_fallthru
        _
      // Predicated region
      $region33: #{mpt_forward.4} parent=11 // pred_check
        %p320 = pneg %p196
      $region34: #{mpt_forward.4} parent=11 // pred_check_branch
        %322 = sbr.rel (%p320) target = $region36
      $region35: #{mpt_forward.4} parent=11 // pred_region
        _
      $region36: #{mpt_forward.4} parent=11 // pred_fallthru
        _
      // Predicated region
      $region37: #{mpt_forward.4} parent=11 // pred_check
        %p323 = pneg %p217
      $region38: #{mpt_forward.4} parent=11 // pred_check_branch
        %325 = sbr.rel (%p323) target = $region40
      $region39: #{mpt_forward.4} parent=11 // pred_region
        _
      $region40: #{mpt_forward.4} parent=11 // pred_fallthru
        _
      // Predicated region
      $region41: #{mpt_forward.4} parent=11 // pred_check
        %p326 = pneg %p238
      $region42: #{mpt_forward.4} parent=11 // pred_check_branch
        %328 = sbr.rel (%p326) target = $region44
      $region43: #{mpt_forward.4} parent=11 // pred_region
        _
      $region44: #{mpt_forward.4} parent=11 // pred_fallthru
        _
    $region12: #{mpt_forward.4} parent=5 // pred_fallthru
      _
    %p329 = scmp.lt.s32.totalorder %s18, 2
    // Predicated region
    $region45: #{mpt_forward.4} parent=5 // pred_check
      %p330 = pneg %p329
    $region46: #{mpt_forward.4} parent=5 // pred_check_branch
      %332 = sbr.rel (%p330) target = $region48
    $region47: #{mpt_forward.4} parent=5 // pred_region
      // Predicated region
      $region49: #{mpt_forward.4} parent=47 // pred_check
        %p333 = pneg %p38
      $region50: #{mpt_forward.4} parent=47 // pred_check_branch
        %335 = sbr.rel (%p333) target = $region52
      $region51: #{mpt_forward.4} parent=47 // pred_region
        %p336 = scmp.lt.s32.totalorder %s18, 1
        %s337 = scalar_select %p336, %s18, 1
        %s338 = smul.addr %s337, 4
        %s339 = scalar_lea.vmem %s0, %s338
      $region52: #{mpt_forward.4} parent=47 // pred_fallthru
        _
      // Predicated region
      $region53: #{mpt_forward.4} parent=47 // pred_check
        %p340 = pneg %p64
      $region54: #{mpt_forward.4} parent=47 // pred_check_branch
        %342 = sbr.rel (%p340) target = $region56
      $region55: #{mpt_forward.4} parent=47 // pred_region
        %p343 = scmp.lt.s32.totalorder %s18, 1
        %s344 = scalar_select %p343, %s18, 1
        %s345 = smul.addr %s344, 4
        %s346 = scalar_lea.vmem %s1, %s345
      $region56: #{mpt_forward.4} parent=47 // pred_fallthru
        _
    $region48: #{mpt_forward.4} parent=5 // pred_fallthru
      _
    %p347 = scmp.le.s32.totalorder 1, %s18
    %p348 = scmp.lt.s32.totalorder %s18, 3
    %p349 = pnand %p347, %p348
    %p350 = pneg %p349
    // Predicated region
    $region57: #{mpt_forward.4} parent=5 // pred_check
      _
    $region58: #{mpt_forward.4} parent=5 // pred_check_branch
      %352 = sbr.rel (%p349) target = $region60
    $region59: #{mpt_forward.4} parent=5 // pred_region
      %s353 = ssub.s32 %s18, 1
      %p354 = scmp.lt.s32.totalorder %s23, 1
      %s355 = scalar_select %p354, %s23, 1
      %s356 = smul.addr %s355, 4
      %s357 = scalar_lea.vmem %s0, %s356
      %p358 = pneg %p44
      %p359 = pneg %p41
      %p360 = scmp.lt.s32.totalorder %s23, 1
      %s361 = scalar_select %p360, %s23, 1
      %s362 = smul.addr %s361, 4
      %s363 = scalar_lea.vmem %s1, %s362
      %p364 = pneg %p70
      %p365 = pneg %p67
      %p366 = pneg %p91
      %p367 = pneg %p88
      %p368 = pneg %p112
      %p369 = pneg %p109
      %p370 = pneg %p133
      %p371 = pneg %p130
      %p372 = pneg %p154
      %p373 = pneg %p151
      %p374 = pneg %p175
      %p375 = pneg %p172
      %p376 = pneg %p196
      %p377 = pneg %p193
      %p378 = pneg %p217
      %p379 = pneg %p214
      %p380 = pneg %p238
      %p381 = pneg %p235
      %p382 = pneg %p264
      %p383 = pneg %p261
      %p384 = scmp.lt.s32.totalorder %s23, 1
      %s385 = scalar_select %p384, %s23, 1
      %s386 = smul.addr %s385, 4
      %s387 = scalar_lea.vmem %s10, %s386
      %p388 = pneg %p290
      %p389 = pneg %p287
      %p390 = scmp.lt.s32.totalorder %s23, 1
      %s391 = scalar_select %p390, %s23, 1
      %s392 = smul.addr %s391, 4
      %s393 = scalar_lea.vmem %s11, %s392
      %p394 = scmp.lt.s32.totalorder %s23, 1
      %s395 = scalar_select %p394, %s23, 1
      %s396 = smul.addr %s395, 4
      %s397 = scalar_lea.vmem %s0, %s396
      %p398 = scmp.lt.s32.totalorder %s23, 1
      %s399 = scalar_select %p398, %s23, 1
      %s400 = smul.addr %s399, 4
      %s401 = scalar_lea.vmem %s1, %s400
      %p402 = scmp.lt.s32.totalorder %s23, 1
      %s403 = scalar_select %p402, %s23, 1
      %s404 = smul.addr %s403, 4
      %s405 = scalar_lea.vmem %s10, %s404
      %p406 = scmp.lt.s32.totalorder %s23, 1
      %s407 = scalar_select %p406, %s23, 1
      %s408 = smul.addr %s407, 4
      %s409 = scalar_lea.vmem %s11, %s408
      %v411 = vld [vmem:[%s397] sm:$0xf]
      %v412 = vunpack.c.l.bf16 %v411
      %v413 = vld [vmem:[%s401] sm:$0xf]
      %v414 = vunpack.c.l.bf16 %v413
      %v415 = vadd.f32 %v412, %v414
      %v416 = vpack.c.bf16 %v415, %v415
      %417 = vst [vmem:[%s405] sm:$0xf] %v416
      %v418 = vlaneseq
      %v419 = vand.u32 %v418, 127
      %vm420 = vcmp.lt.s32.totalorder %v419, 32
      %421 = vadd.xlane.f32.xlu0 %v415
      %v422 = vpop.xlane.xlu0 %421
      %v423 = vrcp.pop 32.0
      %v424 = vmul.f32 %v422, %v423
      %v425 = vsub.f32 %v415, %v424
      %v426 = vmul.f32 %v425, %v425
      %v427 = vsel %vm420, %v426, 0.0
      %428 = vadd.xlane.f32.xlu0 %v427
      %v429 = vpop.xlane.xlu0 %428
      %v430 = vmul.f32 %v429, %v423
      %v431 = vadd.f32 %v430, 1e-05
      %v432 = vrsqrt.pop %v431
      %v433 = vmul.f32 %v425, %v432
      %v434 = vld [vmem:[%s2] sm:$0x1]
      %v435 = vunpack.c.l.bf16 %v434
      %v436 = vlaneseq
      %v437 = vshrl.u32 %v436, 7
      %v438 = vsub.s32 0, %v437
      %v439 = vrot.slane %v435, %v438
      %v440 = vmul.f32 %v433, %v439
      %v441 = vld [vmem:[%s3] sm:$0x1]
      %v442 = vunpack.c.l.bf16 %v441
      %v443 = vlaneseq
      %v444 = vshrl.u32 %v443, 7
      %v445 = vsub.s32 0, %v444
      %v446 = vrot.slane %v442, %v445
      %v447 = vadd.f32 %v440, %v446
      %v448 = vpack.c.bf16 %v447, %v447
      %v449 = vld [vmem:[%s4] sm:$0xff]
      %v450 = vld [vmem:[%s4 + $0x8] sm:$0xff]
      %v451 = vld [vmem:[%s4 + $0x10] sm:$0xff]
      %v452 = vld [vmem:[%s4 + $0x18] sm:$0xff]
      %v453 = vld [vmem:[%s4 + $0x20] sm:$0xff]
      %v454 = vld [vmem:[%s4 + $0x28] sm:$0xff]
      %v455 = vld [vmem:[%s4 + $0x30] sm:$0xff]
      %v456 = vld [vmem:[%s4 + $0x38] sm:$0xff]
      %v457 = vld [vmem:[%s4 + $0x40] sm:$0xff]
      %v458 = vld [vmem:[%s4 + $0x48] sm:$0xff]
      %v459 = vld [vmem:[%s4 + $0x50] sm:$0xff]
      %v460 = vld [vmem:[%s4 + $0x58] sm:$0xff]
      %v461 = vld [vmem:[%s4 + $0x60] sm:$0xff]
      %v462 = vld [vmem:[%s4 + $0x68] sm:$0xff]
      %v463 = vld [vmem:[%s4 + $0x70] sm:$0xff]
      %v464 = vld [vmem:[%s4 + $0x78] sm:$0xff]
      %v481 = vunpack.c.l.b16 %v449
      %v482 = vunpack.c.h.b16 %v449
      %v483 = vunpack.c.l.b16 %v450
      %v484 = vunpack.c.h.b16 %v450
      %v485 = vunpack.c.l.b16 %v451
      %v486 = vunpack.c.h.b16 %v451
      %v487 = vunpack.c.l.b16 %v452
      %v488 = vunpack.c.h.b16 %v452
      %v489 = vunpack.c.l.b16 %v453
      %v490 = vunpack.c.h.b16 %v453
      %v491 = vunpack.c.l.b16 %v454
      %v492 = vunpack.c.h.b16 %v454
      %v493 = vunpack.c.l.b16 %v455
      %v494 = vunpack.c.h.b16 %v455
      %v495 = vunpack.c.l.b16 %v456
      %v496 = vunpack.c.h.b16 %v456
      %v497 = vunpack.c.l.b16 %v457
      %v498 = vunpack.c.h.b16 %v457
      %v499 = vunpack.c.l.b16 %v458
      %v500 = vunpack.c.h.b16 %v458
      %v501 = vunpack.c.l.b16 %v459
      %v502 = vunpack.c.h.b16 %v459
      %v503 = vunpack.c.l.b16 %v460
      %v504 = vunpack.c.h.b16 %v460
      %v505 = vunpack.c.l.b16 %v461
      %v506 = vunpack.c.h.b16 %v461
      %v507 = vunpack.c.l.b16 %v462
      %v508 = vunpack.c.h.b16 %v462
      %v509 = vunpack.c.l.b16 %v463
      %v510 = vunpack.c.h.b16 %v463
      %v511 = vunpack.c.l.b16 %v464
      %v512 = vunpack.c.h.b16 %v464
      %v513 = vpack.c.b16 %v483, %v481
      %v514 = vpack.c.b16 %v484, %v482
      %v515 = vpack.c.b16 %v487, %v485
      %v516 = vpack.c.b16 %v488, %v486
      %v517 = vpack.c.b16 %v491, %v489
      %v518 = vpack.c.b16 %v492, %v490
      %v519 = vpack.c.b16 %v495, %v493
      %v520 = vpack.c.b16 %v496, %v494
      %v521 = vpack.c.b16 %v499, %v497
      %v522 = vpack.c.b16 %v500, %v498
      %v523 = vpack.c.b16 %v503, %v501
      %v524 = vpack.c.b16 %v504, %v502
      %v525 = vpack.c.b16 %v507, %v505
      %v526 = vpack.c.b16 %v508, %v506
      %v527 = vpack.c.b16 %v511, %v509
      %v528 = vpack.c.b16 %v512, %v510
      %545 = vmatprep.subr.bf16.mxu0 %v514
      %546 = vmatpush1.bf16.msra.mxu0 %v513
      %547 = vmatprep.subr.bf16.mxu0 %v516
      %548 = vmatpush1.bf16.msra.mxu0 %v515
      %549 = vmatprep.subr.bf16.mxu0 %v518
      %550 = vmatpush1.bf16.msra.mxu0 %v517
      %551 = vmatprep.subr.bf16.mxu0 %v520
      %552 = vmatpush1.bf16.msra.mxu0 %v519
      %553 = vmatprep.subr.bf16.mxu0 %v522
      %554 = vmatpush1.bf16.msra.mxu0 %v521
      %555 = vmatprep.subr.bf16.mxu0 %v524
      %556 = vmatpush1.bf16.msra.mxu0 %v523
      %557 = vmatprep.subr.bf16.mxu0 %v526
      %558 = vmatpush1.bf16.msra.mxu0 %v525
      %559 = vmatprep.subr.bf16.mxu0 %v528
      %560 = vmatpush1.bf16.msra.mxu0 %v527
      %561 = vmatprep.subr.bf16.mxu0 0
      %562 = vmatpush1.bf16.msra.mxu0 0
      %563 = vmatprep.subr.bf16.mxu0 0
      %564 = vmatpush1.bf16.msra.mxu0 0
      %565 = vmatprep.subr.bf16.mxu0 0
      %566 = vmatpush1.bf16.msra.mxu0 0
      %567 = vmatprep.subr.bf16.mxu0 0
      %568 = vmatpush1.bf16.msra.mxu0 0
      %569 = vmatprep.subr.bf16.mxu0 0
      %570 = vmatpush1.bf16.msra.mxu0 0
      %571 = vmatprep.subr.bf16.mxu0 0
      %572 = vmatpush1.bf16.msra.mxu0 0
      %573 = vmatprep.subr.bf16.mxu0 0
      %574 = vmatpush1.bf16.msra.mxu0 0
      %575 = vmatprep.subr.bf16.mxu0 0
      %576 = vmatpush1.bf16.msra.mxu0 0
      %577 = vmatprep.mubr.bf16.mxu0 0
      %578 = vmatmul.mubr.bf16.gmra.mrb[0].mxu0 %v448
      %v579 = vpop.f32.mrb[0].mxu0
      %v580 = vadd.f32 0.0, %v579
      %v581 = vpop.f32.mrb[0].mxu0
      %v582 = vadd.f32 0.0, %v581
      %v583 = vpop.f32.mrb[0].mxu0
      %v584 = vpop.f32.mrb[0].mxu0
      %585 = vdwg.mxu0
      %v586 = vlaneseq
      %v587 = vshrl.u32 %v586, 7
      %v588 = vld [vmem:[%s6] sm:$0x1]
      %v589 = vunpack.c.l.bf16 %v588
      %v590 = vlaneseq
      %v591 = vshrl.u32 %v590, 7
      %v592 = vsub.s32 0, %v591
      %v593 = vrot.slane %v589, %v592
      %v594 = vadd.f32 %v593, 0.0
      %v595 = vsub.s32 %v587, %v419
      %vm596 = vcmp.eq.s32.totalorder %v595, 3
      %v597 = vsel %vm596, 1, 0
      %v598 = vcvt.s32.f32 %v597
      %vm599 = vcmask 64512
      %v601 = vsel %vm599, %v598, 0
      %603 = vmatprep.subr.mxu0 0.0
      %604 = vmatpush1.msra.mxu0 %v580
      %605 = vmatprep.subr.mxu0 0.0
      %606 = vmatpush1.msra.mxu0 0.0
      %607 = vmatprep.subr.mxu0 0.0
      %608 = vmatpush1.msra.mxu0 0.0
      %609 = vmatprep.subr.mxu0 0.0
      %610 = vmatpush1.msra.mxu0 0.0
      %611 = vmatprep.subr.mxu0 0.0
      %612 = vmatpush1.msra.mxu0 0.0
      %613 = vmatprep.subr.mxu0 0.0
      %614 = vmatpush1.msra.mxu0 0.0
      %615 = vmatprep.subr.mxu0 0.0
      %616 = vmatpush1.msra.mxu0 0.0
      %617 = vmatprep.subr.mxu0 0.0
      %618 = vmatpush1.msra.mxu0 0.0
      %619 = vmatprep.subr.mxu0 0.0
      %620 = vmatpush1.msra.mxu0 0.0
      %621 = vmatprep.subr.mxu0 0.0
      %622 = vmatpush1.msra.mxu0 0.0
      %623 = vmatprep.subr.mxu0 0.0
      %624 = vmatpush1.msra.mxu0 0.0
      %625 = vmatprep.subr.mxu0 0.0
      %626 = vmatpush1.msra.mxu0 0.0
      %627 = vmatprep.subr.mxu0 0.0
      %628 = vmatpush1.msra.mxu0 0.0
      %629 = vmatprep.subr.mxu0 0.0
      %630 = vmatpush1.msra.mxu0 0.0
      %631 = vmatprep.subr.mxu0 0.0
      %632 = vmatpush1.msra.mxu0 0.0
      %633 = vmatprep.subr.mxu0 0.0
      %634 = vmatpush1.msra.mxu0 0.0
      %635 = vmatprep.subr.mxu0 0.0
      %636 = vmatpush1.msra.mxu0 0.0
      %637 = vmatprep.subr.mxu0 0.0
      %638 = vmatpush1.msra.mxu0 0.0
      %639 = vmatprep.subr.mxu0 0.0
      %640 = vmatpush1.msra.mxu0 0.0
      %641 = vmatprep.subr.mxu0 0.0
      %642 = vmatpush1.msra.mxu0 0.0
      %643 = vmatprep.subr.mxu0 0.0
      %644 = vmatpush1.msra.mxu0 0.0
      %645 = vmatprep.subr.mxu0 0.0
      %646 = vmatpush1.msra.mxu0 0.0
      %647 = vmatprep.subr.mxu0 0.0
      %648 = vmatpush1.msra.mxu0 0.0
      %649 = vmatprep.subr.mxu0 0.0
      %650 = vmatpush1.msra.mxu0 0.0
      %651 = vmatprep.subr.mxu0 0.0
      %652 = vmatpush1.msra.mxu0 0.0
      %653 = vmatprep.subr.mxu0 0.0
      %654 = vmatpush1.msra.mxu0 0.0
      %655 = vmatprep.subr.mxu0 0.0
      %656 = vmatpush1.msra.mxu0 0.0
      %657 = vmatprep.subr.mxu0 0.0
      %658 = vmatpush1.msra.mxu0 0.0
      %659 = vmatprep.subr.mxu0 0.0
      %660 = vmatpush1.msra.mxu0 0.0
      %661 = vmatprep.subr.mxu0 0.0
      %662 = vmatpush1.msra.mxu0 0.0
      %663 = vmatprep.subr.mxu0 0.0
      %664 = vmatpush1.msra.mxu0 0.0
      %665 = vmatprep.subr.mxu0 0.0
      %666 = vmatpush1.msra.mxu0 0.0
      %667 = vmatprep.mubr.f32.mxu0 0.0
      %668 = vmatmul.mubr.f32.gmra.mrb[0].mxu0 %v601
      %v669 = vpop.f32.mrb[0].mxu0
      %v670 = vadd.f32 0.0, %v669
      %v671 = vpop.f32.mrb[0].mxu0
      %672 = vdwg.mxu0
      %v673 = vld [vmem:[%s5] sm:$0x1]
      %v674 = vunpack.c.l.bf16 %v673
      %v675 = vlaneseq
      %v676 = vshrl.u32 %v675, 7
      %v677 = vsub.s32 0, %v676
      %v678 = vrot.slane %v674, %v677
      %v679 = vmul.f32 %v670, %v678
      %v680 = vadd.f32 %v594, %v679
      %vm681 = vcmp.eq.s32.totalorder %v595, 2
      %v682 = vsel %vm681, 1, 0
      %v683 = vcvt.s32.f32 %v682
      %v685 = vsel %vm599, %v683, 0
      %687 = vmatprep.subr.mxu0 0.0
      %688 = vmatpush1.msra.mxu0 %v580
      %689 = vmatprep.subr.mxu0 0.0
      %690 = vmatpush1.msra.mxu0 0.0
      %691 = vmatprep.subr.mxu0 0.0
      %692 = vmatpush1.msra.mxu0 0.0
      %693 = vmatprep.subr.mxu0 0.0
      %694 = vmatpush1.msra.mxu0 0.0
      %695 = vmatprep.subr.mxu0 0.0
      %696 = vmatpush1.msra.mxu0 0.0
      %697 = vmatprep.subr.mxu0 0.0
      %698 = vmatpush1.msra.mxu0 0.0
      %699 = vmatprep.subr.mxu0 0.0
      %700 = vmatpush1.msra.mxu0 0.0
      %701 = vmatprep.subr.mxu0 0.0
      %702 = vmatpush1.msra.mxu0 0.0
      %703 = vmatprep.subr.mxu0 0.0
      %704 = vmatpush1.msra.mxu0 0.0
      %705 = vmatprep.subr.mxu0 0.0
      %706 = vmatpush1.msra.mxu0 0.0
      %707 = vmatprep.subr.mxu0 0.0
      %708 = vmatpush1.msra.mxu0 0.0
      %709 = vmatprep.subr.mxu0 0.0
      %710 = vmatpush1.msra.mxu0 0.0
      %711 = vmatprep.subr.mxu0 0.0
      %712 = vmatpush1.msra.mxu0 0.0
      %713 = vmatprep.subr.mxu0 0.0
      %714 = vmatpush1.msra.mxu0 0.0
      %715 = vmatprep.subr.mxu0 0.0
      %716 = vmatpush1.msra.mxu0 0.0
      %717 = vmatprep.subr.mxu0 0.0
      %718 = vmatpush1.msra.mxu0 0.0
      %719 = vmatprep.subr.mxu0 0.0
      %720 = vmatpush1.msra.mxu0 0.0
      %721 = vmatprep.subr.mxu0 0.0
      %722 = vmatpush1.msra.mxu0 0.0
      %723 = vmatprep.subr.mxu0 0.0
      %724 = vmatpush1.msra.mxu0 0.0
      %725 = vmatprep.subr.mxu0 0.0
      %726 = vmatpush1.msra.mxu0 0.0
      %727 = vmatprep.subr.mxu0 0.0
      %728 = vmatpush1.msra.mxu0 0.0
      %729 = vmatprep.subr.mxu0 0.0
      %730 = vmatpush1.msra.mxu0 0.0
      %731 = vmatprep.subr.mxu0 0.0
      %732 = vmatpush1.msra.mxu0 0.0
      %733 = vmatprep.subr.mxu0 0.0
      %734 = vmatpush1.msra.mxu0 0.0
      %735 = vmatprep.subr.mxu0 0.0
      %736 = vmatpush1.msra.mxu0 0.0
      %737 = vmatprep.subr.mxu0 0.0
      %738 = vmatpush1.msra.mxu0 0.0
      %739 = vmatprep.subr.mxu0 0.0
      %740 = vmatpush1.msra.mxu0 0.0
      %741 = vmatprep.subr.mxu0 0.0
      %742 = vmatpush1.msra.mxu0 0.0
      %743 = vmatprep.subr.mxu0 0.0
      %744 = vmatpush1.msra.mxu0 0.0
      %745 = vmatprep.subr.mxu0 0.0
      %746 = vmatpush1.msra.mxu0 0.0
      %747 = vmatprep.subr.mxu0 0.0
      %748 = vmatpush1.msra.mxu0 0.0
      %749 = vmatprep.subr.mxu0 0.0
      %750 = vmatpush1.msra.mxu0 0.0
      %751 = vmatprep.mubr.f32.mxu0 0.0
      %752 = vmatmul.mubr.f32.gmra.mrb[0].mxu0 %v685
      %v753 = vpop.f32.mrb[0].mxu0
      %v754 = vadd.f32 0.0, %v753
      %v755 = vpop.f32.mrb[0].mxu0
      %756 = vdwg.mxu0
      %v757 = vlaneseq
      %v758 = vshrl.u32 %v757, 7
      %v759 = vsub.s32 1, %v758
      %v760 = vrot.slane %v674, %v759
      %v761 = vmul.f32 %v754, %v760
      %v762 = vadd.f32 %v680, %v761
      %vm763 = vcmp.eq.s32.totalorder %v595, 1
      %v764 = vsel %vm763, 1, 0
      %v765 = vcvt.s32.f32 %v764
      %v767 = vsel %vm599, %v765, 0
      %769 = vmatprep.subr.mxu0 0.0
      %770 = vmatpush1.msra.mxu0 %v580
      %771 = vmatprep.subr.mxu0 0.0
      %772 = vmatpush1.msra.mxu0 0.0
      %773 = vmatprep.subr.mxu0 0.0
      %774 = vmatpush1.msra.mxu0 0.0
      %775 = vmatprep.subr.mxu0 0.0
      %776 = vmatpush1.msra.mxu0 0.0
      %777 = vmatprep.subr.mxu0 0.0
      %778 = vmatpush1.msra.mxu0 0.0
      %779 = vmatprep.subr.mxu0 0.0
      %780 = vmatpush1.msra.mxu0 0.0
      %781 = vmatprep.subr.mxu0 0.0
      %782 = vmatpush1.msra.mxu0 0.0
      %783 = vmatprep.subr.mxu0 0.0
      %784 = vmatpush1.msra.mxu0 0.0
      %785 = vmatprep.subr.mxu0 0.0
      %786 = vmatpush1.msra.mxu0 0.0
      %787 = vmatprep.subr.mxu0 0.0
      %788 = vmatpush1.msra.mxu0 0.0
      %789 = vmatprep.subr.mxu0 0.0
      %790 = vmatpush1.msra.mxu0 0.0
      %791 = vmatprep.subr.mxu0 0.0
      %792 = vmatpush1.msra.mxu0 0.0
      %793 = vmatprep.subr.mxu0 0.0
      %794 = vmatpush1.msra.mxu0 0.0
      %795 = vmatprep.subr.mxu0 0.0
      %796 = vmatpush1.msra.mxu0 0.0
      %797 = vmatprep.subr.mxu0 0.0
      %798 = vmatpush1.msra.mxu0 0.0
      %799 = vmatprep.subr.mxu0 0.0
      %800 = vmatpush1.msra.mxu0 0.0
      %801 = vmatprep.subr.mxu0 0.0
      %802 = vmatpush1.msra.mxu0 0.0
      %803 = vmatprep.subr.mxu0 0.0
      %804 = vmatpush1.msra.mxu0 0.0
      %805 = vmatprep.subr.mxu0 0.0
      %806 = vmatpush1.msra.mxu0 0.0
      %807 = vmatprep.subr.mxu0 0.0
      %808 = vmatpush1.msra.mxu0 0.0
      %809 = vmatprep.subr.mxu0 0.0
      %810 = vmatpush1.msra.mxu0 0.0
      %811 = vmatprep.subr.mxu0 0.0
      %812 = vmatpush1.msra.mxu0 0.0
      %813 = vmatprep.subr.mxu0 0.0
      %814 = vmatpush1.msra.mxu0 0.0
      %815 = vmatprep.subr.mxu0 0.0
      %816 = vmatpush1.msra.mxu0 0.0
      %817 = vmatprep.subr.mxu0 0.0
      %818 = vmatpush1.msra.mxu0 0.0
      %819 = vmatprep.subr.mxu0 0.0
      %820 = vmatpush1.msra.mxu0 0.0
      %821 = vmatprep.subr.mxu0 0.0
      %822 = vmatpush1.msra.mxu0 0.0
      %823 = vmatprep.subr.mxu0 0.0
      %824 = vmatpush1.msra.mxu0 0.0
      %825 = vmatprep.subr.mxu0 0.0
      %826 = vmatpush1.msra.mxu0 0.0
      %827 = vmatprep.subr.mxu0 0.0
      %828 = vmatpush1.msra.mxu0 0.0
      %829 = vmatprep.subr.mxu0 0.0
      %830 = vmatpush1.msra.mxu0 0.0
      %831 = vmatprep.subr.mxu0 0.0
      %832 = vmatpush1.msra.mxu0 0.0
      %833 = vmatprep.mubr.f32.mxu0 0.0
      %834 = vmatmul.mubr.f32.gmra.mrb[0].mxu0 %v767
      %v835 = vpop.f32.mrb[0].mxu0
      %v836 = vadd.f32 0.0, %v835
      %v837 = vpop.f32.mrb[0].mxu0
      %838 = vdwg.mxu0
      %v839 = vld [vmem:[%s5] sm:$0x2]
      %v840 = vunpack.c.l.bf16 %v839
      %v841 = vlaneseq
      %v842 = vshrl.u32 %v841, 7
      %v843 = vsub.s32 2, %v842
      %v844 = vrot.slane %v840, %v843
      %v845 = vmul.f32 %v836, %v844
      %v846 = vadd.f32 %v762, %v845
      %v847 = vlaneseq
      %v848 = vshrl.u32 %v847, 7
      %v849 = vsub.s32 3, %v848
      %v850 = vrot.slane %v840, %v849
      %v851 = vmul.f32 %v580, %v850
      %v852 = vadd.f32 %v846, %v851
      %v853 = vxor.u32 %v852, 2147483648
      %v854 = vmul.f32 %v853, 1.442695
      %v855 = vpow.pop %v854
      %v856 = vadd.f32 %v855, 1.0
      %v857 = vrcp.pop %v856
      %v858 = vmul.f32 1.0, %v857
      %v859 = vmul.f32 %v852, %v858
      %v860 = vld [vmem:[%s7] sm:$0x1]
      %v861 = vlaneseq
      %v862 = vshrl.u32 %v861, 7
      %v863 = vsub.s32 0, %v862
      %v864 = vrot.slane %v860, %v863
      %866 = vrot.lane.b32.xlu0 %v864, 64
      %v867 = vpop.permute.xlu0 %866
      %v869 = vadd.f32 %v582, %v867
      %v870 = vmax.f32 %v869, 0.0
      %v871 = vand.u32 2147483647, %v869
      %v872 = vsub.f32 0.0, %v871
      %v873 = vmul.f32 %v872, 1.442695
      %v874 = vpow.pop %v873
      %v875 = vadd.f32 %v874, 1.0
      %v876 = vlog2.pop %v875
      %v877 = vmul.f32 %v876, 0.6931472
      %v878 = vadd.f32 %v870, %v877
      %v879 = vld [vmem:[%s7 + $0x1] sm:$0x1]
      %v880 = vmul.f32 %v879, 1.442695
      %v881 = vpow.pop %v880
      %v882 = vsub.f32 0.0, %v881
      %v883 = vlaneseq
      %v884 = vshrl.u32 %v883, 7
      %v885 = vsub.s32 0, %v884
      %v886 = vrot.slane %v882, %v885
      %888 = vrot.lane.b32.xlu0 %v886, 64
      %v889 = vpop.permute.xlu0 %888
      %v891 = vmul.f32 %v878, %v889
      %vm892 = vcmp.le.s32.totalorder %v419, %v587
      %v893 = vsel %vm892, 1, 0
      %v894 = vcvt.s32.f32 %v893
      %vm895 = vcmp.le.s32.totalorder %v587, %v419
      %v896 = vsel %vm895, 1, 0
      %v897 = vcvt.s32.f32 %v896
      %899 = vrot.lane.b32.xlu0 %v891, 64
      %v900 = vpop.permute.xlu0 %899
      %v903 = vsel %vm599, %v894, 0
      %905 = vmatprep.subr.mxu0 0.0
      %906 = vmatpush1.msra.mxu0 %v900
      %907 = vmatprep.subr.mxu0 0.0
      %908 = vmatpush1.msra.mxu0 0.0
      %909 = vmatprep.subr.mxu0 0.0
      %910 = vmatpush1.msra.mxu0 0.0
      %911 = vmatprep.subr.mxu0 0.0
      %912 = vmatpush1.msra.mxu0 0.0
      %913 = vmatprep.subr.mxu0 0.0
      %914 = vmatpush1.msra.mxu0 0.0
      %915 = vmatprep.subr.mxu0 0.0
      %916 = vmatpush1.msra.mxu0 0.0
      %917 = vmatprep.subr.mxu0 0.0
      %918 = vmatpush1.msra.mxu0 0.0
      %919 = vmatprep.subr.mxu0 0.0
      %920 = vmatpush1.msra.mxu0 0.0
      %921 = vmatprep.subr.mxu0 0.0
      %922 = vmatpush1.msra.mxu0 0.0
      %923 = vmatprep.subr.mxu0 0.0
      %924 = vmatpush1.msra.mxu0 0.0
      %925 = vmatprep.subr.mxu0 0.0
      %926 = vmatpush1.msra.mxu0 0.0
      %927 = vmatprep.subr.mxu0 0.0
      %928 = vmatpush1.msra.mxu0 0.0
      %929 = vmatprep.subr.mxu0 0.0
      %930 = vmatpush1.msra.mxu0 0.0
      %931 = vmatprep.subr.mxu0 0.0
      %932 = vmatpush1.msra.mxu0 0.0
      %933 = vmatprep.subr.mxu0 0.0
      %934 = vmatpush1.msra.mxu0 0.0
      %935 = vmatprep.subr.mxu0 0.0
      %936 = vmatpush1.msra.mxu0 0.0
      %937 = vmatprep.subr.mxu0 0.0
      %938 = vmatpush1.msra.mxu0 0.0
      %939 = vmatprep.subr.mxu0 0.0
      %940 = vmatpush1.msra.mxu0 0.0
      %941 = vmatprep.subr.mxu0 0.0
      %942 = vmatpush1.msra.mxu0 0.0
      %943 = vmatprep.subr.mxu0 0.0
      %944 = vmatpush1.msra.mxu0 0.0
      %945 = vmatprep.subr.mxu0 0.0
      %946 = vmatpush1.msra.mxu0 0.0
      %947 = vmatprep.subr.mxu0 0.0
      %948 = vmatpush1.msra.mxu0 0.0
      %949 = vmatprep.subr.mxu0 0.0
      %950 = vmatpush1.msra.mxu0 0.0
      %951 = vmatprep.subr.mxu0 0.0
      %952 = vmatpush1.msra.mxu0 0.0
      %953 = vmatprep.subr.mxu0 0.0
      %954 = vmatpush1.msra.mxu0 0.0
      %955 = vmatprep.subr.mxu0 0.0
      %956 = vmatpush1.msra.mxu0 0.0
      %957 = vmatprep.subr.mxu0 0.0
      %958 = vmatpush1.msra.mxu0 0.0
      %959 = vmatprep.subr.mxu0 0.0
      %960 = vmatpush1.msra.mxu0 0.0
      %961 = vmatprep.subr.mxu0 0.0
      %962 = vmatpush1.msra.mxu0 0.0
      %963 = vmatprep.subr.mxu0 0.0
      %964 = vmatpush1.msra.mxu0 0.0
      %965 = vmatprep.subr.mxu0 0.0
      %966 = vmatpush1.msra.mxu0 0.0
      %967 = vmatprep.subr.mxu0 0.0
      %968 = vmatpush1.msra.mxu0 0.0
      %969 = vmatprep.mubr.f32.mxu0 0.0
      %970 = vmatmul.mubr.f32.gmra.mrb[0].mxu0 %v903
      %v971 = vpop.f32.mrb[0].mxu0
      %v972 = vadd.f32 0.0, %v971
      %v973 = vpop.f32.mrb[0].mxu0
      %974 = vdwg.mxu0
      %975 = vxpose.xlu0.b32.start [1/16] %v900, 128
      %976 = vxpose.xlu0.b32.cont [2/16] 0.0, 128
      %977 = vxpose.xlu0.b32.cont [3/16] 0.0, 128
      %978 = vxpose.xlu0.b32.cont [4/16] 0.0, 128
      %979 = vxpose.xlu0.b32.cont [5/16] 0.0, 128
      %980 = vxpose.xlu0.b32.cont [6/16] 0.0, 128
      %981 = vxpose.xlu0.b32.cont [7/16] 0.0, 128
      %982 = vxpose.xlu0.b32.cont [8/16] 0.0, 128
      %983 = vxpose.xlu0.b32.cont [9/16] 0.0, 128
      %984 = vxpose.xlu0.b32.cont [10/16] 0.0, 128
      %985 = vxpose.xlu0.b32.cont [11/16] 0.0, 128
      %986 = vxpose.xlu0.b32.cont [12/16] 0.0, 128
      %987 = vxpose.xlu0.b32.cont [13/16] 0.0, 128
      %988 = vxpose.xlu0.b32.cont [14/16] 0.0, 128
      %989 = vxpose.xlu0.b32.cont [15/16] 0.0, 128
      %990 = vxpose.xlu0.b32.end [16/16] 0.0, 128
      %v991 = vpop.trf.xlu0
      %v992 = vpop.trf.xlu0
      %v993 = vpop.trf.xlu0
      %v994 = vpop.trf.xlu0
      %v995 = vpop.trf.xlu0
      %v996 = vpop.trf.xlu0
      %v997 = vpop.trf.xlu0
      %v998 = vpop.trf.xlu0
      %v999 = vpop.trf.xlu0
      %v1000 = vpop.trf.xlu0
      %v1001 = vpop.trf.xlu0
      %v1002 = vpop.trf.xlu0
      %v1003 = vpop.trf.xlu0
      %v1004 = vpop.trf.xlu0
      %v1005 = vpop.trf.xlu0
      %v1006 = vpop.trf.xlu0
      %v1008 = vsel %vm599, %v991, 0
      %1010 = vmatprep.subr.mxu0 0.0
      %1011 = vmatpush1.msra.mxu0 %v897
      %1012 = vmatprep.subr.mxu0 0.0
      %1013 = vmatpush1.msra.mxu0 0.0
      %1014 = vmatprep.subr.mxu0 0.0
      %1015 = vmatpush1.msra.mxu0 0.0
      %1016 = vmatprep.subr.mxu0 0.0
      %1017 = vmatpush1.msra.mxu0 0.0
      %1018 = vmatprep.subr.mxu0 0.0
      %1019 = vmatpush1.msra.mxu0 0.0
      %1020 = vmatprep.subr.mxu0 0.0
      %1021 = vmatpush1.msra.mxu0 0.0
      %1022 = vmatprep.subr.mxu0 0.0
      %1023 = vmatpush1.msra.mxu0 0.0
      %1024 = vmatprep.subr.mxu0 0.0
      %1025 = vmatpush1.msra.mxu0 0.0
      %1026 = vmatprep.subr.mxu0 0.0
      %1027 = vmatpush1.msra.mxu0 0.0
      %1028 = vmatprep.subr.mxu0 0.0
      %1029 = vmatpush1.msra.mxu0 0.0
      %1030 = vmatprep.subr.mxu0 0.0
      %1031 = vmatpush1.msra.mxu0 0.0
      %1032 = vmatprep.subr.mxu0 0.0
      %1033 = vmatpush1.msra.mxu0 0.0
      %1034 = vmatprep.subr.mxu0 0.0
      %1035 = vmatpush1.msra.mxu0 0.0
      %1036 = vmatprep.subr.mxu0 0.0
      %1037 = vmatpush1.msra.mxu0 0.0
      %1038 = vmatprep.subr.mxu0 0.0
      %1039 = vmatpush1.msra.mxu0 0.0
      %1040 = vmatprep.subr.mxu0 0.0
      %1041 = vmatpush1.msra.mxu0 0.0
      %1042 = vmatprep.subr.mxu0 0.0
      %1043 = vmatpush1.msra.mxu0 0.0
      %1044 = vmatprep.subr.mxu0 0.0
      %1045 = vmatpush1.msra.mxu0 0.0
      %1046 = vmatprep.subr.mxu0 0.0
      %1047 = vmatpush1.msra.mxu0 0.0
      %1048 = vmatprep.subr.mxu0 0.0
      %1049 = vmatpush1.msra.mxu0 0.0
      %1050 = vmatprep.subr.mxu0 0.0
      %1051 = vmatpush1.msra.mxu0 0.0
      %1052 = vmatprep.subr.mxu0 0.0
      %1053 = vmatpush1.msra.mxu0 0.0
      %1054 = vmatprep.subr.mxu0 0.0
      %1055 = vmatpush1.msra.mxu0 0.0
      %1056 = vmatprep.subr.mxu0 0.0
      %1057 = vmatpush1.msra.mxu0 0.0
      %1058 = vmatprep.subr.mxu0 0.0
      %1059 = vmatpush1.msra.mxu0 0.0
      %1060 = vmatprep.subr.mxu0 0.0
      %1061 = vmatpush1.msra.mxu0 0.0
      %1062 = vmatprep.subr.mxu0 0.0
      %1063 = vmatpush1.msra.mxu0 0.0
      %1064 = vmatprep.subr.mxu0 0.0
      %1065 = vmatpush1.msra.mxu0 0.0
      %1066 = vmatprep.subr.mxu0 0.0
      %1067 = vmatpush1.msra.mxu0 0.0
      %1068 = vmatprep.subr.mxu0 0.0
      %1069 = vmatpush1.msra.mxu0 0.0
      %1070 = vmatprep.subr.mxu0 0.0
      %1071 = vmatpush1.msra.mxu0 0.0
      %1072 = vmatprep.subr.mxu0 0.0
      %1073 = vmatpush1.msra.mxu0 0.0
      %1074 = vmatprep.mubr.f32.mxu0 0.0
      %1075 = vmatmul.mubr.f32.gmra.mrb[0].mxu0 %v1008
      %v1076 = vpop.f32.mrb[0].mxu0
      %v1077 = vadd.f32 0.0, %v1076
      %v1078 = vpop.f32.mrb[0].mxu0
      %1079 = vdwg.mxu0
      %1081 = vrot.lane.b32.xlu0 %v859, 48
      %v1082 = vpop.permute.xlu0 %1081
      %1083 = vrot.lane.b32.xlu0 %v859, 64
      %v1084 = vpop.permute.xlu0 %1083
      %vm1085 = vcmask 130048
      %v1086 = vsel %vm1085, %v1082, 0
      %v1088 = vsel %vm1085, %v1084, 0
      %1090 = vmatprep.subr.mxu0 0.0
      %1091 = vmatpush1.xpose.msra.mxu0 %v1088
      %1092 = vmatprep.subr.mxu0 0.0
      %1093 = vmatpush1.xpose.msra.mxu0 0.0
      %1094 = vmatprep.subr.mxu0 0.0
      %1095 = vmatpush1.xpose.msra.mxu0 0.0
      %1096 = vmatprep.subr.mxu0 0.0
      %1097 = vmatpush1.xpose.msra.mxu0 0.0
      %1098 = vmatprep.subr.mxu0 0.0
      %1099 = vmatpush1.xpose.msra.mxu0 0.0
      %1100 = vmatprep.subr.mxu0 0.0
      %1101 = vmatpush1.xpose.msra.mxu0 0.0
      %1102 = vmatprep.subr.mxu0 0.0
      %1103 = vmatpush1.xpose.msra.mxu0 0.0
      %1104 = vmatprep.subr.mxu0 0.0
      %1105 = vmatpush1.xpose.msra.mxu0 0.0
      %1106 = vmatprep.subr.mxu0 0.0
      %1107 = vmatpush1.xpose.msra.mxu0 0.0
      %1108 = vmatprep.subr.mxu0 0.0
      %1109 = vmatpush1.xpose.msra.mxu0 0.0
      %1110 = vmatprep.subr.mxu0 0.0
      %1111 = vmatpush1.xpose.msra.mxu0 0.0
      %1112 = vmatprep.subr.mxu0 0.0
      %1113 = vmatpush1.xpose.msra.mxu0 0.0
      %1114 = vmatprep.subr.mxu0 0.0
      %1115 = vmatpush1.xpose.msra.mxu0 0.0
      %1116 = vmatprep.subr.mxu0 0.0
      %1117 = vmatpush1.xpose.msra.mxu0 0.0
      %1118 = vmatprep.subr.mxu0 0.0
      %1119 = vmatpush1.xpose.msra.mxu0 0.0
      %1120 = vmatprep.subr.mxu0 0.0
      %1121 = vmatpush1.xpose.msra.mxu0 0.0
      %1122 = vmatprep.subr.mxu0 0.0
      %1123 = vmatpush1.xpose.msra.mxu0 0.0
      %1124 = vmatprep.subr.mxu0 0.0
      %1125 = vmatpush1.xpose.msra.mxu0 0.0
      %1126 = vmatprep.subr.mxu0 0.0
      %1127 = vmatpush1.xpose.msra.mxu0 0.0
      %1128 = vmatprep.subr.mxu0 0.0
      %1129 = vmatpush1.xpose.msra.mxu0 0.0
      %1130 = vmatprep.subr.mxu0 0.0
      %1131 = vmatpush1.xpose.msra.mxu0 0.0
      %1132 = vmatprep.subr.mxu0 0.0
      %1133 = vmatpush1.xpose.msra.mxu0 0.0
      %1134 = vmatprep.subr.mxu0 0.0
      %1135 = vmatpush1.xpose.msra.mxu0 0.0
      %1136 = vmatprep.subr.mxu0 0.0
      %1137 = vmatpush1.xpose.msra.mxu0 0.0
      %1138 = vmatprep.subr.mxu0 0.0
      %1139 = vmatpush1.xpose.msra.mxu0 0.0
      %1140 = vmatprep.subr.mxu0 0.0
      %1141 = vmatpush1.xpose.msra.mxu0 0.0
      %1142 = vmatprep.subr.mxu0 0.0
      %1143 = vmatpush1.xpose.msra.mxu0 0.0
      %1144 = vmatprep.subr.mxu0 0.0
      %1145 = vmatpush1.xpose.msra.mxu0 0.0
      %1146 = vmatprep.subr.mxu0 0.0
      %1147 = vmatpush1.xpose.msra.mxu0 0.0
      %1148 = vmatprep.subr.mxu0 0.0
      %1149 = vmatpush1.xpose.msra.mxu0 0.0
      %1150 = vmatprep.subr.mxu0 0.0
      %1151 = vmatpush1.xpose.msra.mxu0 0.0
      %1152 = vmatprep.subr.mxu0 0.0
      %1153 = vmatpush1.xpose.msra.mxu0 0.0
      %1154 = vmatprep.mubr.f32.mxu0 0.0
      %1155 = vmatmul.mubr.f32.gmra.mrb[0].mxu0 %v1086
      %v1156 = vpop.f32.mrb[0].mxu0
      %v1157 = vadd.f32 0.0, %v1156
      %v1158 = vpop.f32.mrb[0].mxu0
      %1159 = vdwg.mxu0
      %1161 = vset.pattern.permute.xlu0 0
      %1162 = vperm.xlu0 %1161, %v972
      %v1163 = vpop.permute.xlu0 %1162
      %v1165 = vlaneseq
      %v1166 = vshrl.u32 %v1165, 7
      %v1167 = vsub.s32 0, %v1166
      %v1168 = vrot.slane %v1077, %v1167
      %v1169 = vsub.f32 %v1163, %v1168
      %v1170 = vsel %vm892, %v1169, -1e+30
      %v1171 = vmul.f32 %v1170, 1.442695
      %v1172 = vpow.pop %v1171
      %v1173 = vmul.f32 %v1172, %v1157
      %1175 = vset.pattern.permute.xlu0 64
      %1176 = vperm.xlu0 %1175, %v878
      %v1177 = vpop.permute.xlu0 %1176
      %v1179 = vmul.f32 %v859, %v1177
      %v1180 = vld [vmem:[%s7 + $0x2] sm:$0x1]
      %s1182 = vtos %v1180
      %v1183 = vstv %s1182
      %v1185 = vmul.f32 %v1183, %v859
      %v1187 = vsel %vm599, %v1173, 0
      %1189 = vmatprep.subr.mxu0 0.0
      %1190 = vmatpush1.msra.mxu0 %v1179
      %1191 = vmatprep.subr.mxu0 0.0
      %1192 = vmatpush1.msra.mxu0 0.0
      %1193 = vmatprep.subr.mxu0 0.0
      %1194 = vmatpush1.msra.mxu0 0.0
      %1195 = vmatprep.subr.mxu0 0.0
      %1196 = vmatpush1.msra.mxu0 0.0
      %1197 = vmatprep.subr.mxu0 0.0
      %1198 = vmatpush1.msra.mxu0 0.0
      %1199 = vmatprep.subr.mxu0 0.0
      %1200 = vmatpush1.msra.mxu0 0.0
      %1201 = vmatprep.subr.mxu0 0.0
      %1202 = vmatpush1.msra.mxu0 0.0
      %1203 = vmatprep.subr.mxu0 0.0
      %1204 = vmatpush1.msra.mxu0 0.0
      %1205 = vmatprep.subr.mxu0 0.0
      %1206 = vmatpush1.msra.mxu0 0.0
      %1207 = vmatprep.subr.mxu0 0.0
      %1208 = vmatpush1.msra.mxu0 0.0
      %1209 = vmatprep.subr.mxu0 0.0
      %1210 = vmatpush1.msra.mxu0 0.0
      %1211 = vmatprep.subr.mxu0 0.0
      %1212 = vmatpush1.msra.mxu0 0.0
      %1213 = vmatprep.subr.mxu0 0.0
      %1214 = vmatpush1.msra.mxu0 0.0
      %1215 = vmatprep.subr.mxu0 0.0
      %1216 = vmatpush1.msra.mxu0 0.0
      %1217 = vmatprep.subr.mxu0 0.0
      %1218 = vmatpush1.msra.mxu0 0.0
      %1219 = vmatprep.subr.mxu0 0.0
      %1220 = vmatpush1.msra.mxu0 0.0
      %1221 = vmatprep.subr.mxu0 0.0
      %1222 = vmatpush1.msra.mxu0 0.0
      %1223 = vmatprep.subr.mxu0 0.0
      %1224 = vmatpush1.msra.mxu0 0.0
      %1225 = vmatprep.subr.mxu0 0.0
      %1226 = vmatpush1.msra.mxu0 0.0
      %1227 = vmatprep.subr.mxu0 0.0
      %1228 = vmatpush1.msra.mxu0 0.0
      %1229 = vmatprep.subr.mxu0 0.0
      %1230 = vmatpush1.msra.mxu0 0.0
      %1231 = vmatprep.subr.mxu0 0.0
      %1232 = vmatpush1.msra.mxu0 0.0
      %1233 = vmatprep.subr.mxu0 0.0
      %1234 = vmatpush1.msra.mxu0 0.0
      %1235 = vmatprep.subr.mxu0 0.0
      %1236 = vmatpush1.msra.mxu0 0.0
      %1237 = vmatprep.subr.mxu0 0.0
      %1238 = vmatpush1.msra.mxu0 0.0
      %1239 = vmatprep.subr.mxu0 0.0
      %1240 = vmatpush1.msra.mxu0 0.0
      %1241 = vmatprep.subr.mxu0 0.0
      %1242 = vmatpush1.msra.mxu0 0.0
      %1243 = vmatprep.subr.mxu0 0.0
      %1244 = vmatpush1.msra.mxu0 0.0
      %1245 = vmatprep.subr.mxu0 0.0
      %1246 = vmatpush1.msra.mxu0 0.0
      %1247 = vmatprep.subr.mxu0 0.0
      %1248 = vmatpush1.msra.mxu0 0.0
      %1249 = vmatprep.subr.mxu0 0.0
      %1250 = vmatpush1.msra.mxu0 0.0
      %1251 = vmatprep.subr.mxu0 0.0
      %1252 = vmatpush1.msra.mxu0 0.0
      %1253 = vmatprep.mubr.f32.mxu0 0.0
      %1254 = vmatmul.mubr.f32.gmra.mrb[0].mxu0 %v1187
      %v1255 = vpop.f32.mrb[0].mxu0
      %v1256 = vadd.f32 %v1185, %v1255
      %v1257 = vpop.f32.mrb[0].mxu0
      %1258 = vdwg.mxu0
      %1259 = vst.msk [vmem:[#allocation2] sm:$0xff] %vm1085, %v1256
      %1260 = vset.pattern.permute.xlu0 1
      %1261 = vperm.xlu0 %1260, %v972
      %v1262 = vpop.permute.xlu0 %1261
      %v1264 = vlaneseq
      %v1265 = vshrl.u32 %v1264, 7
      %v1266 = vsub.s32 1, %v1265
      %v1267 = vrot.slane %v1077, %v1266
      %v1268 = vsub.f32 %v1262, %v1267
      %v1269 = vsel %vm892, %v1268, -1e+30
      %v1270 = vmul.f32 %v1269, 1.442695
      %v1271 = vpow.pop %v1270
      %v1272 = vmul.f32 %v1271, %v1157
      %1273 = vset.pattern.permute.xlu0 65
      %1274 = vperm.xlu0 %1273, %v878
      %v1275 = vpop.permute.xlu0 %1274
      %v1277 = vmul.f32 %v859, %v1275
      %v1278 = vld [vmem:[%s7 + $0x2] sm:$0x1]
      %1280 = vrot.lane.b32.xlu0 %v1278, 127
      %v1281 = vpop.permute.xlu0 %1280
      %s1282 = vtos %v1281
      %v1283 = vstv %s1282
      %v1285 = vmul.f32 %v1283, %v859
      %1287 = vrot.lane.b32.xlu0 %v1277, 112
      %v1288 = vpop.permute.xlu0 %1287
      %1291 = vrot.lane.b32.xlu0 %v1285, 112
      %v1292 = vpop.permute.xlu0 %1291
      %v1295 = vsel %vm599, %v1272, 0
      %1297 = vmatprep.subr.mxu0 0.0
      %1298 = vmatpush1.msra.mxu0 %v1288
      %1299 = vmatprep.subr.mxu0 0.0
      %1300 = vmatpush1.msra.mxu0 0.0
      %1301 = vmatprep.subr.mxu0 0.0
      %1302 = vmatpush1.msra.mxu0 0.0
      %1303 = vmatprep.subr.mxu0 0.0
      %1304 = vmatpush1.msra.mxu0 0.0
      %1305 = vmatprep.subr.mxu0 0.0
      %1306 = vmatpush1.msra.mxu0 0.0
      %1307 = vmatprep.subr.mxu0 0.0
      %1308 = vmatpush1.msra.mxu0 0.0
      %1309 = vmatprep.subr.mxu0 0.0
      %1310 = vmatpush1.msra.mxu0 0.0
      %1311 = vmatprep.subr.mxu0 0.0
      %1312 = vmatpush1.msra.mxu0 0.0
      %1313 = vmatprep.subr.mxu0 0.0
      %1314 = vmatpush1.msra.mxu0 0.0
      %1315 = vmatprep.subr.mxu0 0.0
      %1316 = vmatpush1.msra.mxu0 0.0
      %1317 = vmatprep.subr.mxu0 0.0
      %1318 = vmatpush1.msra.mxu0 0.0
      %1319 = vmatprep.subr.mxu0 0.0
      %1320 = vmatpush1.msra.mxu0 0.0
      %1321 = vmatprep.subr.mxu0 0.0
      %1322 = vmatpush1.msra.mxu0 0.0
      %1323 = vmatprep.subr.mxu0 0.0
      %1324 = vmatpush1.msra.mxu0 0.0
      %1325 = vmatprep.subr.mxu0 0.0
      %1326 = vmatpush1.msra.mxu0 0.0
      %1327 = vmatprep.subr.mxu0 0.0
      %1328 = vmatpush1.msra.mxu0 0.0
      %1329 = vmatprep.subr.mxu0 0.0
      %1330 = vmatpush1.msra.mxu0 0.0
      %1331 = vmatprep.subr.mxu0 0.0
      %1332 = vmatpush1.msra.mxu0 0.0
      %1333 = vmatprep.subr.mxu0 0.0
      %1334 = vmatpush1.msra.mxu0 0.0
      %1335 = vmatprep.subr.mxu0 0.0
      %1336 = vmatpush1.msra.mxu0 0.0
      %1337 = vmatprep.subr.mxu0 0.0
      %1338 = vmatpush1.msra.mxu0 0.0
      %1339 = vmatprep.subr.mxu0 0.0
      %1340 = vmatpush1.msra.mxu0 0.0
      %1341 = vmatprep.subr.mxu0 0.0
      %1342 = vmatpush1.msra.mxu0 0.0
      %1343 = vmatprep.subr.mxu0 0.0
      %1344 = vmatpush1.msra.mxu0 0.0
      %1345 = vmatprep.subr.mxu0 0.0
      %1346 = vmatpush1.msra.mxu0 0.0
      %1347 = vmatprep.subr.mxu0 0.0
      %1348 = vmatpush1.msra.mxu0 0.0
      %1349 = vmatprep.subr.mxu0 0.0
      %1350 = vmatpush1.msra.mxu0 0.0
      %1351 = vmatprep.subr.mxu0 0.0
      %1352 = vmatpush1.msra.mxu0 0.0
      %1353 = vmatprep.subr.mxu0 0.0
      %1354 = vmatpush1.msra.mxu0 0.0
      %1355 = vmatprep.subr.mxu0 0.0
      %1356 = vmatpush1.msra.mxu0 0.0
      %1357 = vmatprep.subr.mxu0 0.0
      %1358 = vmatpush1.msra.mxu0 0.0
      %1359 = vmatprep.subr.mxu0 0.0
      %1360 = vmatpush1.msra.mxu0 0.0
      %1361 = vmatprep.mubr.f32.mxu0 0.0
      %1362 = vmatmul.mubr.f32.gmra.mrb[0].mxu0 %v1295
      %v1363 = vpop.f32.mrb[0].mxu0
      %v1364 = vadd.f32 %v1292, %v1363
      %v1365 = vpop.f32.mrb[0].mxu0
      %1366 = vdwg.mxu0
      %1368 = vrot.lane.b32.xlu0 %v1364, 16
      %v1369 = vpop.permute.xlu0 %1368
      %vm1371 = vcmask 261248
      %1372 = vst.msk [vmem:[#allocation2] sm:$0xff] %vm1371, %v1369
      %1373 = vset.pattern.permute.xlu0 2
      %1374 = vperm.xlu0 %1373, %v972
      %v1375 = vpop.permute.xlu0 %1374
      %v1377 = vlaneseq
      %v1378 = vshrl.u32 %v1377, 7
      %v1379 = vsub.s32 2, %v1378
      %v1380 = vrot.slane %v1077, %v1379
      %v1381 = vsub.f32 %v1375, %v1380
      %v1382 = vsel %vm892, %v1381, -1e+30
      %v1383 = vmul.f32 %v1382, 1.442695
      %v1384 = vpow.pop %v1383
      %v1385 = vmul.f32 %v1384, %v1157
      %1386 = vset.pattern.permute.xlu0 66
      %1387 = vperm.xlu0 %1386, %v878
      %v1388 = vpop.permute.xlu0 %1387
      %v1390 = vmul.f32 %v859, %v1388
      %v1391 = vld [vmem:[%s7 + $0x2] sm:$0x1]
      %1393 = vrot.lane.b32.xlu0 %v1391, 126
      %v1394 = vpop.permute.xlu0 %1393
      %s1395 = vtos %v1394
      %v1396 = vstv %s1395
      %v1398 = vmul.f32 %v1396, %v859
      %1400 = vrot.lane.b32.xlu0 %v1390, 96
      %v1401 = vpop.permute.xlu0 %1400
      %1404 = vrot.lane.b32.xlu0 %v1398, 96
      %v1405 = vpop.permute.xlu0 %1404
      %v1408 = vsel %vm599, %v1385, 0
      %1410 = vmatprep.subr.mxu0 0.0
      %1411 = vmatpush1.msra.mxu0 %v1401
      %1412 = vmatprep.subr.mxu0 0.0
      %1413 = vmatpush1.msra.mxu0 0.0
      %1414 = vmatprep.subr.mxu0 0.0
      %1415 = vmatpush1.msra.mxu0 0.0
      %1416 = vmatprep.subr.mxu0 0.0
      %1417 = vmatpush1.msra.mxu0 0.0
      %1418 = vmatprep.subr.mxu0 0.0
      %1419 = vmatpush1.msra.mxu0 0.0
      %1420 = vmatprep.subr.mxu0 0.0
      %1421 = vmatpush1.msra.mxu0 0.0
      %1422 = vmatprep.subr.mxu0 0.0
      %1423 = vmatpush1.msra.mxu0 0.0
      %1424 = vmatprep.subr.mxu0 0.0
      %1425 = vmatpush1.msra.mxu0 0.0
      %1426 = vmatprep.subr.mxu0 0.0
      %1427 = vmatpush1.msra.mxu0 0.0
      %1428 = vmatprep.subr.mxu0 0.0
      %1429 = vmatpush1.msra.mxu0 0.0
      %1430 = vmatprep.subr.mxu0 0.0
      %1431 = vmatpush1.msra.mxu0 0.0
      %1432 = vmatprep.subr.mxu0 0.0
      %1433 = vmatpush1.msra.mxu0 0.0
      %1434 = vmatprep.subr.mxu0 0.0
      %1435 = vmatpush1.msra.mxu0 0.0
      %1436 = vmatprep.subr.mxu0 0.0
      %1437 = vmatpush1.msra.mxu0 0.0
      %1438 = vmatprep.subr.mxu0 0.0
      %1439 = vmatpush1.msra.mxu0 0.0
      %1440 = vmatprep.subr.mxu0 0.0
      %1441 = vmatpush1.msra.mxu0 0.0
      %1442 = vmatprep.subr.mxu0 0.0
      %1443 = vmatpush1.msra.mxu0 0.0
      %1444 = vmatprep.subr.mxu0 0.0
      %1445 = vmatpush1.msra.mxu0 0.0
      %1446 = vmatprep.subr.mxu0 0.0
      %1447 = vmatpush1.msra.mxu0 0.0
      %1448 = vmatprep.subr.mxu0 0.0
      %1449 = vmatpush1.msra.mxu0 0.0
      %1450 = vmatprep.subr.mxu0 0.0
      %1451 = vmatpush1.msra.mxu0 0.0
      %1452 = vmatprep.subr.mxu0 0.0
      %1453 = vmatpush1.msra.mxu0 0.0
      %1454 = vmatprep.subr.mxu0 0.0
      %1455 = vmatpush1.msra.mxu0 0.0
      %1456 = vmatprep.subr.mxu0 0.0
      %1457 = vmatpush1.msra.mxu0 0.0
      %1458 = vmatprep.subr.mxu0 0.0
      %1459 = vmatpush1.msra.mxu0 0.0
      %1460 = vmatprep.subr.mxu0 0.0
      %1461 = vmatpush1.msra.mxu0 0.0
      %1462 = vmatprep.subr.mxu0 0.0
      %1463 = vmatpush1.msra.mxu0 0.0
      %1464 = vmatprep.subr.mxu0 0.0
      %1465 = vmatpush1.msra.mxu0 0.0
      %1466 = vmatprep.subr.mxu0 0.0
      %1467 = vmatpush1.msra.mxu0 0.0
      %1468 = vmatprep.subr.mxu0 0.0
      %1469 = vmatpush1.msra.mxu0 0.0
      %1470 = vmatprep.subr.mxu0 0.0
      %1471 = vmatpush1.msra.mxu0 0.0
      %1472 = vmatprep.subr.mxu0 0.0
      %1473 = vmatpush1.msra.mxu0 0.0
      %1474 = vmatprep.mubr.f32.mxu0 0.0
      %1475 = vmatmul.mubr.f32.gmra.mrb[0].mxu0 %v1408
      %v1476 = vpop.f32.mrb[0].mxu0
      %v1477 = vadd.f32 %v1405, %v1476
      %v1478 = vpop.f32.mrb[0].mxu0
      %1479 = vdwg.mxu0
      %1481 = vrot.lane.b32.xlu0 %v1477, 32
      %v1482 = vpop.permute.xlu0 %1481
      %vm1484 = vcmask 392448
      %1485 = vst.msk [vmem:[#allocation2] sm:$0xff] %vm1484, %v1482
      %1486 = vset.pattern.permute.xlu0 3
      %1487 = vperm.xlu0 %1486, %v972
      %v1488 = vpop.permute.xlu0 %1487
      %v1490 = vlaneseq
      %v1491 = vshrl.u32 %v1490, 7
      %v1492 = vsub.s32 3, %v1491
      %v1493 = vrot.slane %v1077, %v1492
      %v1494 = vsub.f32 %v1488, %v1493
      %v1495 = vsel %vm892, %v1494, -1e+30
      %v1496 = vmul.f32 %v1495, 1.442695
      %v1497 = vpow.pop %v1496
      %v1498 = vmul.f32 %v1497, %v1157
      %1499 = vset.pattern.permute.xlu0 67
      %1500 = vperm.xlu0 %1499, %v878
      %v1501 = vpop.permute.xlu0 %1500
      %v1503 = vmul.f32 %v859, %v1501
      %v1504 = vld [vmem:[%s7 + $0x2] sm:$0x1]
      %1506 = vrot.lane.b32.xlu0 %v1504, 125
      %v1507 = vpop.permute.xlu0 %1506
      %s1508 = vtos %v1507
      %v1509 = vstv %s1508
      %v1511 = vmul.f32 %v1509, %v859
      %1513 = vrot.lane.b32.xlu0 %v1503, 80
      %v1514 = vpop.permute.xlu0 %1513
      %1517 = vrot.lane.b32.xlu0 %v1511, 80
      %v1518 = vpop.permute.xlu0 %1517
      %v1521 = vsel %vm599, %v1498, 0
      %1523 = vmatprep.subr.mxu0 0.0
      %1524 = vmatpush1.msra.mxu0 %v1514
      %1525 = vmatprep.subr.mxu0 0.0
      %1526 = vmatpush1.msra.mxu0 0.0
      %1527 = vmatprep.subr.mxu0 0.0
      %1528 = vmatpush1.msra.mxu0 0.0
      %1529 = vmatprep.subr.mxu0 0.0
      %1530 = vmatpush1.msra.mxu0 0.0
      %1531 = vmatprep.subr.mxu0 0.0
      %1532 = vmatpush1.msra.mxu0 0.0
      %1533 = vmatprep.subr.mxu0 0.0
      %1534 = vmatpush1.msra.mxu0 0.0
      %1535 = vmatprep.subr.mxu0 0.0
      %1536 = vmatpush1.msra.mxu0 0.0
      %1537 = vmatprep.subr.mxu0 0.0
      %1538 = vmatpush1.msra.mxu0 0.0
      %1539 = vmatprep.subr.mxu0 0.0
      %1540 = vmatpush1.msra.mxu0 0.0
      %1541 = vmatprep.subr.mxu0 0.0
      %1542 = vmatpush1.msra.mxu0 0.0
      %1543 = vmatprep.subr.mxu0 0.0
      %1544 = vmatpush1.msra.mxu0 0.0
      %1545 = vmatprep.subr.mxu0 0.0
      %1546 = vmatpush1.msra.mxu0 0.0
      %1547 = vmatprep.subr.mxu0 0.0
      %1548 = vmatpush1.msra.mxu0 0.0
      %1549 = vmatprep.subr.mxu0 0.0
      %1550 = vmatpush1.msra.mxu0 0.0
      %1551 = vmatprep.subr.mxu0 0.0
      %1552 = vmatpush1.msra.mxu0 0.0
      %1553 = vmatprep.subr.mxu0 0.0
      %1554 = vmatpush1.msra.mxu0 0.0
      %1555 = vmatprep.subr.mxu0 0.0
      %1556 = vmatpush1.msra.mxu0 0.0
      %1557 = vmatprep.subr.mxu0 0.0
      %1558 = vmatpush1.msra.mxu0 0.0
      %1559 = vmatprep.subr.mxu0 0.0
      %1560 = vmatpush1.msra.mxu0 0.0
      %1561 = vmatprep.subr.mxu0 0.0
      %1562 = vmatpush1.msra.mxu0 0.0
      %1563 = vmatprep.subr.mxu0 0.0
      %1564 = vmatpush1.msra.mxu0 0.0
      %1565 = vmatprep.subr.mxu0 0.0
      %1566 = vmatpush1.msra.mxu0 0.0
      %1567 = vmatprep.subr.mxu0 0.0
      %1568 = vmatpush1.msra.mxu0 0.0
      %1569 = vmatprep.subr.mxu0 0.0
      %1570 = vmatpush1.msra.mxu0 0.0
      %1571 = vmatprep.subr.mxu0 0.0
      %1572 = vmatpush1.msra.mxu0 0.0
      %1573 = vmatprep.subr.mxu0 0.0
      %1574 = vmatpush1.msra.mxu0 0.0
      %1575 = vmatprep.subr.mxu0 0.0
      %1576 = vmatpush1.msra.mxu0 0.0
      %1577 = vmatprep.subr.mxu0 0.0
      %1578 = vmatpush1.msra.mxu0 0.0
      %1579 = vmatprep.subr.mxu0 0.0
      %1580 = vmatpush1.msra.mxu0 0.0
      %1581 = vmatprep.subr.mxu0 0.0
      %1582 = vmatpush1.msra.mxu0 0.0
      %1583 = vmatprep.subr.mxu0 0.0
      %1584 = vmatpush1.msra.mxu0 0.0
      %1585 = vmatprep.subr.mxu0 0.0
      %1586 = vmatpush1.msra.mxu0 0.0
      %1587 = vmatprep.mubr.f32.mxu0 0.0
      %1588 = vmatmul.mubr.f32.gmra.mrb[0].mxu0 %v1521
      %v1589 = vpop.f32.mrb[0].mxu0
      %v1590 = vadd.f32 %v1518, %v1589
      %v1591 = vpop.f32.mrb[0].mxu0
      %1592 = vdwg.mxu0
      %1594 = vrot.lane.b32.xlu0 %v1590, 48
      %v1595 = vpop.permute.xlu0 %1594
      %vm1597 = vcmask 523648
      %1598 = vst.msk [vmem:[#allocation2] sm:$0xff] %vm1597, %v1595
      %v1599 = vld [vmem:[#allocation2] sm:$0xff]
      %v1600 = vxor.u32 %v582, 2147483648
      %v1601 = vmul.f32 %v1600, 1.442695
      %v1602 = vpow.pop %v1601
      %v1603 = vadd.f32 %v1602, 1.0
      %v1604 = vrcp.pop %v1603
      %v1605 = vmul.f32 1.0, %v1604
      %v1606 = vmul.f32 %v582, %v1605
      %v1607 = vmul.f32 %v1599, %v1606
      %v1608 = vmul.f32 %v1607, %v1607
      %vm1609 = vcmask 523264
      %v1610 = vsel %vm1609, %v1608, 0.0
      %1611 = vadd.xlane.f32.xlu0 %v1610
      %v1612 = vpop.xlane.xlu0 %1611
      %v1613 = vrcp.pop 64.0
      %v1614 = vmul.f32 %v1612, %v1613
      %v1615 = vadd.f32 %v1614, 1e-05
      %v1616 = vrsqrt.pop %v1615
      %v1617 = vmul.f32 %v1607, %v1616
      %v1618 = vld [vmem:[%s8] sm:$0x1]
      %v1619 = vunpack.c.l.bf16 %v1618
      %v1620 = vlaneseq
      %v1621 = vshrl.u32 %v1620, 7
      %v1622 = vsub.s32 0, %v1621
      %v1623 = vrot.slane %v1619, %v1622
      %v1624 = vmul.f32 %v1617, %v1623
      %v1625 = vpack.c.bf16 %v1624, %v1624
      %v1626 = vld [vmem:[%s9] sm:$0xf]
      %v1627 = vld [vmem:[%s9 + $0x4] sm:$0xf]
      %v1628 = vld [vmem:[%s9 + $0x8] sm:$0xf]
      %v1629 = vld [vmem:[%s9 + $0xc] sm:$0xf]
      %v1630 = vld [vmem:[%s9 + $0x10] sm:$0xf]
      %v1631 = vld [vmem:[%s9 + $0x14] sm:$0xf]
      %v1632 = vld [vmem:[%s9 + $0x18] sm:$0xf]
      %v1633 = vld [vmem:[%s9 + $0x1c] sm:$0xf]
      %v1642 = vunpack.c.l.b16 %v1626
      %v1643 = vunpack.c.l.b16 %v1627
      %v1644 = vunpack.c.l.b16 %v1628
      %v1645 = vunpack.c.l.b16 %v1629
      %v1646 = vunpack.c.l.b16 %v1630
      %v1647 = vunpack.c.l.b16 %v1631
      %v1648 = vunpack.c.l.b16 %v1632
      %v1649 = vunpack.c.l.b16 %v1633
      %v1650 = vpack.c.b16 %v1643, %v1642
      %v1651 = vpack.c.b16 %v1645, %v1644
      %v1652 = vpack.c.b16 %v1647, %v1646
      %v1653 = vpack.c.b16 %v1649, %v1648
      %v1659 = vsel %vm1609, %v1625, 0
      %1661 = vmatprep.subr.bf16.mxu0 0
      %1662 = vmatpush1.bf16.msra.mxu0 %v1650
      %1663 = vmatprep.subr.bf16.mxu0 0
      %1664 = vmatpush1.bf16.msra.mxu0 %v1651
      %1665 = vmatprep.subr.bf16.mxu0 0
      %1666 = vmatpush1.bf16.msra.mxu0 %v1652
      %1667 = vmatprep.subr.bf16.mxu0 0
      %1668 = vmatpush1.bf16.msra.mxu0 %v1653
      %1669 = vmatprep.subr.bf16.mxu0 0
      %1670 = vmatpush1.bf16.msra.mxu0 0
      %1671 = vmatprep.subr.bf16.mxu0 0
      %1672 = vmatpush1.bf16.msra.mxu0 0
      %1673 = vmatprep.subr.bf16.mxu0 0
      %1674 = vmatpush1.bf16.msra.mxu0 0
      %1675 = vmatprep.subr.bf16.mxu0 0
      %1676 = vmatpush1.bf16.msra.mxu0 0
      %1677 = vmatprep.subr.bf16.mxu0 0
      %1678 = vmatpush1.bf16.msra.mxu0 0
      %1679 = vmatprep.subr.bf16.mxu0 0
      %1680 = vmatpush1.bf16.msra.mxu0 0
      %1681 = vmatprep.subr.bf16.mxu0 0
      %1682 = vmatpush1.bf16.msra.mxu0 0
      %1683 = vmatprep.subr.bf16.mxu0 0
      %1684 = vmatpush1.bf16.msra.mxu0 0
      %1685 = vmatprep.subr.bf16.mxu0 0
      %1686 = vmatpush1.bf16.msra.mxu0 0
      %1687 = vmatprep.subr.bf16.mxu0 0
      %1688 = vmatpush1.bf16.msra.mxu0 0
      %1689 = vmatprep.subr.bf16.mxu0 0
      %1690 = vmatpush1.bf16.msra.mxu0 0
      %1691 = vmatprep.subr.bf16.mxu0 0
      %1692 = vmatpush1.bf16.msra.mxu0 0
      %1693 = vmatprep.mubr.bf16.mxu0 0
      %1694 = vmatmul.mubr.bf16.gmra.mrb[0].mxu0 %v1659
      %v1695 = vpop.f32.mrb[0].mxu0
      %v1696 = vadd.f32 0.0, %v1695
      %v1697 = vpop.f32.mrb[0].mxu0
      %v1698 = vpop.f32.mrb[0].mxu0
      %v1699 = vpop.f32.mrb[0].mxu0
      %1700 = vdwg.mxu0
      %v1701 = vpack.c.bf16 %v1696, %v1696
      %1702 = vst [vmem:[%s409] sm:$0xf] %v1701
      %p1703 = scmp.lt.s32.totalorder %s23, 1
      %s1704 = scalar_select %p1703, %s23, 1
      %s1705 = smul.addr %s1704, 4
      %s1706 = scalar_lea.vmem %s10, %s1705
      %p1707 = scmp.lt.s32.totalorder %s23, 1
      %s1708 = scalar_select %p1707, %s23, 1
      %s1709 = smul.addr %s1708, 4
      %s1710 = scalar_lea.vmem %s11, %s1709
      // Predicated region
      $region61: #{mpt_forward.4} parent=59 // pred_check
        %p1711 = pneg %p261
      $region62: #{mpt_forward.4} parent=59 // pred_check_branch
        %1713 = sbr.rel (%p1711) target = $region64
      $region63: #{mpt_forward.4} parent=59 // pred_region
        _
      $region64: #{mpt_forward.4} parent=59 // pred_fallthru
        _
      // Predicated region
      $region65: #{mpt_forward.4} parent=59 // pred_check
        %p1714 = pneg %p287
      $region66: #{mpt_forward.4} parent=59 // pred_check_branch
        %1716 = sbr.rel (%p1714) target = $region68
      $region67: #{mpt_forward.4} parent=59 // pred_region
        _
      $region68: #{mpt_forward.4} parent=59 // pred_fallthru
        _
    $region60: #{mpt_forward.4} parent=5 // pred_fallthru
      _
    %p1717 = scmp.le.s32.totalorder 2, %s18
    // Predicated region
    $region69: #{mpt_forward.4} parent=5 // pred_check
      %p1718 = pneg %p1717
    $region70: #{mpt_forward.4} parent=5 // pred_check_branch
      %1720 = sbr.rel (%p1718) target = $region72
    $region71: #{mpt_forward.4} parent=5 // pred_region
      %s1721 = ssub.s32 %s18, 2
      // Predicated region
      $region73: #{mpt_forward.4} parent=71 // pred_check
        %p1722 = pneg %p267
      $region74: #{mpt_forward.4} parent=71 // pred_check_branch
        %1724 = sbr.rel (%p1722) target = $region76
      $region75: #{mpt_forward.4} parent=71 // pred_region
        %p1725 = scmp.lt.s32.totalorder %s24, 1
        %s1726 = scalar_select %p1725, %s24, 1
        %s1727 = smul.addr %s1726, 4
        %s1728 = scalar_lea.vmem %s10, %s1727
      $region76: #{mpt_forward.4} parent=71 // pred_fallthru
        _
      // Predicated region
      $region77: #{mpt_forward.4} parent=71 // pred_check
        %p1729 = pneg %p293
      $region78: #{mpt_forward.4} parent=71 // pred_check_branch
        %1731 = sbr.rel (%p1729) target = $region80
      $region79: #{mpt_forward.4} parent=71 // pred_region
        %p1732 = scmp.lt.s32.totalorder %s24, 1
        %s1733 = scalar_select %p1732, %s24, 1
        %s1734 = smul.addr %s1733, 4
        %s1735 = scalar_lea.vmem %s11, %s1734
      $region80: #{mpt_forward.4} parent=71 // pred_fallthru
        _
    $region72: #{mpt_forward.4} parent=5 // pred_fallthru
      _
  $region6: #{mpt_forward.4} parent=0 // loop_footer
    %s22 = sadd.s32 1, %s18
  $region7: #{mpt_forward.4} parent=0 // loop_footer_branch
    %17 = sbr.rel target = $region3
  $region8: #{mpt_forward.4} parent=0 // loop_exit
    _

</llo_original>
